<compile_context>
chip_gen: v6e
topology: v6e:2x2x1
jax: 0.10.0
libtpu: 0.0.40
codegen_flags: <defaults>
</compile_context>

<pallas_src>
import math

import jax
import jax.numpy as jnp
from jax.experimental import pallas as pl
from jax.experimental.pallas import tpu as pltpu


# --------------------------------------------------------------------------- #
# Pallas kernel: fused XConv + separable conv + folded BatchNorm (2-D, lane-dense)
# --------------------------------------------------------------------------- #
def _xconv_kernel(pts_ref, fts_ref,
                  w_d1_ref, b_d1_ref, w_d2_ref, b_d2_ref,
                  w_xc_ref, b_xc_ref, w_xd1_ref, b_xd1_ref, w_xd2_ref, b_xd2_ref,
                  w_eff_a_ref, w_eff_b_ref, b_eff_ref, bn_s_ref, bn_t_ref,
                  out_ref):
    R = pts_ref.shape[0]
    K = w_eff_a_ref.shape[0]
    C_mid = w_eff_a_ref.shape[1]
    C1 = w_eff_b_ref.shape[1]
    C_pad = out_ref.shape[-1]
    f32 = jnp.float32
    mdt = w_xc_ref.dtype                       # MXU operand dtype (f32 or bf16)
    relu = lambda v: jnp.maximum(v, 0.0)

    def mxu(a, b):                             # MXU matmul, f32 accumulation
        return jnp.dot(a.astype(mdt), b, preferred_element_type=f32)

    pts = pts_ref[...]                         # (R, K*dims), col = k*dims + d
    fts = fts_ref[...].astype(f32)             # (R, >=K*C1), col = k*C1 + c

    # ---- X-transform MLP on all rows at once (MXU, M = R) ------------------ #
    xt0 = relu(mxu(pts, w_xc_ref[...]) + b_xc_ref[...])
    xt1 = relu(mxu(xt0, w_xd1_ref[...]) + b_xd1_ref[...])
    X = mxu(xt1, w_xd2_ref[...]) + b_xd2_ref[...]          # (R, K*K), col = i*K + j

    # ---- per-neighbor dense1/dense2 lifting, lane-dense, M = R -------------- #
    # dense1: one block-diagonal matmul (weight built in glue, exact).
    h1 = relu(mxu(pts, w_d1_ref[...]) + b_d1_ref[...])     # (R, K*C_mid)
    w_d2 = w_d2_ref[...]
    b_d2 = b_d2_ref[...]
    h2 = [relu(mxu(h1[:, k * C_mid:(k + 1) * C_mid], w_d2) + b_d2)
          for k in range(K)]                                # K x (R, C_mid)
    fsl = [fts[:, k * C1:(k + 1) * C1] for k in range(K)]   # K x (R, C1)

    # ---- fts_X = X @ [h2 | fts] as K*K VPU broadcast-FMAs, then K fused ----- #
    # ---- MXU matmuls against the exactly-fused separable-conv weights. ------ #
    acc = jnp.zeros((R, C_pad), f32) + b_eff_ref[...]
    for i in range(K):
        xi = [X[:, i * K + j: i * K + j + 1] for j in range(K)]   # (R, 1) each
        mix_a = xi[0] * h2[0]
        mix_b = xi[0] * fsl[0]
        for j in range(1, K):
            mix_a = mix_a + xi[j] * h2[j]
            mix_b = mix_b + xi[j] * fsl[j]
        acc = acc + mxu(mix_a, w_eff_a_ref[i])              # (C_mid, C_pad)
        acc = acc + mxu(mix_b, w_eff_b_ref[i])              # (C1,   C_pad)

    # ---- ReLU + folded (inference-mode) BatchNorm, lane-dense store ---------- #
    out_ref[...] = (relu(acc) * bn_s_ref[...] + bn_t_ref[...]).astype(out_ref.dtype)


# --------------------------------------------------------------------------- #
# Block sizing (intermediate-aware VMEM budget) and pallas_call wrapper
# --------------------------------------------------------------------------- #
def _vmem_capacity_bytes():
    try:
        return int(pltpu.get_tpu_info().vmem_capacity_bytes)
    except Exception:
        return 64 * 1024 * 1024          # conservative: v7x has 64 MiB per TC


def _round_down8(x):
    return max(8, (int(x) // 8) * 8)


def _choose_row_block(rows, io_bytes_per_row, tmp_bytes_per_row, weight_bytes,
                      target_rows=512):
    """Largest multiple-of-8 row block that fits an intermediate-aware VMEM budget."""
    vmem_cap = _vmem_capacity_bytes()
    vmem_limit = int(min(100 * 2**20, max(32 * 2**20, 0.75 * vmem_cap)))
    budget = max(4 * 2**20, vmem_limit // 2 - 2 * weight_bytes)
    per_row = 2 * io_bytes_per_row + tmp_bytes_per_row       # 2x: double-buffered I/O
    r = min(target_rows, max(8, budget // max(per_row, 1)))
    if rows >= 16:                       # keep >= 2 grid steps (feeds both v7x TCs)
        r = min(r, _round_down8(rows // 2))
    r = _round_down8(r)
    grid = -(-rows // r)
    return r, grid, vmem_limit


def _param_spec(shape, single_buffer):
    nd = len(shape)
    if single_buffer:   # constant index -> one buffer is enough (reclaims VMEM)
        return pl.BlockSpec(tuple(shape), lambda n: (0,) * nd,
                            pipeline_mode=pl.Buffered(1))
    return pl.BlockSpec(tuple(shape), lambda n: (0,) * nd)


def xconv_forward_pallas(pts2d, fts2d, kparams):
    """pts2d: (rows, K*dims); fts2d: (rows, KC1_pad); returns (rows, C_pad) f32."""
    rows, kdims = pts2d.shape
    kc1p = fts2d.shape[-1]
    K, C_mid, C_pad = kparams["w_eff_a"].shape
    C1 = kparams["w_eff_b"].shape[1]
    in_item = jnp.dtype(pts2d.dtype).itemsize

    names = ["w_d1", "b_d1", "w_d2", "b_d2",
             "w_xc", "b_xc", "w_xd1", "b_xd1", "w_xd2", "b_xd2",
             "w_eff_a", "w_eff_b", "b_eff", "bn_s", "bn_t"]
    plist = [kparams[k] for k in names]
    weight_bytes = sum(int(p.size) * jnp.dtype(p.dtype).itemsize for p in plist)

    io_row = in_item * (kdims + kc1p) + 4 * C_pad
    tmp_row = 4 * 2 * (3 * K * K + 2 * K * C_mid + K * C1
                       + 2 * (C_mid + C1) + 2 * C_pad)
    R_blk, grid_n, vmem_limit = _choose_row_block(rows, io_row, tmp_row, weight_bytes)

    rows_pad = grid_n * R_blk
    if rows_pad > rows:                      # pad rows instead of shrinking the block
        pts2d = jnp.pad(pts2d, ((0, rows_pad - rows), (0, 0)))
        fts2d = jnp.pad(fts2d, ((0, rows_pad - rows), (0, 0)))

    flops = 2 * rows_pad * (kdims * K * K + 2 * K ** 4           # X-transform MLP
                            + kdims * K * C_mid + K * C_mid * C_mid  # dense1/dense2
                            + K * K * (C_mid + C1)                # X mixing (VPU)
                            + K * (C_mid + C1) * C_pad)           # fused sep-conv
    bytes_acc = rows_pad * io_row + grid_n * weight_bytes
    try:
        cost = pl.CostEstimate(flops=flops, transcendentals=0,
                               bytes_accessed=bytes_acc)
    except Exception:
        cost = None

    def build(single_buffer):
        in_specs = ([pl.BlockSpec((R_blk, kdims), lambda n: (n, 0)),
                     pl.BlockSpec((R_blk, kc1p), lambda n: (n, 0))]
                    + [_param_spec(p.shape, single_buffer) for p in plist])
        return pl.pallas_call(
            _xconv_kernel,
            out_shape=jax.ShapeDtypeStruct((rows_pad, C_pad), jnp.float32),
            grid=(grid_n,),
            in_specs=in_specs,
            out_specs=pl.BlockSpec((R_blk, C_pad), lambda n: (n, 0)),
            compiler_params=pltpu.CompilerParams(
                dimension_semantics=("parallel",),     # row blocks are independent
                vmem_limit_bytes=vmem_limit),
            cost_estimate=cost,
        )

    try:      # single-buffer the constant-index weight blocks when supported
        out = build(True)(pts2d, fts2d, *plist)
    except Exception:
        out = build(False)(pts2d, fts2d, *plist)
    return out[:rows]


# --------------------------------------------------------------------------- #
# RandPointCNN forward (glue: lift, sampling, knn, gather, layout flattening)
# --------------------------------------------------------------------------- #
def rand_pointcnn_forward(pts, fts, params, kparams, cfg, rep_idx,
                          mxu_dtype=jnp.float32):
    N, num_pts, dims = pts.shape
    K, D, C_out = cfg["K"], cfg["D"], cfg["C_out"]
    C1 = params["w_lift"].shape[-1]

    # PointCNN.dense (Linear + ReLU) applied before the gather, as in PyTorch.
    fts_lift = jnp.maximum(fts @ params["w_lift"] + params["b_lift"], 0.0)

    rep_pts = pts[:, rep_idx, :]                                    # (N, P, dims)
    P = rep_pts.shape[1]
    # r_indices_func: knn with dilation D (data-dependent -> plain-JAX glue).
    d2 = jnp.sum((rep_pts[:, :, None, :] - pts[:, None, :, :]) ** 2, axis=-1)
    nn_idx = jnp.argsort(d2, axis=-1)[:, :, :K * D][:, :, ::D]      # (N, P, K)
    gather = jax.vmap(lambda arr, idx: arr[idx])
    pts_reg = gather(pts, nn_idx)                                   # (N, P, K, dims)
    fts_reg = gather(fts_lift, nn_idx)                              # (N, P, K, C1)
    pts_local = pts_reg - rep_pts[:, :, None, :]

    # Flatten N*P and K into 2-D lane-dense kernel layouts (glue-side, not in-kernel).
    rows = N * P
    pts2d = pts_local.reshape(rows, K * dims).astype(mxu_dtype)
    fts2d = fts_reg.reshape(rows, K * C1)
    kc1p = -(-(K * C1) // 128) * 128
    if kc1p > K * C1:
        fts2d = jnp.pad(fts2d, ((0, 0), (0, kc1p - K * C1)))
    fts2d = fts2d.astype(mxu_dtype)

    out2d = xconv_forward_pallas(pts2d, fts2d, kparams)             # (rows, C_pad)
    out = out2d.reshape(N, P, -1)[:, :, :C_out]
    return rep_pts, out


# --------------------------------------------------------------------------- #
# Deterministic parameter construction + fusion/folding for the kernel
# --------------------------------------------------------------------------- #
def make_params(key, dims, C_in, C_out, K):
    C_mid = C_out // 4                      # C_in != 0 branch of PointCNN
    C1 = C_out // 2                         # PointCNN.dense output width
    Ccat = C_mid + C1
    dm = min(-(-C_out // C_in), 4)          # depth_multiplier
    keys = jax.random.split(key, 16)

    def uinit(k, shape, fan_in):
        b = 1.0 / math.sqrt(fan_in)
        return jax.random.uniform(k, shape, jnp.float32, -b, b)

    w_lift = uinit(keys[0], (C_in, C1), C_in)
    b_lift = uinit(keys[1], (1, C1), C_in)
    w_d1 = uinit(keys[2], (dims, C_mid), dims)
    b_d1 = uinit(keys[3], (1, C_mid), dims)
    w_d2 = uinit(keys[4], (C_mid, C_mid), C_mid)
    b_d2 = uinit(keys[5], (1, C_mid), C_mid)
    # x_trans Conv2d(dims, K*K, (1,K)) stored as (K*dims, K*K), row = k*dims + c
    w_xc = uinit(keys[6], (K * dims, K * K), dims * K)
    b_xc = uinit(keys[7], (1, K * K), dims * K)
    w_xd1 = uinit(keys[8], (K * K, K * K), K * K)
    b_xd1 = uinit(keys[9], (1, K * K), K * K)
    w_xd2 = uinit(keys[10], (K * K, K * K), K * K)
    b_xd2 = uinit(keys[11], (1, K * K), K * K)
    # SepConv: depthwise (Ccat, dm, K) + bias; pointwise (Ccat, dm, C_out), no bias
    dw_w = uinit(keys[12], (Ccat, dm, K), K)
    dw_b = uinit(keys[13], (Ccat, dm), K)
    pw_w = uinit(keys[14], (Ccat, dm, C_out), Ccat * dm)
    # BatchNorm2d(C_out) inference params (default running stats)
    bn_gamma = jnp.ones((1, C_out), jnp.float32)
    bn_beta = jnp.zeros((1, C_out), jnp.float32)
    bn_mean = jnp.zeros((1, C_out), jnp.float32)
    bn_var = jnp.ones((1, C_out), jnp.float32)
    return dict(w_lift=w_lift, b_lift=b_lift, w_d1=w_d1, b_d1=b_d1,
                w_d2=w_d2, b_d2=b_d2, w_xc=w_xc, b_xc=b_xc,
                w_xd1=w_xd1, b_xd1=b_xd1, w_xd2=w_xd2, b_xd2=b_xd2,
                dw_w=dw_w, dw_b=dw_b, pw_w=pw_w,
                bn_gamma=bn_gamma, bn_beta=bn_beta, bn_mean=bn_mean, bn_var=bn_var)


def fuse_kernel_params(params, C_out, K, lane=128, mxu_dtype=jnp.float32):
    """Parameter-only preprocessing: block-diag dense1, exact sep-conv fusion,
    inference-mode BN folding, lane padding, optional bf16 MXU-operand cast."""
    dims, C_mid = params["w_d1"].shape
    C1 = params["w_lift"].shape[-1]
    C_pad = -(-C_out // lane) * lane
    md = mxu_dtype

    def pad_cols(a):
        return jnp.pad(a, [(0, 0)] * (a.ndim - 1) + [(0, C_pad - C_out)])

    # dense1 as one block-diagonal matmul over (rows, K*dims) -- exact.
    w_d1_blk = jnp.kron(jnp.eye(K, dtype=jnp.float32), params["w_d1"])
    b_d1_blk = jnp.tile(params["b_d1"], (1, K))
    # Exact fusion of the (linear) depthwise->pointwise separable-conv chain.
    w_eff = jnp.einsum("cmk,cmo->kco", params["dw_w"], params["pw_w"])  # (K,Ccat,C_out)
    w_eff_a = pad_cols(w_eff[:, :C_mid, :])                             # (K,C_mid,C_pad)
    w_eff_b = pad_cols(w_eff[:, C_mid:, :])                             # (K,C1,  C_pad)
    b_eff = pad_cols(jnp.einsum("cmo,cm->o", params["pw_w"], params["dw_b"])[None, :])
    # BatchNorm2d folded to scale/shift (inference mode, eps = 1e-5).
    s = params["bn_gamma"] * jax.lax.rsqrt(params["bn_var"] + 1e-5)
    t = params["bn_beta"] - params["bn_mean"] * s

    return dict(
        w_d1=w_d1_blk.astype(md), b_d1=b_d1_blk,
        w_d2=params["w_d2"].astype(md), b_d2=params["b_d2"],
        w_xc=params["w_xc"].astype(md), b_xc=params["b_xc"],
        w_xd1=params["w_xd1"].astype(md), b_xd1=params["b_xd1"],
        w_xd2=params["w_xd2"].astype(md), b_xd2=params["b_xd2"],
        w_eff_a=w_eff_a.astype(md), w_eff_b=w_eff_b.astype(md),
        b_eff=b_eff, bn_s=pad_cols(s), bn_t=pad_cols(t))


# --------------------------------------------------------------------------- #
# Pure-JAX reference (mirrors the PyTorch forward structure)
# --------------------------------------------------------------------------- #
def reference_forward(pts, fts, params, cfg, rep_idx):
    K, D = cfg["K"], cfg["D"]
    N, num_pts, dims = pts.shape
    relu = lambda x: jnp.maximum(x, 0.0)
    rep_pts = pts[:, rep_idx, :]
    P = rep_pts.shape[1]
    fts_lift = relu(fts @ params["w_lift"] + params["b_lift"])          # PointCNN.dense
    d2 = jnp.sum((rep_pts[:, :, None, :] - pts[:, None, :, :]) ** 2, axis=-1)
    nn_idx = jnp.argsort(d2, axis=-1)[:, :, :K * D][:, :, ::D]
    gather = jax.vmap(lambda arr, idx: arr[idx])
    pts_reg = gather(pts, nn_idx)
    fts_reg = gather(fts_lift, nn_idx)
    pts_local = pts_reg - rep_pts[:, :, None, :]
    h1 = relu(pts_local @ params["w_d1"] + params["b_d1"])
    h2 = relu(h1 @ params["w_d2"] + params["b_d2"])
    fts_cat = jnp.concatenate([h2, fts_reg], axis=-1)
    xt_in = pts_local.reshape(N, P, K * dims)
    xt0 = relu(xt_in @ params["w_xc"] + params["b_xc"])
    xt1 = relu(xt0 @ params["w_xd1"] + params["b_xd1"])
    Xf = xt1 @ params["w_xd2"] + params["b_xd2"]
    X = Xf.reshape(N, P, K, K)
    fts_X = jnp.einsum("npij,npjc->npic", X, fts_cat)
    dwout = jnp.einsum("npic,cmi->npcm", fts_X, params["dw_w"]) + params["dw_b"][None, None]
    pw = jnp.einsum("npcm,cmo->npo", dwout, params["pw_w"])
    act = relu(pw)
    y = ((act - params["bn_mean"]) * jax.lax.rsqrt(params["bn_var"] + 1e-5)
         * params["bn_gamma"] + params["bn_beta"])
    return rep_pts, y


# --------------------------------------------------------------------------- #
if __name__ == "__main__":
    N, num_pts, dims = 2, 16, 3
    C_in, C_out = 4, 16
    K, D, P = 4, 1, 8
    cfg = dict(K=K, D=D, P=P, C_out=C_out)

    root = jax.random.PRNGKey(0)
    k_pts, k_fts, k_par, k_rep = jax.random.split(root, 4)
    pts = jax.random.normal(k_pts, (N, num_pts, dims), jnp.float32)
    fts = jax.random.normal(k_fts, (N, num_pts, C_in), jnp.float32)
    params = make_params(k_par, dims, C_in, C_out, K)

    # RandPointCNN: "random" rep-point subsampling (np.random.choice in PyTorch),
    # made deterministic here.
    rep_idx = (jax.random.permutation(k_rep, num_pts)[:P]
               if 0 < P < num_pts else jnp.arange(num_pts))

    ref_rep, ref_fts = reference_forward(pts, fts, params, cfg, rep_idx)

    # f32 MXU operands: bit-close to the f32 PyTorch module.
    kp32 = fuse_kernel_params(params, C_out, K)
    rep_pts, out32 = rand_pointcnn_forward(pts, fts, params, kp32, cfg, rep_idx)
    out32 = jax.block_until_ready(out32)

    # bf16 MXU operands: perf option (halves HBM/DMA bytes), looser tolerance.
    kp16 = fuse_kernel_params(params, C_out, K, mxu_dtype=jnp.bfloat16)
    _, out16 = rand_pointcnn_forward(pts, fts, params, kp16, cfg, rep_idx,
                                     mxu_dtype=jnp.bfloat16)
    out16 = jax.block_until_ready(out16)

    assert out32.shape == (N, P, C_out) and rep_pts.shape == (N, P, dims)
    err32 = float(jnp.max(jnp.abs(out32 - ref_fts)))
    err16 = float(jnp.max(jnp.abs(out16 - ref_fts)))
    tol16 = 5e-2 * (1.0 + float(jnp.max(jnp.abs(ref_fts))))
    if err32 < 1e-3 and err16 < tol16:
        print("KERNEL_OK")
    else:
        print(f"MISMATCH f32_err={err32} bf16_err={err16} bf16_tol={tol16}")
</pallas_src>

<mosaic_0001>
module attributes {stable_mosaic.version = 11 : i64} {
  func.func @_xconv_kernel(%arg0: i32, %arg1: memref<8x12xf32, #tpu.memory_space<vmem>>, %arg2: memref<8x128xf32, #tpu.memory_space<vmem>>, %arg3: memref<12x16xf32, #tpu.memory_space<vmem>>, %arg4: memref<1x16xf32, #tpu.memory_space<vmem>>, %arg5: memref<4x4xf32, #tpu.memory_space<vmem>>, %arg6: memref<1x4xf32, #tpu.memory_space<vmem>>, %arg7: memref<12x16xf32, #tpu.memory_space<vmem>>, %arg8: memref<1x16xf32, #tpu.memory_space<vmem>>, %arg9: memref<16x16xf32, #tpu.memory_space<vmem>>, %arg10: memref<1x16xf32, #tpu.memory_space<vmem>>, %arg11: memref<16x16xf32, #tpu.memory_space<vmem>>, %arg12: memref<1x16xf32, #tpu.memory_space<vmem>>, %arg13: memref<4x4x128xf32, #tpu.memory_space<vmem>>, %arg14: memref<4x8x128xf32, #tpu.memory_space<vmem>>, %arg15: memref<1x128xf32, #tpu.memory_space<vmem>>, %arg16: memref<1x128xf32, #tpu.memory_space<vmem>>, %arg17: memref<1x128xf32, #tpu.memory_space<vmem>>, %arg18: memref<8x128xf32, #tpu.memory_space<vmem>>) attributes {dimension_semantics = [#tpu.dimension_semantics<parallel>], iteration_bounds = array<i64: 2>, scalar_prefetch = 0 : i64, scratch_operands = 0 : i64, tpu.core_type = #tpu.core_type<tc>, window_params = [{transform_indices = @transform_0, window_bounds = array<i64: 8, 12>}, {transform_indices = @transform_1, window_bounds = array<i64: 8, 128>}, {pipeline_mode = #tpu.pipeline_mode<synchronous>, transform_indices = @transform_2, window_bounds = array<i64: 12, 16>}, {pipeline_mode = #tpu.pipeline_mode<synchronous>, transform_indices = @transform_3, window_bounds = array<i64: 1, 16>}, {pipeline_mode = #tpu.pipeline_mode<synchronous>, transform_indices = @transform_4, window_bounds = array<i64: 4, 4>}, {pipeline_mode = #tpu.pipeline_mode<synchronous>, transform_indices = @transform_5, window_bounds = array<i64: 1, 4>}, {pipeline_mode = #tpu.pipeline_mode<synchronous>, transform_indices = @transform_6, window_bounds = array<i64: 12, 16>}, {pipeline_mode = #tpu.pipeline_mode<synchronous>, transform_indices = @transform_7, window_bounds = array<i64: 1, 16>}, {pipeline_mode = #tpu.pipeline_mode<synchronous>, transform_indices = @transform_8, window_bounds = array<i64: 16, 16>}, {pipeline_mode = #tpu.pipeline_mode<synchronous>, transform_indices = @transform_9, window_bounds = array<i64: 1, 16>}, {pipeline_mode = #tpu.pipeline_mode<synchronous>, transform_indices = @transform_10, window_bounds = array<i64: 16, 16>}, {pipeline_mode = #tpu.pipeline_mode<synchronous>, transform_indices = @transform_11, window_bounds = array<i64: 1, 16>}, {pipeline_mode = #tpu.pipeline_mode<synchronous>, transform_indices = @transform_12, window_bounds = array<i64: 4, 4, 128>}, {pipeline_mode = #tpu.pipeline_mode<synchronous>, transform_indices = @transform_13, window_bounds = array<i64: 4, 8, 128>}, {pipeline_mode = #tpu.pipeline_mode<synchronous>, transform_indices = @transform_14, window_bounds = array<i64: 1, 128>}, {pipeline_mode = #tpu.pipeline_mode<synchronous>, transform_indices = @transform_15, window_bounds = array<i64: 1, 128>}, {pipeline_mode = #tpu.pipeline_mode<synchronous>, transform_indices = @transform_16, window_bounds = array<i64: 1, 128>}, {transform_indices = @transform_17, window_bounds = array<i64: 8, 128>}]} {
    %c0 = arith.constant 0 : index
    %c0_0 = arith.constant 0 : index
    %0 = vector.load %arg1[%c0, %c0_0] : memref<8x12xf32, #tpu.memory_space<vmem>>, vector<8x12xf32>
    %c0_1 = arith.constant 0 : index
    %c0_2 = arith.constant 0 : index
    %1 = vector.load %arg2[%c0_1, %c0_2] : memref<8x128xf32, #tpu.memory_space<vmem>>, vector<8x128xf32>
    %c0_3 = arith.constant 0 : index
    %c0_4 = arith.constant 0 : index
    %2 = vector.load %arg7[%c0_3, %c0_4] : memref<12x16xf32, #tpu.memory_space<vmem>>, vector<12x16xf32>
    %cst = arith.constant dense<0.000000e+00> : vector<8x16xf32>
    %3 = tpu.matmul %0, %2, %cst {dimension_numbers = #tpu.dot_dimension_numbers<[1], [0], [0], [1], [0, 0, 1, 1], [], []>} : vector<8x12xf32>, vector<12x16xf32>, vector<8x16xf32> -> vector<8x16xf32>
    %c0_5 = arith.constant 0 : index
    %c0_6 = arith.constant 0 : index
    %4 = vector.load %arg8[%c0_5, %c0_6] : memref<1x16xf32, #tpu.memory_space<vmem>>, vector<1x16xf32>
    %5 = vector.broadcast %4 : vector<1x16xf32> to vector<8x16xf32>
    %6 = arith.addf %3, %5 : vector<8x16xf32>
    %cst_7 = arith.constant 0.000000e+00 : f32
    %7 = vector.broadcast %cst_7 : f32 to vector<8x16xf32>
    %8 = arith.maximumf %6, %7 : vector<8x16xf32>
    %c0_8 = arith.constant 0 : index
    %c0_9 = arith.constant 0 : index
    %9 = vector.load %arg9[%c0_8, %c0_9] : memref<16x16xf32, #tpu.memory_space<vmem>>, vector<16x16xf32>
    %cst_10 = arith.constant dense<0.000000e+00> : vector<8x16xf32>
    %10 = tpu.matmul %8, %9, %cst_10 {dimension_numbers = #tpu.dot_dimension_numbers<[1], [0], [0], [1], [0, 0, 1, 1], [], []>} : vector<8x16xf32>, vector<16x16xf32>, vector<8x16xf32> -> vector<8x16xf32>
    %c0_11 = arith.constant 0 : index
    %c0_12 = arith.constant 0 : index
    %11 = vector.load %arg10[%c0_11, %c0_12] : memref<1x16xf32, #tpu.memory_space<vmem>>, vector<1x16xf32>
    %12 = vector.broadcast %11 : vector<1x16xf32> to vector<8x16xf32>
    %13 = arith.addf %10, %12 : vector<8x16xf32>
    %cst_13 = arith.constant 0.000000e+00 : f32
    %14 = vector.broadcast %cst_13 : f32 to vector<8x16xf32>
    %15 = arith.maximumf %13, %14 : vector<8x16xf32>
    %c0_14 = arith.constant 0 : index
    %c0_15 = arith.constant 0 : index
    %16 = vector.load %arg11[%c0_14, %c0_15] : memref<16x16xf32, #tpu.memory_space<vmem>>, vector<16x16xf32>
    %cst_16 = arith.constant dense<0.000000e+00> : vector<8x16xf32>
    %17 = tpu.matmul %15, %16, %cst_16 {dimension_numbers = #tpu.dot_dimension_numbers<[1], [0], [0], [1], [0, 0, 1, 1], [], []>} : vector<8x16xf32>, vector<16x16xf32>, vector<8x16xf32> -> vector<8x16xf32>
    %c0_17 = arith.constant 0 : index
    %c0_18 = arith.constant 0 : index
    %18 = vector.load %arg12[%c0_17, %c0_18] : memref<1x16xf32, #tpu.memory_space<vmem>>, vector<1x16xf32>
    %19 = vector.broadcast %18 : vector<1x16xf32> to vector<8x16xf32>
    %20 = arith.addf %17, %19 : vector<8x16xf32>
    %c0_19 = arith.constant 0 : index
    %c0_20 = arith.constant 0 : index
    %21 = vector.load %arg3[%c0_19, %c0_20] : memref<12x16xf32, #tpu.memory_space<vmem>>, vector<12x16xf32>
    %cst_21 = arith.constant dense<0.000000e+00> : vector<8x16xf32>
    %22 = tpu.matmul %0, %21, %cst_21 {dimension_numbers = #tpu.dot_dimension_numbers<[1], [0], [0], [1], [0, 0, 1, 1], [], []>} : vector<8x12xf32>, vector<12x16xf32>, vector<8x16xf32> -> vector<8x16xf32>
    %c0_22 = arith.constant 0 : index
    %c0_23 = arith.constant 0 : index
    %23 = vector.load %arg4[%c0_22, %c0_23] : memref<1x16xf32, #tpu.memory_space<vmem>>, vector<1x16xf32>
    %24 = vector.broadcast %23 : vector<1x16xf32> to vector<8x16xf32>
    %25 = arith.addf %22, %24 : vector<8x16xf32>
    %cst_24 = arith.constant 0.000000e+00 : f32
    %26 = vector.broadcast %cst_24 : f32 to vector<8x16xf32>
    %27 = arith.maximumf %25, %26 : vector<8x16xf32>
    %c0_25 = arith.constant 0 : index
    %c0_26 = arith.constant 0 : index
    %28 = vector.load %arg5[%c0_25, %c0_26] : memref<4x4xf32, #tpu.memory_space<vmem>>, vector<4x4xf32>
    %c0_27 = arith.constant 0 : index
    %c0_28 = arith.constant 0 : index
    %29 = vector.load %arg6[%c0_27, %c0_28] : memref<1x4xf32, #tpu.memory_space<vmem>>, vector<1x4xf32>
    %30 = vector.extract_strided_slice %27 {offsets = [0, 0], sizes = [8, 4], strides = [1, 1]} : vector<8x16xf32> to vector<8x4xf32>
    %cst_29 = arith.constant dense<0.000000e+00> : vector<8x4xf32>
    %31 = tpu.matmul %30, %28, %cst_29 {dimension_numbers = #tpu.dot_dimension_numbers<[1], [0], [0], [1], [0, 0, 1, 1], [], []>} : vector<8x4xf32>, vector<4x4xf32>, vector<8x4xf32> -> vector<8x4xf32>
    %32 = vector.broadcast %29 : vector<1x4xf32> to vector<8x4xf32>
    %33 = arith.addf %31, %32 : vector<8x4xf32>
    %cst_30 = arith.constant 0.000000e+00 : f32
    %34 = vector.broadcast %cst_30 : f32 to vector<8x4xf32>
    %35 = arith.maximumf %33, %34 : vector<8x4xf32>
    %36 = vector.extract_strided_slice %27 {offsets = [0, 4], sizes = [8, 4], strides = [1, 1]} : vector<8x16xf32> to vector<8x4xf32>
    %cst_31 = arith.constant dense<0.000000e+00> : vector<8x4xf32>
    %37 = tpu.matmul %36, %28, %cst_31 {dimension_numbers = #tpu.dot_dimension_numbers<[1], [0], [0], [1], [0, 0, 1, 1], [], []>} : vector<8x4xf32>, vector<4x4xf32>, vector<8x4xf32> -> vector<8x4xf32>
    %38 = vector.broadcast %29 : vector<1x4xf32> to vector<8x4xf32>
    %39 = arith.addf %37, %38 : vector<8x4xf32>
    %cst_32 = arith.constant 0.000000e+00 : f32
    %40 = vector.broadcast %cst_32 : f32 to vector<8x4xf32>
    %41 = arith.maximumf %39, %40 : vector<8x4xf32>
    %42 = vector.extract_strided_slice %27 {offsets = [0, 8], sizes = [8, 4], strides = [1, 1]} : vector<8x16xf32> to vector<8x4xf32>
    %cst_33 = arith.constant dense<0.000000e+00> : vector<8x4xf32>
    %43 = tpu.matmul %42, %28, %cst_33 {dimension_numbers = #tpu.dot_dimension_numbers<[1], [0], [0], [1], [0, 0, 1, 1], [], []>} : vector<8x4xf32>, vector<4x4xf32>, vector<8x4xf32> -> vector<8x4xf32>
    %44 = vector.broadcast %29 : vector<1x4xf32> to vector<8x4xf32>
    %45 = arith.addf %43, %44 : vector<8x4xf32>
    %cst_34 = arith.constant 0.000000e+00 : f32
    %46 = vector.broadcast %cst_34 : f32 to vector<8x4xf32>
    %47 = arith.maximumf %45, %46 : vector<8x4xf32>
    %48 = vector.extract_strided_slice %27 {offsets = [0, 12], sizes = [8, 4], strides = [1, 1]} : vector<8x16xf32> to vector<8x4xf32>
    %cst_35 = arith.constant dense<0.000000e+00> : vector<8x4xf32>
    %49 = tpu.matmul %48, %28, %cst_35 {dimension_numbers = #tpu.dot_dimension_numbers<[1], [0], [0], [1], [0, 0, 1, 1], [], []>} : vector<8x4xf32>, vector<4x4xf32>, vector<8x4xf32> -> vector<8x4xf32>
    %50 = vector.broadcast %29 : vector<1x4xf32> to vector<8x4xf32>
    %51 = arith.addf %49, %50 : vector<8x4xf32>
    %cst_36 = arith.constant 0.000000e+00 : f32
    %52 = vector.broadcast %cst_36 : f32 to vector<8x4xf32>
    %53 = arith.maximumf %51, %52 : vector<8x4xf32>
    %54 = vector.extract_strided_slice %1 {offsets = [0, 0], sizes = [8, 8], strides = [1, 1]} : vector<8x128xf32> to vector<8x8xf32>
    %55 = vector.extract_strided_slice %1 {offsets = [0, 8], sizes = [8, 8], strides = [1, 1]} : vector<8x128xf32> to vector<8x8xf32>
    %56 = vector.extract_strided_slice %1 {offsets = [0, 16], sizes = [8, 8], strides = [1, 1]} : vector<8x128xf32> to vector<8x8xf32>
    %57 = vector.extract_strided_slice %1 {offsets = [0, 24], sizes = [8, 8], strides = [1, 1]} : vector<8x128xf32> to vector<8x8xf32>
    %cst_37 = arith.constant 0.000000e+00 : f32
    %58 = vector.broadcast %cst_37 : f32 to vector<8x128xf32>
    %c0_38 = arith.constant 0 : index
    %c0_39 = arith.constant 0 : index
    %59 = vector.load %arg15[%c0_38, %c0_39] : memref<1x128xf32, #tpu.memory_space<vmem>>, vector<1x128xf32>
    %60 = vector.broadcast %59 : vector<1x128xf32> to vector<8x128xf32>
    %61 = arith.addf %58, %60 : vector<8x128xf32>
    %62 = vector.extract_strided_slice %20 {offsets = [0, 0], sizes = [8, 1], strides = [1, 1]} : vector<8x16xf32> to vector<8x1xf32>
    %63 = vector.extract_strided_slice %20 {offsets = [0, 1], sizes = [8, 1], strides = [1, 1]} : vector<8x16xf32> to vector<8x1xf32>
    %64 = vector.extract_strided_slice %20 {offsets = [0, 2], sizes = [8, 1], strides = [1, 1]} : vector<8x16xf32> to vector<8x1xf32>
    %65 = vector.extract_strided_slice %20 {offsets = [0, 3], sizes = [8, 1], strides = [1, 1]} : vector<8x16xf32> to vector<8x1xf32>
    %66 = vector.broadcast %62 : vector<8x1xf32> to vector<8x4xf32>
    %67 = arith.mulf %66, %35 : vector<8x4xf32>
    %68 = vector.broadcast %62 : vector<8x1xf32> to vector<8x8xf32>
    %69 = arith.mulf %68, %54 : vector<8x8xf32>
    %70 = vector.broadcast %63 : vector<8x1xf32> to vector<8x4xf32>
    %71 = arith.mulf %70, %41 : vector<8x4xf32>
    %72 = arith.addf %67, %71 : vector<8x4xf32>
    %73 = vector.broadcast %63 : vector<8x1xf32> to vector<8x8xf32>
    %74 = arith.mulf %73, %55 : vector<8x8xf32>
    %75 = arith.addf %69, %74 : vector<8x8xf32>
    %76 = vector.broadcast %64 : vector<8x1xf32> to vector<8x4xf32>
    %77 = arith.mulf %76, %47 : vector<8x4xf32>
    %78 = arith.addf %72, %77 : vector<8x4xf32>
    %79 = vector.broadcast %64 : vector<8x1xf32> to vector<8x8xf32>
    %80 = arith.mulf %79, %56 : vector<8x8xf32>
    %81 = arith.addf %75, %80 : vector<8x8xf32>
    %82 = vector.broadcast %65 : vector<8x1xf32> to vector<8x4xf32>
    %83 = arith.mulf %82, %53 : vector<8x4xf32>
    %84 = arith.addf %78, %83 : vector<8x4xf32>
    %85 = vector.broadcast %65 : vector<8x1xf32> to vector<8x8xf32>
    %86 = arith.mulf %85, %57 : vector<8x8xf32>
    %87 = arith.addf %81, %86 : vector<8x8xf32>
    %c0_40 = arith.constant 0 : index
    %c0_41 = arith.constant 0 : index
    %c0_42 = arith.constant 0 : index
    %88 = vector.load %arg13[%c0_40, %c0_41, %c0_42] : memref<4x4x128xf32, #tpu.memory_space<vmem>>, vector<1x4x128xf32>
    %89 = vector.shape_cast %88 : vector<1x4x128xf32> to vector<4x128xf32>
    %cst_43 = arith.constant dense<0.000000e+00> : vector<8x128xf32>
    %90 = tpu.matmul %84, %89, %cst_43 {dimension_numbers = #tpu.dot_dimension_numbers<[1], [0], [0], [1], [0, 0, 1, 1], [], []>} : vector<8x4xf32>, vector<4x128xf32>, vector<8x128xf32> -> vector<8x128xf32>
    %91 = arith.addf %61, %90 : vector<8x128xf32>
    %c0_44 = arith.constant 0 : index
    %c0_45 = arith.constant 0 : index
    %c0_46 = arith.constant 0 : index
    %92 = vector.load %arg14[%c0_44, %c0_45, %c0_46] : memref<4x8x128xf32, #tpu.memory_space<vmem>>, vector<1x8x128xf32>
    %93 = vector.shape_cast %92 : vector<1x8x128xf32> to vector<8x128xf32>
    %cst_47 = arith.constant dense<0.000000e+00> : vector<8x128xf32>
    %94 = tpu.matmul %87, %93, %cst_47 {dimension_numbers = #tpu.dot_dimension_numbers<[1], [0], [0], [1], [0, 0, 1, 1], [], []>} : vector<8x8xf32>, vector<8x128xf32>, vector<8x128xf32> -> vector<8x128xf32>
    %95 = arith.addf %91, %94 : vector<8x128xf32>
    %96 = vector.extract_strided_slice %20 {offsets = [0, 4], sizes = [8, 1], strides = [1, 1]} : vector<8x16xf32> to vector<8x1xf32>
    %97 = vector.extract_strided_slice %20 {offsets = [0, 5], sizes = [8, 1], strides = [1, 1]} : vector<8x16xf32> to vector<8x1xf32>
    %98 = vector.extract_strided_slice %20 {offsets = [0, 6], sizes = [8, 1], strides = [1, 1]} : vector<8x16xf32> to vector<8x1xf32>
    %99 = vector.extract_strided_slice %20 {offsets = [0, 7], sizes = [8, 1], strides = [1, 1]} : vector<8x16xf32> to vector<8x1xf32>
    %100 = vector.broadcast %96 : vector<8x1xf32> to vector<8x4xf32>
    %101 = arith.mulf %100, %35 : vector<8x4xf32>
    %102 = vector.broadcast %96 : vector<8x1xf32> to vector<8x8xf32>
    %103 = arith.mulf %102, %54 : vector<8x8xf32>
    %104 = vector.broadcast %97 : vector<8x1xf32> to vector<8x4xf32>
    %105 = arith.mulf %104, %41 : vector<8x4xf32>
    %106 = arith.addf %101, %105 : vector<8x4xf32>
    %107 = vector.broadcast %97 : vector<8x1xf32> to vector<8x8xf32>
    %108 = arith.mulf %107, %55 : vector<8x8xf32>
    %109 = arith.addf %103, %108 : vector<8x8xf32>
    %110 = vector.broadcast %98 : vector<8x1xf32> to vector<8x4xf32>
    %111 = arith.mulf %110, %47 : vector<8x4xf32>
    %112 = arith.addf %106, %111 : vector<8x4xf32>
    %113 = vector.broadcast %98 : vector<8x1xf32> to vector<8x8xf32>
    %114 = arith.mulf %113, %56 : vector<8x8xf32>
    %115 = arith.addf %109, %114 : vector<8x8xf32>
    %116 = vector.broadcast %99 : vector<8x1xf32> to vector<8x4xf32>
    %117 = arith.mulf %116, %53 : vector<8x4xf32>
    %118 = arith.addf %112, %117 : vector<8x4xf32>
    %119 = vector.broadcast %99 : vector<8x1xf32> to vector<8x8xf32>
    %120 = arith.mulf %119, %57 : vector<8x8xf32>
    %121 = arith.addf %115, %120 : vector<8x8xf32>
    %c1 = arith.constant 1 : index
    %c0_48 = arith.constant 0 : index
    %c0_49 = arith.constant 0 : index
    %122 = vector.load %arg13[%c1, %c0_48, %c0_49] : memref<4x4x128xf32, #tpu.memory_space<vmem>>, vector<1x4x128xf32>
    %123 = vector.shape_cast %122 : vector<1x4x128xf32> to vector<4x128xf32>
    %cst_50 = arith.constant dense<0.000000e+00> : vector<8x128xf32>
    %124 = tpu.matmul %118, %123, %cst_50 {dimension_numbers = #tpu.dot_dimension_numbers<[1], [0], [0], [1], [0, 0, 1, 1], [], []>} : vector<8x4xf32>, vector<4x128xf32>, vector<8x128xf32> -> vector<8x128xf32>
    %125 = arith.addf %95, %124 : vector<8x128xf32>
    %c1_51 = arith.constant 1 : index
    %c0_52 = arith.constant 0 : index
    %c0_53 = arith.constant 0 : index
    %126 = vector.load %arg14[%c1_51, %c0_52, %c0_53] : memref<4x8x128xf32, #tpu.memory_space<vmem>>, vector<1x8x128xf32>
    %127 = vector.shape_cast %126 : vector<1x8x128xf32> to vector<8x128xf32>
    %cst_54 = arith.constant dense<0.000000e+00> : vector<8x128xf32>
    %128 = tpu.matmul %121, %127, %cst_54 {dimension_numbers = #tpu.dot_dimension_numbers<[1], [0], [0], [1], [0, 0, 1, 1], [], []>} : vector<8x8xf32>, vector<8x128xf32>, vector<8x128xf32> -> vector<8x128xf32>
    %129 = arith.addf %125, %128 : vector<8x128xf32>
    %130 = vector.extract_strided_slice %20 {offsets = [0, 8], sizes = [8, 1], strides = [1, 1]} : vector<8x16xf32> to vector<8x1xf32>
    %131 = vector.extract_strided_slice %20 {offsets = [0, 9], sizes = [8, 1], strides = [1, 1]} : vector<8x16xf32> to vector<8x1xf32>
    %132 = vector.extract_strided_slice %20 {offsets = [0, 10], sizes = [8, 1], strides = [1, 1]} : vector<8x16xf32> to vector<8x1xf32>
    %133 = vector.extract_strided_slice %20 {offsets = [0, 11], sizes = [8, 1], strides = [1, 1]} : vector<8x16xf32> to vector<8x1xf32>
    %134 = vector.broadcast %130 : vector<8x1xf32> to vector<8x4xf32>
    %135 = arith.mulf %134, %35 : vector<8x4xf32>
    %136 = vector.broadcast %130 : vector<8x1xf32> to vector<8x8xf32>
    %137 = arith.mulf %136, %54 : vector<8x8xf32>
    %138 = vector.broadcast %131 : vector<8x1xf32> to vector<8x4xf32>
    %139 = arith.mulf %138, %41 : vector<8x4xf32>
    %140 = arith.addf %135, %139 : vector<8x4xf32>
    %141 = vector.broadcast %131 : vector<8x1xf32> to vector<8x8xf32>
    %142 = arith.mulf %141, %55 : vector<8x8xf32>
    %143 = arith.addf %137, %142 : vector<8x8xf32>
    %144 = vector.broadcast %132 : vector<8x1xf32> to vector<8x4xf32>
    %145 = arith.mulf %144, %47 : vector<8x4xf32>
    %146 = arith.addf %140, %145 : vector<8x4xf32>
    %147 = vector.broadcast %132 : vector<8x1xf32> to vector<8x8xf32>
    %148 = arith.mulf %147, %56 : vector<8x8xf32>
    %149 = arith.addf %143, %148 : vector<8x8xf32>
    %150 = vector.broadcast %133 : vector<8x1xf32> to vector<8x4xf32>
    %151 = arith.mulf %150, %53 : vector<8x4xf32>
    %152 = arith.addf %146, %151 : vector<8x4xf32>
    %153 = vector.broadcast %133 : vector<8x1xf32> to vector<8x8xf32>
    %154 = arith.mulf %153, %57 : vector<8x8xf32>
    %155 = arith.addf %149, %154 : vector<8x8xf32>
    %c2 = arith.constant 2 : index
    %c0_55 = arith.constant 0 : index
    %c0_56 = arith.constant 0 : index
    %156 = vector.load %arg13[%c2, %c0_55, %c0_56] : memref<4x4x128xf32, #tpu.memory_space<vmem>>, vector<1x4x128xf32>
    %157 = vector.shape_cast %156 : vector<1x4x128xf32> to vector<4x128xf32>
    %cst_57 = arith.constant dense<0.000000e+00> : vector<8x128xf32>
    %158 = tpu.matmul %152, %157, %cst_57 {dimension_numbers = #tpu.dot_dimension_numbers<[1], [0], [0], [1], [0, 0, 1, 1], [], []>} : vector<8x4xf32>, vector<4x128xf32>, vector<8x128xf32> -> vector<8x128xf32>
    %159 = arith.addf %129, %158 : vector<8x128xf32>
    %c2_58 = arith.constant 2 : index
    %c0_59 = arith.constant 0 : index
    %c0_60 = arith.constant 0 : index
    %160 = vector.load %arg14[%c2_58, %c0_59, %c0_60] : memref<4x8x128xf32, #tpu.memory_space<vmem>>, vector<1x8x128xf32>
    %161 = vector.shape_cast %160 : vector<1x8x128xf32> to vector<8x128xf32>
    %cst_61 = arith.constant dense<0.000000e+00> : vector<8x128xf32>
    %162 = tpu.matmul %155, %161, %cst_61 {dimension_numbers = #tpu.dot_dimension_numbers<[1], [0], [0], [1], [0, 0, 1, 1], [], []>} : vector<8x8xf32>, vector<8x128xf32>, vector<8x128xf32> -> vector<8x128xf32>
    %163 = arith.addf %159, %162 : vector<8x128xf32>
    %164 = vector.extract_strided_slice %20 {offsets = [0, 12], sizes = [8, 1], strides = [1, 1]} : vector<8x16xf32> to vector<8x1xf32>
    %165 = vector.extract_strided_slice %20 {offsets = [0, 13], sizes = [8, 1], strides = [1, 1]} : vector<8x16xf32> to vector<8x1xf32>
    %166 = vector.extract_strided_slice %20 {offsets = [0, 14], sizes = [8, 1], strides = [1, 1]} : vector<8x16xf32> to vector<8x1xf32>
    %167 = vector.extract_strided_slice %20 {offsets = [0, 15], sizes = [8, 1], strides = [1, 1]} : vector<8x16xf32> to vector<8x1xf32>
    %168 = vector.broadcast %164 : vector<8x1xf32> to vector<8x4xf32>
    %169 = arith.mulf %168, %35 : vector<8x4xf32>
    %170 = vector.broadcast %164 : vector<8x1xf32> to vector<8x8xf32>
    %171 = arith.mulf %170, %54 : vector<8x8xf32>
    %172 = vector.broadcast %165 : vector<8x1xf32> to vector<8x4xf32>
    %173 = arith.mulf %172, %41 : vector<8x4xf32>
    %174 = arith.addf %169, %173 : vector<8x4xf32>
    %175 = vector.broadcast %165 : vector<8x1xf32> to vector<8x8xf32>
    %176 = arith.mulf %175, %55 : vector<8x8xf32>
    %177 = arith.addf %171, %176 : vector<8x8xf32>
    %178 = vector.broadcast %166 : vector<8x1xf32> to vector<8x4xf32>
    %179 = arith.mulf %178, %47 : vector<8x4xf32>
    %180 = arith.addf %174, %179 : vector<8x4xf32>
    %181 = vector.broadcast %166 : vector<8x1xf32> to vector<8x8xf32>
    %182 = arith.mulf %181, %56 : vector<8x8xf32>
    %183 = arith.addf %177, %182 : vector<8x8xf32>
    %184 = vector.broadcast %167 : vector<8x1xf32> to vector<8x4xf32>
    %185 = arith.mulf %184, %53 : vector<8x4xf32>
    %186 = arith.addf %180, %185 : vector<8x4xf32>
    %187 = vector.broadcast %167 : vector<8x1xf32> to vector<8x8xf32>
    %188 = arith.mulf %187, %57 : vector<8x8xf32>
    %189 = arith.addf %183, %188 : vector<8x8xf32>
    %c3 = arith.constant 3 : index
    %c0_62 = arith.constant 0 : index
    %c0_63 = arith.constant 0 : index
    %190 = vector.load %arg13[%c3, %c0_62, %c0_63] : memref<4x4x128xf32, #tpu.memory_space<vmem>>, vector<1x4x128xf32>
    %191 = vector.shape_cast %190 : vector<1x4x128xf32> to vector<4x128xf32>
    %cst_64 = arith.constant dense<0.000000e+00> : vector<8x128xf32>
    %192 = tpu.matmul %186, %191, %cst_64 {dimension_numbers = #tpu.dot_dimension_numbers<[1], [0], [0], [1], [0, 0, 1, 1], [], []>} : vector<8x4xf32>, vector<4x128xf32>, vector<8x128xf32> -> vector<8x128xf32>
    %193 = arith.addf %163, %192 : vector<8x128xf32>
    %c3_65 = arith.constant 3 : index
    %c0_66 = arith.constant 0 : index
    %c0_67 = arith.constant 0 : index
    %194 = vector.load %arg14[%c3_65, %c0_66, %c0_67] : memref<4x8x128xf32, #tpu.memory_space<vmem>>, vector<1x8x128xf32>
    %195 = vector.shape_cast %194 : vector<1x8x128xf32> to vector<8x128xf32>
    %cst_68 = arith.constant dense<0.000000e+00> : vector<8x128xf32>
    %196 = tpu.matmul %189, %195, %cst_68 {dimension_numbers = #tpu.dot_dimension_numbers<[1], [0], [0], [1], [0, 0, 1, 1], [], []>} : vector<8x8xf32>, vector<8x128xf32>, vector<8x128xf32> -> vector<8x128xf32>
    %197 = arith.addf %193, %196 : vector<8x128xf32>
    %cst_69 = arith.constant 0.000000e+00 : f32
    %198 = vector.broadcast %cst_69 : f32 to vector<8x128xf32>
    %199 = arith.maximumf %197, %198 : vector<8x128xf32>
    %c0_70 = arith.constant 0 : index
    %c0_71 = arith.constant 0 : index
    %200 = vector.load %arg16[%c0_70, %c0_71] : memref<1x128xf32, #tpu.memory_space<vmem>>, vector<1x128xf32>
    %201 = vector.broadcast %200 : vector<1x128xf32> to vector<8x128xf32>
    %202 = arith.mulf %199, %201 : vector<8x128xf32>
    %c0_72 = arith.constant 0 : index
    %c0_73 = arith.constant 0 : index
    %203 = vector.load %arg17[%c0_72, %c0_73] : memref<1x128xf32, #tpu.memory_space<vmem>>, vector<1x128xf32>
    %204 = vector.broadcast %203 : vector<1x128xf32> to vector<8x128xf32>
    %205 = arith.addf %202, %204 : vector<8x128xf32>
    %c0_74 = arith.constant 0 : index
    %c0_75 = arith.constant 0 : index
    %206 = vector.load %arg18[%c0_74, %c0_75] : memref<8x128xf32, #tpu.memory_space<vmem>>, vector<8x128xf32>
    tpu.vector_store %arg18[%c0_74, %c0_75], %205 {strides = array<i32>} : memref<8x128xf32, #tpu.memory_space<vmem>>, vector<8x128xf32>,
    return
  }
  func.func @transform_0(%arg0: i32) -> (i32, i32) {
    %c0_i32 = arith.constant 0 : i32
    %c0_i32_0 = arith.constant 0 : i32
    return %arg0, %c0_i32 : i32, i32
  }
  func.func @transform_1(%arg0: i32) -> (i32, i32) {
    %c0_i32 = arith.constant 0 : i32
    %c0_i32_0 = arith.constant 0 : i32
    return %arg0, %c0_i32 : i32, i32
  }
  func.func @transform_2(%arg0: i32) -> (i32, i32) {
    %c0_i32 = arith.constant 0 : i32
    %c0_i32_0 = arith.constant 0 : i32
    %c0_i32_1 = arith.constant 0 : i32
    return %c0_i32, %c0_i32_0 : i32, i32
  }
  func.func @transform_3(%arg0: i32) -> (i32, i32) {
    %c0_i32 = arith.constant 0 : i32
    %c0_i32_0 = arith.constant 0 : i32
    %c0_i32_1 = arith.constant 0 : i32
    return %c0_i32, %c0_i32_0 : i32, i32
  }
  func.func @transform_4(%arg0: i32) -> (i32, i32) {
    %c0_i32 = arith.constant 0 : i32
    %c0_i32_0 = arith.constant 0 : i32
    %c0_i32_1 = arith.constant 0 : i32
    return %c0_i32, %c0_i32_0 : i32, i32
  }
  func.func @transform_5(%arg0: i32) -> (i32, i32) {
    %c0_i32 = arith.constant 0 : i32
    %c0_i32_0 = arith.constant 0 : i32
    %c0_i32_1 = arith.constant 0 : i32
    return %c0_i32, %c0_i32_0 : i32, i32
  }
  func.func @transform_6(%arg0: i32) -> (i32, i32) {
    %c0_i32 = arith.constant 0 : i32
    %c0_i32_0 = arith.constant 0 : i32
    %c0_i32_1 = arith.constant 0 : i32
    return %c0_i32, %c0_i32_0 : i32, i32
  }
  func.func @transform_7(%arg0: i32) -> (i32, i32) {
    %c0_i32 = arith.constant 0 : i32
    %c0_i32_0 = arith.constant 0 : i32
    %c0_i32_1 = arith.constant 0 : i32
    return %c0_i32, %c0_i32_0 : i32, i32
  }
  func.func @transform_8(%arg0: i32) -> (i32, i32) {
    %c0_i32 = arith.constant 0 : i32
    %c0_i32_0 = arith.constant 0 : i32
    %c0_i32_1 = arith.constant 0 : i32
    return %c0_i32, %c0_i32_0 : i32, i32
  }
  func.func @transform_9(%arg0: i32) -> (i32, i32) {
    %c0_i32 = arith.constant 0 : i32
    %c0_i32_0 = arith.constant 0 : i32
    %c0_i32_1 = arith.constant 0 : i32
    return %c0_i32, %c0_i32_0 : i32, i32
  }
  func.func @transform_10(%arg0: i32) -> (i32, i32) {
    %c0_i32 = arith.constant 0 : i32
    %c0_i32_0 = arith.constant 0 : i32
    %c0_i32_1 = arith.constant 0 : i32
    return %c0_i32, %c0_i32_0 : i32, i32
  }
  func.func @transform_11(%arg0: i32) -> (i32, i32) {
    %c0_i32 = arith.constant 0 : i32
    %c0_i32_0 = arith.constant 0 : i32
    %c0_i32_1 = arith.constant 0 : i32
    return %c0_i32, %c0_i32_0 : i32, i32
  }
  func.func @transform_12(%arg0: i32) -> (i32, i32, i32) {
    %c0_i32 = arith.constant 0 : i32
    %c0_i32_0 = arith.constant 0 : i32
    %c0_i32_1 = arith.constant 0 : i32
    %c0_i32_2 = arith.constant 0 : i32
    return %c0_i32, %c0_i32_0, %c0_i32_1 : i32, i32, i32
  }
  func.func @transform_13(%arg0: i32) -> (i32, i32, i32) {
    %c0_i32 = arith.constant 0 : i32
    %c0_i32_0 = arith.constant 0 : i32
    %c0_i32_1 = arith.constant 0 : i32
    %c0_i32_2 = arith.constant 0 : i32
    return %c0_i32, %c0_i32_0, %c0_i32_1 : i32, i32, i32
  }
  func.func @transform_14(%arg0: i32) -> (i32, i32) {
    %c0_i32 = arith.constant 0 : i32
    %c0_i32_0 = arith.constant 0 : i32
    %c0_i32_1 = arith.constant 0 : i32
    return %c0_i32, %c0_i32_0 : i32, i32
  }
  func.func @transform_15(%arg0: i32) -> (i32, i32) {
    %c0_i32 = arith.constant 0 : i32
    %c0_i32_0 = arith.constant 0 : i32
    %c0_i32_1 = arith.constant 0 : i32
    return %c0_i32, %c0_i32_0 : i32, i32
  }
  func.func @transform_16(%arg0: i32) -> (i32, i32) {
    %c0_i32 = arith.constant 0 : i32
    %c0_i32_0 = arith.constant 0 : i32
    %c0_i32_1 = arith.constant 0 : i32
    return %c0_i32, %c0_i32_0 : i32, i32
  }
  func.func @transform_17(%arg0: i32) -> (i32, i32) {
    %c0_i32 = arith.constant 0 : i32
    %c0_i32_0 = arith.constant 0 : i32
    return %arg0, %c0_i32 : i32, i32
  }
}

module attributes {stable_mosaic.version = 11 : i64} {
  func.func @_xconv_kernel(%arg0: i32, %arg1: memref<8x12xf32, #tpu.memory_space<vmem>>, %arg2: memref<8x128xf32, #tpu.memory_space<vmem>>, %arg3: memref<12x16xf32, #tpu.memory_space<vmem>>, %arg4: memref<1x16xf32, #tpu.memory_space<vmem>>, %arg5: memref<4x4xf32, #tpu.memory_space<vmem>>, %arg6: memref<1x4xf32, #tpu.memory_space<vmem>>, %arg7: memref<12x16xf32, #tpu.memory_space<vmem>>, %arg8: memref<1x16xf32, #tpu.memory_space<vmem>>, %arg9: memref<16x16xf32, #tpu.memory_space<vmem>>, %arg10: memref<1x16xf32, #tpu.memory_space<vmem>>, %arg11: memref<16x16xf32, #tpu.memory_space<vmem>>, %arg12: memref<1x16xf32, #tpu.memory_space<vmem>>, %arg13: memref<4x4x128xf32, #tpu.memory_space<vmem>>, %arg14: memref<4x8x128xf32, #tpu.memory_space<vmem>>, %arg15: memref<1x128xf32, #tpu.memory_space<vmem>>, %arg16: memref<1x128xf32, #tpu.memory_space<vmem>>, %arg17: memref<1x128xf32, #tpu.memory_space<vmem>>, %arg18: memref<8x128xf32, #tpu.memory_space<vmem>>) attributes {dimension_semantics = [#tpu.dimension_semantics<parallel>], iteration_bounds = array<i64: 2>, scalar_prefetch = 0 : i64, scratch_operands = 0 : i64, tpu.core_type = #tpu.core_type<tc>, window_params = [{transform_indices = @transform_0, window_bounds = array<i64: 8, 12>}, {transform_indices = @transform_1, window_bounds = array<i64: 8, 128>}, {pipeline_mode = #tpu.pipeline_mode<synchronous>, transform_indices = @transform_2, window_bounds = array<i64: 12, 16>}, {pipeline_mode = #tpu.pipeline_mode<synchronous>, transform_indices = @transform_3, window_bounds = array<i64: 1, 16>}, {pipeline_mode = #tpu.pipeline_mode<synchronous>, transform_indices = @transform_4, window_bounds = array<i64: 4, 4>}, {pipeline_mode = #tpu.pipeline_mode<synchronous>, transform_indices = @transform_5, window_bounds = array<i64: 1, 4>}, {pipeline_mode = #tpu.pipeline_mode<synchronous>, transform_indices = @transform_6, window_bounds = array<i64: 12, 16>}, {pipeline_mode = #tpu.pipeline_mode<synchronous>, transform_indices = @transform_7, window_bounds = array<i64: 1, 16>}, {pipeline_mode = #tpu.pipeline_mode<synchronous>, transform_indices = @transform_8, window_bounds = array<i64: 16, 16>}, {pipeline_mode = #tpu.pipeline_mode<synchronous>, transform_indices = @transform_9, window_bounds = array<i64: 1, 16>}, {pipeline_mode = #tpu.pipeline_mode<synchronous>, transform_indices = @transform_10, window_bounds = array<i64: 16, 16>}, {pipeline_mode = #tpu.pipeline_mode<synchronous>, transform_indices = @transform_11, window_bounds = array<i64: 1, 16>}, {pipeline_mode = #tpu.pipeline_mode<synchronous>, transform_indices = @transform_12, window_bounds = array<i64: 4, 4, 128>}, {pipeline_mode = #tpu.pipeline_mode<synchronous>, transform_indices = @transform_13, window_bounds = array<i64: 4, 8, 128>}, {pipeline_mode = #tpu.pipeline_mode<synchronous>, transform_indices = @transform_14, window_bounds = array<i64: 1, 128>}, {pipeline_mode = #tpu.pipeline_mode<synchronous>, transform_indices = @transform_15, window_bounds = array<i64: 1, 128>}, {pipeline_mode = #tpu.pipeline_mode<synchronous>, transform_indices = @transform_16, window_bounds = array<i64: 1, 128>}, {transform_indices = @transform_17, window_bounds = array<i64: 8, 128>}]} {
    %c0 = arith.constant 0 : index
    %c0_0 = arith.constant 0 : index
    %0 = vector.load %arg1[%c0, %c0_0] : memref<8x12xf32, #tpu.memory_space<vmem>>, vector<8x12xf32>
    %c0_1 = arith.constant 0 : index
    %c0_2 = arith.constant 0 : index
    %1 = vector.load %arg2[%c0_1, %c0_2] : memref<8x128xf32, #tpu.memory_space<vmem>>, vector<8x128xf32>
    %c0_3 = arith.constant 0 : index
    %c0_4 = arith.constant 0 : index
    %2 = vector.load %arg7[%c0_3, %c0_4] : memref<12x16xf32, #tpu.memory_space<vmem>>, vector<12x16xf32>
    %cst = arith.constant dense<0.000000e+00> : vector<8x16xf32>
    %3 = tpu.matmul %0, %2, %cst {dimension_numbers = #tpu.dot_dimension_numbers<[1], [0], [0], [1], [0, 0, 1, 1], [], []>} : vector<8x12xf32>, vector<12x16xf32>, vector<8x16xf32> -> vector<8x16xf32>
    %c0_5 = arith.constant 0 : index
    %c0_6 = arith.constant 0 : index
    %4 = vector.load %arg8[%c0_5, %c0_6] : memref<1x16xf32, #tpu.memory_space<vmem>>, vector<1x16xf32>
    %5 = vector.broadcast %4 : vector<1x16xf32> to vector<8x16xf32>
    %6 = arith.addf %3, %5 : vector<8x16xf32>
    %cst_7 = arith.constant 0.000000e+00 : f32
    %7 = vector.broadcast %cst_7 : f32 to vector<8x16xf32>
    %8 = arith.maximumf %6, %7 : vector<8x16xf32>
    %c0_8 = arith.constant 0 : index
    %c0_9 = arith.constant 0 : index
    %9 = vector.load %arg9[%c0_8, %c0_9] : memref<16x16xf32, #tpu.memory_space<vmem>>, vector<16x16xf32>
    %cst_10 = arith.constant dense<0.000000e+00> : vector<8x16xf32>
    %10 = tpu.matmul %8, %9, %cst_10 {dimension_numbers = #tpu.dot_dimension_numbers<[1], [0], [0], [1], [0, 0, 1, 1], [], []>} : vector<8x16xf32>, vector<16x16xf32>, vector<8x16xf32> -> vector<8x16xf32>
    %c0_11 = arith.constant 0 : index
    %c0_12 = arith.constant 0 : index
    %11 = vector.load %arg10[%c0_11, %c0_12] : memref<1x16xf32, #tpu.memory_space<vmem>>, vector<1x16xf32>
    %12 = vector.broadcast %11 : vector<1x16xf32> to vector<8x16xf32>
    %13 = arith.addf %10, %12 : vector<8x16xf32>
    %cst_13 = arith.constant 0.000000e+00 : f32
    %14 = vector.broadcast %cst_13 : f32 to vector<8x16xf32>
    %15 = arith.maximumf %13, %14 : vector<8x16xf32>
    %c0_14 = arith.constant 0 : index
    %c0_15 = arith.constant 0 : index
    %16 = vector.load %arg11[%c0_14, %c0_15] : memref<16x16xf32, #tpu.memory_space<vmem>>, vector<16x16xf32>
    %cst_16 = arith.constant dense<0.000000e+00> : vector<8x16xf32>
    %17 = tpu.matmul %15, %16, %cst_16 {dimension_numbers = #tpu.dot_dimension_numbers<[1], [0], [0], [1], [0, 0, 1, 1], [], []>} : vector<8x16xf32>, vector<16x16xf32>, vector<8x16xf32> -> vector<8x16xf32>
    %c0_17 = arith.constant 0 : index
    %c0_18 = arith.constant 0 : index
    %18 = vector.load %arg12[%c0_17, %c0_18] : memref<1x16xf32, #tpu.memory_space<vmem>>, vector<1x16xf32>
    %19 = vector.broadcast %18 : vector<1x16xf32> to vector<8x16xf32>
    %20 = arith.addf %17, %19 : vector<8x16xf32>
    %c0_19 = arith.constant 0 : index
    %c0_20 = arith.constant 0 : index
    %21 = vector.load %arg3[%c0_19, %c0_20] : memref<12x16xf32, #tpu.memory_space<vmem>>, vector<12x16xf32>
    %cst_21 = arith.constant dense<0.000000e+00> : vector<8x16xf32>
    %22 = tpu.matmul %0, %21, %cst_21 {dimension_numbers = #tpu.dot_dimension_numbers<[1], [0], [0], [1], [0, 0, 1, 1], [], []>} : vector<8x12xf32>, vector<12x16xf32>, vector<8x16xf32> -> vector<8x16xf32>
    %c0_22 = arith.constant 0 : index
    %c0_23 = arith.constant 0 : index
    %23 = vector.load %arg4[%c0_22, %c0_23] : memref<1x16xf32, #tpu.memory_space<vmem>>, vector<1x16xf32>
    %24 = vector.broadcast %23 : vector<1x16xf32> to vector<8x16xf32>
    %25 = arith.addf %22, %24 : vector<8x16xf32>
    %cst_24 = arith.constant 0.000000e+00 : f32
    %26 = vector.broadcast %cst_24 : f32 to vector<8x16xf32>
    %27 = arith.maximumf %25, %26 : vector<8x16xf32>
    %c0_25 = arith.constant 0 : index
    %c0_26 = arith.constant 0 : index
    %28 = vector.load %arg5[%c0_25, %c0_26] : memref<4x4xf32, #tpu.memory_space<vmem>>, vector<4x4xf32>
    %c0_27 = arith.constant 0 : index
    %c0_28 = arith.constant 0 : index
    %29 = vector.load %arg6[%c0_27, %c0_28] : memref<1x4xf32, #tpu.memory_space<vmem>>, vector<1x4xf32>
    %30 = vector.extract_strided_slice %27 {offsets = [0, 0], sizes = [8, 4], strides = [1, 1]} : vector<8x16xf32> to vector<8x4xf32>
    %cst_29 = arith.constant dense<0.000000e+00> : vector<8x4xf32>
    %31 = tpu.matmul %30, %28, %cst_29 {dimension_numbers = #tpu.dot_dimension_numbers<[1], [0], [0], [1], [0, 0, 1, 1], [], []>} : vector<8x4xf32>, vector<4x4xf32>, vector<8x4xf32> -> vector<8x4xf32>
    %32 = vector.broadcast %29 : vector<1x4xf32> to vector<8x4xf32>
    %33 = arith.addf %31, %32 : vector<8x4xf32>
    %cst_30 = arith.constant 0.000000e+00 : f32
    %34 = vector.broadcast %cst_30 : f32 to vector<8x4xf32>
    %35 = arith.maximumf %33, %34 : vector<8x4xf32>
    %36 = vector.extract_strided_slice %27 {offsets = [0, 4], sizes = [8, 4], strides = [1, 1]} : vector<8x16xf32> to vector<8x4xf32>
    %cst_31 = arith.constant dense<0.000000e+00> : vector<8x4xf32>
    %37 = tpu.matmul %36, %28, %cst_31 {dimension_numbers = #tpu.dot_dimension_numbers<[1], [0], [0], [1], [0, 0, 1, 1], [], []>} : vector<8x4xf32>, vector<4x4xf32>, vector<8x4xf32> -> vector<8x4xf32>
    %38 = vector.broadcast %29 : vector<1x4xf32> to vector<8x4xf32>
    %39 = arith.addf %37, %38 : vector<8x4xf32>
    %cst_32 = arith.constant 0.000000e+00 : f32
    %40 = vector.broadcast %cst_32 : f32 to vector<8x4xf32>
    %41 = arith.maximumf %39, %40 : vector<8x4xf32>
    %42 = vector.extract_strided_slice %27 {offsets = [0, 8], sizes = [8, 4], strides = [1, 1]} : vector<8x16xf32> to vector<8x4xf32>
    %cst_33 = arith.constant dense<0.000000e+00> : vector<8x4xf32>
    %43 = tpu.matmul %42, %28, %cst_33 {dimension_numbers = #tpu.dot_dimension_numbers<[1], [0], [0], [1], [0, 0, 1, 1], [], []>} : vector<8x4xf32>, vector<4x4xf32>, vector<8x4xf32> -> vector<8x4xf32>
    %44 = vector.broadcast %29 : vector<1x4xf32> to vector<8x4xf32>
    %45 = arith.addf %43, %44 : vector<8x4xf32>
    %cst_34 = arith.constant 0.000000e+00 : f32
    %46 = vector.broadcast %cst_34 : f32 to vector<8x4xf32>
    %47 = arith.maximumf %45, %46 : vector<8x4xf32>
    %48 = vector.extract_strided_slice %27 {offsets = [0, 12], sizes = [8, 4], strides = [1, 1]} : vector<8x16xf32> to vector<8x4xf32>
    %cst_35 = arith.constant dense<0.000000e+00> : vector<8x4xf32>
    %49 = tpu.matmul %48, %28, %cst_35 {dimension_numbers = #tpu.dot_dimension_numbers<[1], [0], [0], [1], [0, 0, 1, 1], [], []>} : vector<8x4xf32>, vector<4x4xf32>, vector<8x4xf32> -> vector<8x4xf32>
    %50 = vector.broadcast %29 : vector<1x4xf32> to vector<8x4xf32>
    %51 = arith.addf %49, %50 : vector<8x4xf32>
    %cst_36 = arith.constant 0.000000e+00 : f32
    %52 = vector.broadcast %cst_36 : f32 to vector<8x4xf32>
    %53 = arith.maximumf %51, %52 : vector<8x4xf32>
    %54 = vector.extract_strided_slice %1 {offsets = [0, 0], sizes = [8, 8], strides = [1, 1]} : vector<8x128xf32> to vector<8x8xf32>
    %55 = vector.extract_strided_slice %1 {offsets = [0, 8], sizes = [8, 8], strides = [1, 1]} : vector<8x128xf32> to vector<8x8xf32>
    %56 = vector.extract_strided_slice %1 {offsets = [0, 16], sizes = [8, 8], strides = [1, 1]} : vector<8x128xf32> to vector<8x8xf32>
    %57 = vector.extract_strided_slice %1 {offsets = [0, 24], sizes = [8, 8], strides = [1, 1]} : vector<8x128xf32> to vector<8x8xf32>
    %cst_37 = arith.constant 0.000000e+00 : f32
    %58 = vector.broadcast %cst_37 : f32 to vector<8x128xf32>
    %c0_38 = arith.constant 0 : index
    %c0_39 = arith.constant 0 : index
    %59 = vector.load %arg15[%c0_38, %c0_39] : memref<1x128xf32, #tpu.memory_space<vmem>>, vector<1x128xf32>
    %60 = vector.broadcast %59 : vector<1x128xf32> to vector<8x128xf32>
    %61 = arith.addf %58, %60 : vector<8x128xf32>
    %62 = vector.extract_strided_slice %20 {offsets = [0, 0], sizes = [8, 1], strides = [1, 1]} : vector<8x16xf32> to vector<8x1xf32>
    %63 = vector.extract_strided_slice %20 {offsets = [0, 1], sizes = [8, 1], strides = [1, 1]} : vector<8x16xf32> to vector<8x1xf32>
    %64 = vector.extract_strided_slice %20 {offsets = [0, 2], sizes = [8, 1], strides = [1, 1]} : vector<8x16xf32> to vector<8x1xf32>
    %65 = vector.extract_strided_slice %20 {offsets = [0, 3], sizes = [8, 1], strides = [1, 1]} : vector<8x16xf32> to vector<8x1xf32>
    %66 = vector.broadcast %62 : vector<8x1xf32> to vector<8x4xf32>
    %67 = arith.mulf %66, %35 : vector<8x4xf32>
    %68 = vector.broadcast %62 : vector<8x1xf32> to vector<8x8xf32>
    %69 = arith.mulf %68, %54 : vector<8x8xf32>
    %70 = vector.broadcast %63 : vector<8x1xf32> to vector<8x4xf32>
    %71 = arith.mulf %70, %41 : vector<8x4xf32>
    %72 = arith.addf %67, %71 : vector<8x4xf32>
    %73 = vector.broadcast %63 : vector<8x1xf32> to vector<8x8xf32>
    %74 = arith.mulf %73, %55 : vector<8x8xf32>
    %75 = arith.addf %69, %74 : vector<8x8xf32>
    %76 = vector.broadcast %64 : vector<8x1xf32> to vector<8x4xf32>
    %77 = arith.mulf %76, %47 : vector<8x4xf32>
    %78 = arith.addf %72, %77 : vector<8x4xf32>
    %79 = vector.broadcast %64 : vector<8x1xf32> to vector<8x8xf32>
    %80 = arith.mulf %79, %56 : vector<8x8xf32>
    %81 = arith.addf %75, %80 : vector<8x8xf32>
    %82 = vector.broadcast %65 : vector<8x1xf32> to vector<8x4xf32>
    %83 = arith.mulf %82, %53 : vector<8x4xf32>
    %84 = arith.addf %78, %83 : vector<8x4xf32>
    %85 = vector.broadcast %65 : vector<8x1xf32> to vector<8x8xf32>
    %86 = arith.mulf %85, %57 : vector<8x8xf32>
    %87 = arith.addf %81, %86 : vector<8x8xf32>
    %c0_40 = arith.constant 0 : index
    %c0_41 = arith.constant 0 : index
    %c0_42 = arith.constant 0 : index
    %88 = vector.load %arg13[%c0_40, %c0_41, %c0_42] : memref<4x4x128xf32, #tpu.memory_space<vmem>>, vector<1x4x128xf32>
    %89 = vector.shape_cast %88 : vector<1x4x128xf32> to vector<4x128xf32>
    %cst_43 = arith.constant dense<0.000000e+00> : vector<8x128xf32>
    %90 = tpu.matmul %84, %89, %cst_43 {dimension_numbers = #tpu.dot_dimension_numbers<[1], [0], [0], [1], [0, 0, 1, 1], [], []>} : vector<8x4xf32>, vector<4x128xf32>, vector<8x128xf32> -> vector<8x128xf32>
    %91 = arith.addf %61, %90 : vector<8x128xf32>
    %c0_44 = arith.constant 0 : index
    %c0_45 = arith.constant 0 : index
    %c0_46 = arith.constant 0 : index
    %92 = vector.load %arg14[%c0_44, %c0_45, %c0_46] : memref<4x8x128xf32, #tpu.memory_space<vmem>>, vector<1x8x128xf32>
    %93 = vector.shape_cast %92 : vector<1x8x128xf32> to vector<8x128xf32>
    %cst_47 = arith.constant dense<0.000000e+00> : vector<8x128xf32>
    %94 = tpu.matmul %87, %93, %cst_47 {dimension_numbers = #tpu.dot_dimension_numbers<[1], [0], [0], [1], [0, 0, 1, 1], [], []>} : vector<8x8xf32>, vector<8x128xf32>, vector<8x128xf32> -> vector<8x128xf32>
    %95 = arith.addf %91, %94 : vector<8x128xf32>
    %96 = vector.extract_strided_slice %20 {offsets = [0, 4], sizes = [8, 1], strides = [1, 1]} : vector<8x16xf32> to vector<8x1xf32>
    %97 = vector.extract_strided_slice %20 {offsets = [0, 5], sizes = [8, 1], strides = [1, 1]} : vector<8x16xf32> to vector<8x1xf32>
    %98 = vector.extract_strided_slice %20 {offsets = [0, 6], sizes = [8, 1], strides = [1, 1]} : vector<8x16xf32> to vector<8x1xf32>
    %99 = vector.extract_strided_slice %20 {offsets = [0, 7], sizes = [8, 1], strides = [1, 1]} : vector<8x16xf32> to vector<8x1xf32>
    %100 = vector.broadcast %96 : vector<8x1xf32> to vector<8x4xf32>
    %101 = arith.mulf %100, %35 : vector<8x4xf32>
    %102 = vector.broadcast %96 : vector<8x1xf32> to vector<8x8xf32>
    %103 = arith.mulf %102, %54 : vector<8x8xf32>
    %104 = vector.broadcast %97 : vector<8x1xf32> to vector<8x4xf32>
    %105 = arith.mulf %104, %41 : vector<8x4xf32>
    %106 = arith.addf %101, %105 : vector<8x4xf32>
    %107 = vector.broadcast %97 : vector<8x1xf32> to vector<8x8xf32>
    %108 = arith.mulf %107, %55 : vector<8x8xf32>
    %109 = arith.addf %103, %108 : vector<8x8xf32>
    %110 = vector.broadcast %98 : vector<8x1xf32> to vector<8x4xf32>
    %111 = arith.mulf %110, %47 : vector<8x4xf32>
    %112 = arith.addf %106, %111 : vector<8x4xf32>
    %113 = vector.broadcast %98 : vector<8x1xf32> to vector<8x8xf32>
    %114 = arith.mulf %113, %56 : vector<8x8xf32>
    %115 = arith.addf %109, %114 : vector<8x8xf32>
    %116 = vector.broadcast %99 : vector<8x1xf32> to vector<8x4xf32>
    %117 = arith.mulf %116, %53 : vector<8x4xf32>
    %118 = arith.addf %112, %117 : vector<8x4xf32>
    %119 = vector.broadcast %99 : vector<8x1xf32> to vector<8x8xf32>
    %120 = arith.mulf %119, %57 : vector<8x8xf32>
    %121 = arith.addf %115, %120 : vector<8x8xf32>
    %c1 = arith.constant 1 : index
    %c0_48 = arith.constant 0 : index
    %c0_49 = arith.constant 0 : index
    %122 = vector.load %arg13[%c1, %c0_48, %c0_49] : memref<4x4x128xf32, #tpu.memory_space<vmem>>, vector<1x4x128xf32>
    %123 = vector.shape_cast %122 : vector<1x4x128xf32> to vector<4x128xf32>
    %cst_50 = arith.constant dense<0.000000e+00> : vector<8x128xf32>
    %124 = tpu.matmul %118, %123, %cst_50 {dimension_numbers = #tpu.dot_dimension_numbers<[1], [0], [0], [1], [0, 0, 1, 1], [], []>} : vector<8x4xf32>, vector<4x128xf32>, vector<8x128xf32> -> vector<8x128xf32>
    %125 = arith.addf %95, %124 : vector<8x128xf32>
    %c1_51 = arith.constant 1 : index
    %c0_52 = arith.constant 0 : index
    %c0_53 = arith.constant 0 : index
    %126 = vector.load %arg14[%c1_51, %c0_52, %c0_53] : memref<4x8x128xf32, #tpu.memory_space<vmem>>, vector<1x8x128xf32>
    %127 = vector.shape_cast %126 : vector<1x8x128xf32> to vector<8x128xf32>
    %cst_54 = arith.constant dense<0.000000e+00> : vector<8x128xf32>
    %128 = tpu.matmul %121, %127, %cst_54 {dimension_numbers = #tpu.dot_dimension_numbers<[1], [0], [0], [1], [0, 0, 1, 1], [], []>} : vector<8x8xf32>, vector<8x128xf32>, vector<8x128xf32> -> vector<8x128xf32>
    %129 = arith.addf %125, %128 : vector<8x128xf32>
    %130 = vector.extract_strided_slice %20 {offsets = [0, 8], sizes = [8, 1], strides = [1, 1]} : vector<8x16xf32> to vector<8x1xf32>
    %131 = vector.extract_strided_slice %20 {offsets = [0, 9], sizes = [8, 1], strides = [1, 1]} : vector<8x16xf32> to vector<8x1xf32>
    %132 = vector.extract_strided_slice %20 {offsets = [0, 10], sizes = [8, 1], strides = [1, 1]} : vector<8x16xf32> to vector<8x1xf32>
    %133 = vector.extract_strided_slice %20 {offsets = [0, 11], sizes = [8, 1], strides = [1, 1]} : vector<8x16xf32> to vector<8x1xf32>
    %134 = vector.broadcast %130 : vector<8x1xf32> to vector<8x4xf32>
    %135 = arith.mulf %134, %35 : vector<8x4xf32>
    %136 = vector.broadcast %130 : vector<8x1xf32> to vector<8x8xf32>
    %137 = arith.mulf %136, %54 : vector<8x8xf32>
    %138 = vector.broadcast %131 : vector<8x1xf32> to vector<8x4xf32>
    %139 = arith.mulf %138, %41 : vector<8x4xf32>
    %140 = arith.addf %135, %139 : vector<8x4xf32>
    %141 = vector.broadcast %131 : vector<8x1xf32> to vector<8x8xf32>
    %142 = arith.mulf %141, %55 : vector<8x8xf32>
    %143 = arith.addf %137, %142 : vector<8x8xf32>
    %144 = vector.broadcast %132 : vector<8x1xf32> to vector<8x4xf32>
    %145 = arith.mulf %144, %47 : vector<8x4xf32>
    %146 = arith.addf %140, %145 : vector<8x4xf32>
    %147 = vector.broadcast %132 : vector<8x1xf32> to vector<8x8xf32>
    %148 = arith.mulf %147, %56 : vector<8x8xf32>
    %149 = arith.addf %143, %148 : vector<8x8xf32>
    %150 = vector.broadcast %133 : vector<8x1xf32> to vector<8x4xf32>
    %151 = arith.mulf %150, %53 : vector<8x4xf32>
    %152 = arith.addf %146, %151 : vector<8x4xf32>
    %153 = vector.broadcast %133 : vector<8x1xf32> to vector<8x8xf32>
    %154 = arith.mulf %153, %57 : vector<8x8xf32>
    %155 = arith.addf %149, %154 : vector<8x8xf32>
    %c2 = arith.constant 2 : index
    %c0_55 = arith.constant 0 : index
    %c0_56 = arith.constant 0 : index
    %156 = vector.load %arg13[%c2, %c0_55, %c0_56] : memref<4x4x128xf32, #tpu.memory_space<vmem>>, vector<1x4x128xf32>
    %157 = vector.shape_cast %156 : vector<1x4x128xf32> to vector<4x128xf32>
    %cst_57 = arith.constant dense<0.000000e+00> : vector<8x128xf32>
    %158 = tpu.matmul %152, %157, %cst_57 {dimension_numbers = #tpu.dot_dimension_numbers<[1], [0], [0], [1], [0, 0, 1, 1], [], []>} : vector<8x4xf32>, vector<4x128xf32>, vector<8x128xf32> -> vector<8x128xf32>
    %159 = arith.addf %129, %158 : vector<8x128xf32>
    %c2_58 = arith.constant 2 : index
    %c0_59 = arith.constant 0 : index
    %c0_60 = arith.constant 0 : index
    %160 = vector.load %arg14[%c2_58, %c0_59, %c0_60] : memref<4x8x128xf32, #tpu.memory_space<vmem>>, vector<1x8x128xf32>
    %161 = vector.shape_cast %160 : vector<1x8x128xf32> to vector<8x128xf32>
    %cst_61 = arith.constant dense<0.000000e+00> : vector<8x128xf32>
    %162 = tpu.matmul %155, %161, %cst_61 {dimension_numbers = #tpu.dot_dimension_numbers<[1], [0], [0], [1], [0, 0, 1, 1], [], []>} : vector<8x8xf32>, vector<8x128xf32>, vector<8x128xf32> -> vector<8x128xf32>
    %163 = arith.addf %159, %162 : vector<8x128xf32>
    %164 = vector.extract_strided_slice %20 {offsets = [0, 12], sizes = [8, 1], strides = [1, 1]} : vector<8x16xf32> to vector<8x1xf32>
    %165 = vector.extract_strided_slice %20 {offsets = [0, 13], sizes = [8, 1], strides = [1, 1]} : vector<8x16xf32> to vector<8x1xf32>
    %166 = vector.extract_strided_slice %20 {offsets = [0, 14], sizes = [8, 1], strides = [1, 1]} : vector<8x16xf32> to vector<8x1xf32>
    %167 = vector.extract_strided_slice %20 {offsets = [0, 15], sizes = [8, 1], strides = [1, 1]} : vector<8x16xf32> to vector<8x1xf32>
    %168 = vector.broadcast %164 : vector<8x1xf32> to vector<8x4xf32>
    %169 = arith.mulf %168, %35 : vector<8x4xf32>
    %170 = vector.broadcast %164 : vector<8x1xf32> to vector<8x8xf32>
    %171 = arith.mulf %170, %54 : vector<8x8xf32>
    %172 = vector.broadcast %165 : vector<8x1xf32> to vector<8x4xf32>
    %173 = arith.mulf %172, %41 : vector<8x4xf32>
    %174 = arith.addf %169, %173 : vector<8x4xf32>
    %175 = vector.broadcast %165 : vector<8x1xf32> to vector<8x8xf32>
    %176 = arith.mulf %175, %55 : vector<8x8xf32>
    %177 = arith.addf %171, %176 : vector<8x8xf32>
    %178 = vector.broadcast %166 : vector<8x1xf32> to vector<8x4xf32>
    %179 = arith.mulf %178, %47 : vector<8x4xf32>
    %180 = arith.addf %174, %179 : vector<8x4xf32>
    %181 = vector.broadcast %166 : vector<8x1xf32> to vector<8x8xf32>
    %182 = arith.mulf %181, %56 : vector<8x8xf32>
    %183 = arith.addf %177, %182 : vector<8x8xf32>
    %184 = vector.broadcast %167 : vector<8x1xf32> to vector<8x4xf32>
    %185 = arith.mulf %184, %53 : vector<8x4xf32>
    %186 = arith.addf %180, %185 : vector<8x4xf32>
    %187 = vector.broadcast %167 : vector<8x1xf32> to vector<8x8xf32>
    %188 = arith.mulf %187, %57 : vector<8x8xf32>
    %189 = arith.addf %183, %188 : vector<8x8xf32>
    %c3 = arith.constant 3 : index
    %c0_62 = arith.constant 0 : index
    %c0_63 = arith.constant 0 : index
    %190 = vector.load %arg13[%c3, %c0_62, %c0_63] : memref<4x4x128xf32, #tpu.memory_space<vmem>>, vector<1x4x128xf32>
    %191 = vector.shape_cast %190 : vector<1x4x128xf32> to vector<4x128xf32>
    %cst_64 = arith.constant dense<0.000000e+00> : vector<8x128xf32>
    %192 = tpu.matmul %186, %191, %cst_64 {dimension_numbers = #tpu.dot_dimension_numbers<[1], [0], [0], [1], [0, 0, 1, 1], [], []>} : vector<8x4xf32>, vector<4x128xf32>, vector<8x128xf32> -> vector<8x128xf32>
    %193 = arith.addf %163, %192 : vector<8x128xf32>
    %c3_65 = arith.constant 3 : index
    %c0_66 = arith.constant 0 : index
    %c0_67 = arith.constant 0 : index
    %194 = vector.load %arg14[%c3_65, %c0_66, %c0_67] : memref<4x8x128xf32, #tpu.memory_space<vmem>>, vector<1x8x128xf32>
    %195 = vector.shape_cast %194 : vector<1x8x128xf32> to vector<8x128xf32>
    %cst_68 = arith.constant dense<0.000000e+00> : vector<8x128xf32>
    %196 = tpu.matmul %189, %195, %cst_68 {dimension_numbers = #tpu.dot_dimension_numbers<[1], [0], [0], [1], [0, 0, 1, 1], [], []>} : vector<8x8xf32>, vector<8x128xf32>, vector<8x128xf32> -> vector<8x128xf32>
    %197 = arith.addf %193, %196 : vector<8x128xf32>
    %cst_69 = arith.constant 0.000000e+00 : f32
    %198 = vector.broadcast %cst_69 : f32 to vector<8x128xf32>
    %199 = arith.maximumf %197, %198 : vector<8x128xf32>
    %c0_70 = arith.constant 0 : index
    %c0_71 = arith.constant 0 : index
    %200 = vector.load %arg16[%c0_70, %c0_71] : memref<1x128xf32, #tpu.memory_space<vmem>>, vector<1x128xf32>
    %201 = vector.broadcast %200 : vector<1x128xf32> to vector<8x128xf32>
    %202 = arith.mulf %199, %201 : vector<8x128xf32>
    %c0_72 = arith.constant 0 : index
    %c0_73 = arith.constant 0 : index
    %203 = vector.load %arg17[%c0_72, %c0_73] : memref<1x128xf32, #tpu.memory_space<vmem>>, vector<1x128xf32>
    %204 = vector.broadcast %203 : vector<1x128xf32> to vector<8x128xf32>
    %205 = arith.addf %202, %204 : vector<8x128xf32>
    %c0_74 = arith.constant 0 : index
    %c0_75 = arith.constant 0 : index
    %206 = vector.load %arg18[%c0_74, %c0_75] : memref<8x128xf32, #tpu.memory_space<vmem>>, vector<8x128xf32>
    tpu.vector_store %arg18[%c0_74, %c0_75], %205 {strides = array<i32>} : memref<8x128xf32, #tpu.memory_space<vmem>>, vector<8x128xf32>,
    return
  }
  func.func @transform_0(%arg0: i32) -> (i32, i32) {
    %c0_i32 = arith.constant 0 : i32
    %c0_i32_0 = arith.constant 0 : i32
    return %arg0, %c0_i32 : i32, i32
  }
  func.func @transform_1(%arg0: i32) -> (i32, i32) {
    %c0_i32 = arith.constant 0 : i32
    %c0_i32_0 = arith.constant 0 : i32
    return %arg0, %c0_i32 : i32, i32
  }
  func.func @transform_2(%arg0: i32) -> (i32, i32) {
    %c0_i32 = arith.constant 0 : i32
    %c0_i32_0 = arith.constant 0 : i32
    %c0_i32_1 = arith.constant 0 : i32
    return %c0_i32, %c0_i32_0 : i32, i32
  }
  func.func @transform_3(%arg0: i32) -> (i32, i32) {
    %c0_i32 = arith.constant 0 : i32
    %c0_i32_0 = arith.constant 0 : i32
    %c0_i32_1 = arith.constant 0 : i32
    return %c0_i32, %c0_i32_0 : i32, i32
  }
  func.func @transform_4(%arg0: i32) -> (i32, i32) {
    %c0_i32 = arith.constant 0 : i32
    %c0_i32_0 = arith.constant 0 : i32
    %c0_i32_1 = arith.constant 0 : i32
    return %c0_i32, %c0_i32_0 : i32, i32
  }
  func.func @transform_5(%arg0: i32) -> (i32, i32) {
    %c0_i32 = arith.constant 0 : i32
    %c0_i32_0 = arith.constant 0 : i32
    %c0_i32_1 = arith.constant 0 : i32
    return %c0_i32, %c0_i32_0 : i32, i32
  }
  func.func @transform_6(%arg0: i32) -> (i32, i32) {
    %c0_i32 = arith.constant 0 : i32
    %c0_i32_0 = arith.constant 0 : i32
    %c0_i32_1 = arith.constant 0 : i32
    return %c0_i32, %c0_i32_0 : i32, i32
  }
  func.func @transform_7(%arg0: i32) -> (i32, i32) {
    %c0_i32 = arith.constant 0 : i32
    %c0_i32_0 = arith.constant 0 : i32
    %c0_i32_1 = arith.constant 0 : i32
    return %c0_i32, %c0_i32_0 : i32, i32
  }
  func.func @transform_8(%arg0: i32) -> (i32, i32) {
    %c0_i32 = arith.constant 0 : i32
    %c0_i32_0 = arith.constant 0 : i32
    %c0_i32_1 = arith.constant 0 : i32
    return %c0_i32, %c0_i32_0 : i32, i32
  }
  func.func @transform_9(%arg0: i32) -> (i32, i32) {
    %c0_i32 = arith.constant 0 : i32
    %c0_i32_0 = arith.constant 0 : i32
    %c0_i32_1 = arith.constant 0 : i32
    return %c0_i32, %c0_i32_0 : i32, i32
  }
  func.func @transform_10(%arg0: i32) -> (i32, i32) {
    %c0_i32 = arith.constant 0 : i32
    %c0_i32_0 = arith.constant 0 : i32
    %c0_i32_1 = arith.constant 0 : i32
    return %c0_i32, %c0_i32_0 : i32, i32
  }
  func.func @transform_11(%arg0: i32) -> (i32, i32) {
    %c0_i32 = arith.constant 0 : i32
    %c0_i32_0 = arith.constant 0 : i32
    %c0_i32_1 = arith.constant 0 : i32
    return %c0_i32, %c0_i32_0 : i32, i32
  }
  func.func @transform_12(%arg0: i32) -> (i32, i32, i32) {
    %c0_i32 = arith.constant 0 : i32
    %c0_i32_0 = arith.constant 0 : i32
    %c0_i32_1 = arith.constant 0 : i32
    %c0_i32_2 = arith.constant 0 : i32
    return %c0_i32, %c0_i32_0, %c0_i32_1 : i32, i32, i32
  }
  func.func @transform_13(%arg0: i32) -> (i32, i32, i32) {
    %c0_i32 = arith.constant 0 : i32
    %c0_i32_0 = arith.constant 0 : i32
    %c0_i32_1 = arith.constant 0 : i32
    %c0_i32_2 = arith.constant 0 : i32
    return %c0_i32, %c0_i32_0, %c0_i32_1 : i32, i32, i32
  }
  func.func @transform_14(%arg0: i32) -> (i32, i32) {
    %c0_i32 = arith.constant 0 : i32
    %c0_i32_0 = arith.constant 0 : i32
    %c0_i32_1 = arith.constant 0 : i32
    return %c0_i32, %c0_i32_0 : i32, i32
  }
  func.func @transform_15(%arg0: i32) -> (i32, i32) {
    %c0_i32 = arith.constant 0 : i32
    %c0_i32_0 = arith.constant 0 : i32
    %c0_i32_1 = arith.constant 0 : i32
    return %c0_i32, %c0_i32_0 : i32, i32
  }
  func.func @transform_16(%arg0: i32) -> (i32, i32) {
    %c0_i32 = arith.constant 0 : i32
    %c0_i32_0 = arith.constant 0 : i32
    %c0_i32_1 = arith.constant 0 : i32
    return %c0_i32, %c0_i32_0 : i32, i32
  }
  func.func @transform_17(%arg0: i32) -> (i32, i32) {
    %c0_i32 = arith.constant 0 : i32
    %c0_i32_0 = arith.constant 0 : i32
    return %arg0, %c0_i32 : i32, i32
  }
}

</mosaic_0001>

<llo_original>
// kernel: tpu_custom_call.1
$region0: #{tpu_custom_call.1}
  #allocation0 [shape = 'u32[]', space=smem, size = 0x4, offset = 0x4, fixed_abs, tag = 'smem constant byte address 0x4 - core index']
  #allocation1 [shape = 'u32[144,128]{1,0:T(1,128)}', space=vmem, size = 0x12000, scoped, tag = 'internal scratch']
  %s0 = inlined_call_operand.hbm [shape: f32[16,12], index: 0, kind: input, shape index: {}]
  %s1 = inlined_call_operand.hbm [shape: f32[16,128], index: 1, kind: input, shape index: {}]
  %s2 = inlined_call_operand.hbm [shape: f32[12,16], index: 2, kind: input, shape index: {}]
  %s3 = inlined_call_operand.vmem [shape: f32[1,16], index: 3, kind: input, shape index: {}]
  %s4 = inlined_call_operand.hbm [shape: f32[4,4], index: 4, kind: input, shape index: {}]
  %s5 = inlined_call_operand.vmem [shape: f32[1,4], index: 5, kind: input, shape index: {}]
  %s6 = inlined_call_operand.hbm [shape: f32[12,16], index: 6, kind: input, shape index: {}]
  %s7 = inlined_call_operand.hbm [shape: f32[1,16], index: 7, kind: input, shape index: {}]
  %s8 = inlined_call_operand.hbm [shape: f32[16,16], index: 8, kind: input, shape index: {}]
  %s9 = inlined_call_operand.hbm [shape: f32[1,16], index: 9, kind: input, shape index: {}]
  %s10 = inlined_call_operand.vmem [shape: f32[16,16], index: 10, kind: input, shape index: {}]
  %s11 = inlined_call_operand.vmem [shape: f32[1,16], index: 11, kind: input, shape index: {}]
  %s12 = inlined_call_operand.hbm [shape: f32[4,4,128], index: 12, kind: input, shape index: {}]
  %s13 = inlined_call_operand.hbm [shape: f32[4,8,128], index: 13, kind: input, shape index: {}]
  %s14 = inlined_call_operand.vmem [shape: f32[1,128], index: 14, kind: input, shape index: {}]
  %s15 = inlined_call_operand.vmem [shape: f32[1,128], index: 15, kind: input, shape index: {}]
  %s16 = inlined_call_operand.vmem [shape: f32[1,128], index: 16, kind: input, shape index: {}]
  %s17 = inlined_call_operand.hbm [shape: f32[16,128], index: 17, kind: output, shape index: {}]
  %s18 = sld [smem:[#allocation0]]
  $region141: #{tpu_custom_call.1} parent=0
    _
  %s20 = ssub.s32 1, %s18
  %s21 = scalar_select 0, %s20, %s18
  $region1: #{tpu_custom_call.1} parent=0
    #allocation2 [shape = 'u8[8192]{0}', space=vmem, size = 0x2000, scoped, tag = 'input window, operand 0']
    #allocation3 [shape = 's32[2]{0}', space=sflag, size = 0x8, scoped, tag = 'scoped memory for tpu_custom_call.1']
    #allocation4 [shape = 's32[2]{0}', space=sflag, size = 0x8, scoped, tag = 'scoped memory for tpu_custom_call.1']
    #allocation5 [shape = 'u8[8192]{0}', space=vmem, size = 0x2000, scoped, tag = 'input window, operand 1']
    #allocation6 [shape = 's32[2]{0}', space=sflag, size = 0x8, scoped, tag = 'scoped memory for tpu_custom_call.1']
    #allocation7 [shape = 'u8[8192]{0}', space=vmem, size = 0x2000, scoped, tag = 'input window, operand 2, single buffered']
    #allocation8 [shape = 'u8[2048]{0}', space=vmem, size = 0x800, scoped, tag = 'input window, operand 4, single buffered']
    #allocation9 [shape = 's32[1]{0}', space=sflag, size = 0x4, scoped, tag = 'scoped memory for tpu_custom_call.1']
    #allocation10 [shape = 'u8[8192]{0}', space=vmem, size = 0x2000, scoped, tag = 'input window, operand 6, single buffered']
    #allocation11 [shape = 'u8[512]{0}', space=vmem, size = 0x400, scoped, tag = 'input window, operand 7, single buffered']
    #allocation12 [shape = 's32[1]{0}', space=sflag, size = 0x4, scoped, tag = 'scoped memory for tpu_custom_call.1']
    #allocation13 [shape = 'u8[8192]{0}', space=vmem, size = 0x2000, scoped, tag = 'input window, operand 8, single buffered']
    #allocation14 [shape = 'u8[512]{0}', space=vmem, size = 0x400, scoped, tag = 'input window, operand 9, single buffered']
    #allocation15 [shape = 's32[1]{0}', space=sflag, size = 0x4, scoped, tag = 'scoped memory for tpu_custom_call.1']
    #allocation16 [shape = 'u8[8192]{0}', space=vmem, size = 0x2000, scoped, tag = 'input window, operand 12, single buffered']
    #allocation17 [shape = 'u8[16384]{0}', space=vmem, size = 0x4000, scoped, tag = 'input window, operand 13, single buffered']
    #allocation18 [shape = 's32[1]{0}', space=sflag, size = 0x4, scoped, tag = 'scoped memory for tpu_custom_call.1']
    #allocation19 [shape = 'u8[8192]{0}', space=vmem, size = 0x2000, scoped, tag = 'output window, operand 0']
    %22 = vsyncpa [#allocation3], 0
    %s23 = scalar_lea.sflag [#allocation3], 1
    %24 = vsyncpa %s23, 0
    %25 = vsyncpa [#allocation6], 0
    %s26 = scalar_lea.sflag [#allocation6], 1
    %27 = vsyncpa %s26, 0
    %28 = vsyncpa [#allocation9], 0
    %29 = vsyncpa [#allocation12], 0
    %30 = vsyncpa [#allocation15], 0
    %31 = vsyncpa [#allocation18], 0
    %32 = vsyncpa [#allocation4], 0
    %s33 = scalar_lea.sflag [#allocation4], 1
    %34 = vsyncpa %s33, 0
    loop: start=0, step=1, limit=4
    $region2: #{tpu_custom_call.1} parent=1 // loop_pre_header
      _
    $region3: #{tpu_custom_call.1} parent=1 // loop_header
      %s36 = sphi 0, %s40
      %p37 = scmp.ge.s32.totalorder %s36, 4
      %s46 = sphi 0, %s48
      %s49 = sphi 0, %s46
      %s50 = sphi 0, %s49
      %s66 = sphi 0, %s50
      %s72 = sphi 0, %s74
      %s75 = sphi 0, %s72
      %s76 = sphi 0, %s75
      %s92 = sphi 0, %s76
      %s96 = sphi 0, %s96
      %s98 = sphi 0, %s96
      %s99 = sphi 0, %s98
      %s113 = sphi 0, %s99
      %s117 = sphi 0, %s117
      %s119 = sphi 0, %s117
      %s120 = sphi 0, %s119
      %s134 = sphi 0, %s120
      %s138 = sphi 0, %s138
      %s140 = sphi 0, %s138
      %s141 = sphi 0, %s140
      %s155 = sphi 0, %s141
      %s159 = sphi 0, %s159
      %s161 = sphi 0, %s159
      %s162 = sphi 0, %s161
      %s176 = sphi 0, %s162
      %s180 = sphi 0, %s180
      %s182 = sphi 0, %s180
      %s183 = sphi 0, %s182
      %s197 = sphi 0, %s183
      %s201 = sphi 0, %s201
      %s203 = sphi 0, %s201
      %s204 = sphi 0, %s203
      %s218 = sphi 0, %s204
      %s222 = sphi 0, %s222
      %s224 = sphi 0, %s222
      %s225 = sphi 0, %s224
      %s239 = sphi 0, %s225
      %s243 = sphi 0, %s243
      %s245 = sphi 0, %s243
      %s246 = sphi 0, %s245
      %s260 = sphi 0, %s246
      %s264 = sphi 0, %s264
      %s266 = sphi 0, %s264
      %s267 = sphi 0, %s266
      %s281 = sphi 0, %s267
      %s285 = sphi 0, %s285
      %s287 = sphi 0, %s285
      %s288 = sphi 0, %s287
      %s302 = sphi 0, %s288
      %s306 = sphi 0, %s306
      %s308 = sphi 0, %s306
      %s309 = sphi 0, %s308
      %s323 = sphi 0, %s309
      %s327 = sphi 0, %s327
      %s329 = sphi 0, %s327
      %s330 = sphi 0, %s329
      %s344 = sphi 0, %s330
      %s348 = sphi 0, %s348
      %s350 = sphi 0, %s348
      %s351 = sphi 0, %s350
      %s365 = sphi 0, %s351
      %s369 = sphi 0, %s369
      %s371 = sphi 0, %s369
      %s372 = sphi 0, %s371
      %s386 = sphi 0, %s372
      %s390 = sphi 0, %s390
      %s392 = sphi 0, %s390
      %s393 = sphi 0, %s392
      %s407 = sphi 0, %s393
      %s413 = sphi 0, %s415
      %s416 = sphi 0, %s413
      %s417 = sphi 0, %s416
      %s433 = sphi 0, %s417
    $region4: #{tpu_custom_call.1} parent=1 // loop_header_branch
      %39 = sbr.rel (%p37) target = $region8
    $region5: #{tpu_custom_call.1} parent=1 // loop_body
      %s41 = ssub.s32 %s36, 1
      %s42 = ssub.s32 %s36, 2
      %s43 = sadd.s32 %s36, 1
      %s44 = ssub.s32 %s36, %s43
      %p45 = scmp.eq.s32.totalorder %s44, 0
      %s47 = sadd.s32 %s46, 1
      %s48 = scalar_select %p45, %s46, %s47
      %p51 = pneg %p45
      %p52 = scmp.eq.s32.totalorder %s36, 1
      %p53 = por %p51, %p52
      %p54 = scmp.ne.s32.totalorder %s46, %s49
      %p55 = scmp.eq.s32.totalorder %s36, 0
      %p56 = por %p54, %p55
      %p57 = scmp.ne.s32.totalorder %s46, %s49
      %p58 = scmp.eq.s32.totalorder %s41, 1
      %p59 = por %p57, %p58
      %p60 = scmp.ne.s32.totalorder %s49, %s50
      %p61 = scmp.eq.s32.totalorder %s41, 0
      %p62 = por %p60, %p61
      %p63 = scmp.ne.s32.totalorder %s49, %s50
      %p64 = scmp.eq.s32.totalorder %s42, 1
      %p65 = por %p63, %p64
      %p67 = scmp.ne.s32.totalorder %s50, %s66
      %p68 = scmp.eq.s32.totalorder %s42, 0
      %p69 = por %p67, %p68
      %s70 = ssub.s32 %s36, %s43
      %p71 = scmp.eq.s32.totalorder %s70, 0
      %s73 = sadd.s32 %s72, 1
      %s74 = scalar_select %p71, %s72, %s73
      %p77 = pneg %p71
      %p78 = scmp.eq.s32.totalorder %s36, 1
      %p79 = por %p77, %p78
      %p80 = scmp.ne.s32.totalorder %s72, %s75
      %p81 = scmp.eq.s32.totalorder %s36, 0
      %p82 = por %p80, %p81
      %p83 = scmp.ne.s32.totalorder %s72, %s75
      %p84 = scmp.eq.s32.totalorder %s41, 1
      %p85 = por %p83, %p84
      %p86 = scmp.ne.s32.totalorder %s75, %s76
      %p87 = scmp.eq.s32.totalorder %s41, 0
      %p88 = por %p86, %p87
      %p89 = scmp.ne.s32.totalorder %s75, %s76
      %p90 = scmp.eq.s32.totalorder %s42, 1
      %p91 = por %p89, %p90
      %p93 = scmp.ne.s32.totalorder %s76, %s92
      %p94 = scmp.eq.s32.totalorder %s42, 0
      %p95 = por %p93, %p94
      %s97 = sadd.s32 %s96, 1
      %p100 = scmp.eq.s32.totalorder %s36, 1
      %p101 = scmp.ne.s32.totalorder %s96, %s98
      %p102 = scmp.eq.s32.totalorder %s36, 0
      %p103 = por %p101, %p102
      %p104 = scmp.ne.s32.totalorder %s96, %s98
      %p105 = scmp.eq.s32.totalorder %s41, 1
      %p106 = por %p104, %p105
      %p107 = scmp.ne.s32.totalorder %s98, %s99
      %p108 = scmp.eq.s32.totalorder %s41, 0
      %p109 = por %p107, %p108
      %p110 = scmp.ne.s32.totalorder %s98, %s99
      %p111 = scmp.eq.s32.totalorder %s42, 1
      %p112 = por %p110, %p111
      %p114 = scmp.ne.s32.totalorder %s99, %s113
      %p115 = scmp.eq.s32.totalorder %s42, 0
      %p116 = por %p114, %p115
      %s118 = sadd.s32 %s117, 1
      %p121 = scmp.eq.s32.totalorder %s36, 1
      %p122 = scmp.ne.s32.totalorder %s117, %s119
      %p123 = scmp.eq.s32.totalorder %s36, 0
      %p124 = por %p122, %p123
      %p125 = scmp.ne.s32.totalorder %s117, %s119
      %p126 = scmp.eq.s32.totalorder %s41, 1
      %p127 = por %p125, %p126
      %p128 = scmp.ne.s32.totalorder %s119, %s120
      %p129 = scmp.eq.s32.totalorder %s41, 0
      %p130 = por %p128, %p129
      %p131 = scmp.ne.s32.totalorder %s119, %s120
      %p132 = scmp.eq.s32.totalorder %s42, 1
      %p133 = por %p131, %p132
      %p135 = scmp.ne.s32.totalorder %s120, %s134
      %p136 = scmp.eq.s32.totalorder %s42, 0
      %p137 = por %p135, %p136
      %s139 = sadd.s32 %s138, 1
      %p142 = scmp.eq.s32.totalorder %s36, 1
      %p143 = scmp.ne.s32.totalorder %s138, %s140
      %p144 = scmp.eq.s32.totalorder %s36, 0
      %p145 = por %p143, %p144
      %p146 = scmp.ne.s32.totalorder %s138, %s140
      %p147 = scmp.eq.s32.totalorder %s41, 1
      %p148 = por %p146, %p147
      %p149 = scmp.ne.s32.totalorder %s140, %s141
      %p150 = scmp.eq.s32.totalorder %s41, 0
      %p151 = por %p149, %p150
      %p152 = scmp.ne.s32.totalorder %s140, %s141
      %p153 = scmp.eq.s32.totalorder %s42, 1
      %p154 = por %p152, %p153
      %p156 = scmp.ne.s32.totalorder %s141, %s155
      %p157 = scmp.eq.s32.totalorder %s42, 0
      %p158 = por %p156, %p157
      %s160 = sadd.s32 %s159, 1
      %p163 = scmp.eq.s32.totalorder %s36, 1
      %p164 = scmp.ne.s32.totalorder %s159, %s161
      %p165 = scmp.eq.s32.totalorder %s36, 0
      %p166 = por %p164, %p165
      %p167 = scmp.ne.s32.totalorder %s159, %s161
      %p168 = scmp.eq.s32.totalorder %s41, 1
      %p169 = por %p167, %p168
      %p170 = scmp.ne.s32.totalorder %s161, %s162
      %p171 = scmp.eq.s32.totalorder %s41, 0
      %p172 = por %p170, %p171
      %p173 = scmp.ne.s32.totalorder %s161, %s162
      %p174 = scmp.eq.s32.totalorder %s42, 1
      %p175 = por %p173, %p174
      %p177 = scmp.ne.s32.totalorder %s162, %s176
      %p178 = scmp.eq.s32.totalorder %s42, 0
      %p179 = por %p177, %p178
      %s181 = sadd.s32 %s180, 1
      %p184 = scmp.eq.s32.totalorder %s36, 1
      %p185 = scmp.ne.s32.totalorder %s180, %s182
      %p186 = scmp.eq.s32.totalorder %s36, 0
      %p187 = por %p185, %p186
      %p188 = scmp.ne.s32.totalorder %s180, %s182
      %p189 = scmp.eq.s32.totalorder %s41, 1
      %p190 = por %p188, %p189
      %p191 = scmp.ne.s32.totalorder %s182, %s183
      %p192 = scmp.eq.s32.totalorder %s41, 0
      %p193 = por %p191, %p192
      %p194 = scmp.ne.s32.totalorder %s182, %s183
      %p195 = scmp.eq.s32.totalorder %s42, 1
      %p196 = por %p194, %p195
      %p198 = scmp.ne.s32.totalorder %s183, %s197
      %p199 = scmp.eq.s32.totalorder %s42, 0
      %p200 = por %p198, %p199
      %s202 = sadd.s32 %s201, 1
      %p205 = scmp.eq.s32.totalorder %s36, 1
      %p206 = scmp.ne.s32.totalorder %s201, %s203
      %p207 = scmp.eq.s32.totalorder %s36, 0
      %p208 = por %p206, %p207
      %p209 = scmp.ne.s32.totalorder %s201, %s203
      %p210 = scmp.eq.s32.totalorder %s41, 1
      %p211 = por %p209, %p210
      %p212 = scmp.ne.s32.totalorder %s203, %s204
      %p213 = scmp.eq.s32.totalorder %s41, 0
      %p214 = por %p212, %p213
      %p215 = scmp.ne.s32.totalorder %s203, %s204
      %p216 = scmp.eq.s32.totalorder %s42, 1
      %p217 = por %p215, %p216
      %p219 = scmp.ne.s32.totalorder %s204, %s218
      %p220 = scmp.eq.s32.totalorder %s42, 0
      %p221 = por %p219, %p220
      %s223 = sadd.s32 %s222, 1
      %p226 = scmp.eq.s32.totalorder %s36, 1
      %p227 = scmp.ne.s32.totalorder %s222, %s224
      %p228 = scmp.eq.s32.totalorder %s36, 0
      %p229 = por %p227, %p228
      %p230 = scmp.ne.s32.totalorder %s222, %s224
      %p231 = scmp.eq.s32.totalorder %s41, 1
      %p232 = por %p230, %p231
      %p233 = scmp.ne.s32.totalorder %s224, %s225
      %p234 = scmp.eq.s32.totalorder %s41, 0
      %p235 = por %p233, %p234
      %p236 = scmp.ne.s32.totalorder %s224, %s225
      %p237 = scmp.eq.s32.totalorder %s42, 1
      %p238 = por %p236, %p237
      %p240 = scmp.ne.s32.totalorder %s225, %s239
      %p241 = scmp.eq.s32.totalorder %s42, 0
      %p242 = por %p240, %p241
      %s244 = sadd.s32 %s243, 1
      %p247 = scmp.eq.s32.totalorder %s36, 1
      %p248 = scmp.ne.s32.totalorder %s243, %s245
      %p249 = scmp.eq.s32.totalorder %s36, 0
      %p250 = por %p248, %p249
      %p251 = scmp.ne.s32.totalorder %s243, %s245
      %p252 = scmp.eq.s32.totalorder %s41, 1
      %p253 = por %p251, %p252
      %p254 = scmp.ne.s32.totalorder %s245, %s246
      %p255 = scmp.eq.s32.totalorder %s41, 0
      %p256 = por %p254, %p255
      %p257 = scmp.ne.s32.totalorder %s245, %s246
      %p258 = scmp.eq.s32.totalorder %s42, 1
      %p259 = por %p257, %p258
      %p261 = scmp.ne.s32.totalorder %s246, %s260
      %p262 = scmp.eq.s32.totalorder %s42, 0
      %p263 = por %p261, %p262
      %s265 = sadd.s32 %s264, 1
      %p268 = scmp.eq.s32.totalorder %s36, 1
      %p269 = scmp.ne.s32.totalorder %s264, %s266
      %p270 = scmp.eq.s32.totalorder %s36, 0
      %p271 = por %p269, %p270
      %p272 = scmp.ne.s32.totalorder %s264, %s266
      %p273 = scmp.eq.s32.totalorder %s41, 1
      %p274 = por %p272, %p273
      %p275 = scmp.ne.s32.totalorder %s266, %s267
      %p276 = scmp.eq.s32.totalorder %s41, 0
      %p277 = por %p275, %p276
      %p278 = scmp.ne.s32.totalorder %s266, %s267
      %p279 = scmp.eq.s32.totalorder %s42, 1
      %p280 = por %p278, %p279
      %p282 = scmp.ne.s32.totalorder %s267, %s281
      %p283 = scmp.eq.s32.totalorder %s42, 0
      %p284 = por %p282, %p283
      %s286 = sadd.s32 %s285, 1
      %p289 = scmp.eq.s32.totalorder %s36, 1
      %p290 = scmp.ne.s32.totalorder %s285, %s287
      %p291 = scmp.eq.s32.totalorder %s36, 0
      %p292 = por %p290, %p291
      %p293 = scmp.ne.s32.totalorder %s285, %s287
      %p294 = scmp.eq.s32.totalorder %s41, 1
      %p295 = por %p293, %p294
      %p296 = scmp.ne.s32.totalorder %s287, %s288
      %p297 = scmp.eq.s32.totalorder %s41, 0
      %p298 = por %p296, %p297
      %p299 = scmp.ne.s32.totalorder %s287, %s288
      %p300 = scmp.eq.s32.totalorder %s42, 1
      %p301 = por %p299, %p300
      %p303 = scmp.ne.s32.totalorder %s288, %s302
      %p304 = scmp.eq.s32.totalorder %s42, 0
      %p305 = por %p303, %p304
      %s307 = sadd.s32 %s306, 1
      %p310 = scmp.eq.s32.totalorder %s36, 1
      %p311 = scmp.ne.s32.totalorder %s306, %s308
      %p312 = scmp.eq.s32.totalorder %s36, 0
      %p313 = por %p311, %p312
      %p314 = scmp.ne.s32.totalorder %s306, %s308
      %p315 = scmp.eq.s32.totalorder %s41, 1
      %p316 = por %p314, %p315
      %p317 = scmp.ne.s32.totalorder %s308, %s309
      %p318 = scmp.eq.s32.totalorder %s41, 0
      %p319 = por %p317, %p318
      %p320 = scmp.ne.s32.totalorder %s308, %s309
      %p321 = scmp.eq.s32.totalorder %s42, 1
      %p322 = por %p320, %p321
      %p324 = scmp.ne.s32.totalorder %s309, %s323
      %p325 = scmp.eq.s32.totalorder %s42, 0
      %p326 = por %p324, %p325
      %s328 = sadd.s32 %s327, 1
      %p331 = scmp.eq.s32.totalorder %s36, 1
      %p332 = scmp.ne.s32.totalorder %s327, %s329
      %p333 = scmp.eq.s32.totalorder %s36, 0
      %p334 = por %p332, %p333
      %p335 = scmp.ne.s32.totalorder %s327, %s329
      %p336 = scmp.eq.s32.totalorder %s41, 1
      %p337 = por %p335, %p336
      %p338 = scmp.ne.s32.totalorder %s329, %s330
      %p339 = scmp.eq.s32.totalorder %s41, 0
      %p340 = por %p338, %p339
      %p341 = scmp.ne.s32.totalorder %s329, %s330
      %p342 = scmp.eq.s32.totalorder %s42, 1
      %p343 = por %p341, %p342
      %p345 = scmp.ne.s32.totalorder %s330, %s344
      %p346 = scmp.eq.s32.totalorder %s42, 0
      %p347 = por %p345, %p346
      %s349 = sadd.s32 %s348, 1
      %p352 = scmp.eq.s32.totalorder %s36, 1
      %p353 = scmp.ne.s32.totalorder %s348, %s350
      %p354 = scmp.eq.s32.totalorder %s36, 0
      %p355 = por %p353, %p354
      %p356 = scmp.ne.s32.totalorder %s348, %s350
      %p357 = scmp.eq.s32.totalorder %s41, 1
      %p358 = por %p356, %p357
      %p359 = scmp.ne.s32.totalorder %s350, %s351
      %p360 = scmp.eq.s32.totalorder %s41, 0
      %p361 = por %p359, %p360
      %p362 = scmp.ne.s32.totalorder %s350, %s351
      %p363 = scmp.eq.s32.totalorder %s42, 1
      %p364 = por %p362, %p363
      %p366 = scmp.ne.s32.totalorder %s351, %s365
      %p367 = scmp.eq.s32.totalorder %s42, 0
      %p368 = por %p366, %p367
      %s370 = sadd.s32 %s369, 1
      %p373 = scmp.eq.s32.totalorder %s36, 1
      %p374 = scmp.ne.s32.totalorder %s369, %s371
      %p375 = scmp.eq.s32.totalorder %s36, 0
      %p376 = por %p374, %p375
      %p377 = scmp.ne.s32.totalorder %s369, %s371
      %p378 = scmp.eq.s32.totalorder %s41, 1
      %p379 = por %p377, %p378
      %p380 = scmp.ne.s32.totalorder %s371, %s372
      %p381 = scmp.eq.s32.totalorder %s41, 0
      %p382 = por %p380, %p381
      %p383 = scmp.ne.s32.totalorder %s371, %s372
      %p384 = scmp.eq.s32.totalorder %s42, 1
      %p385 = por %p383, %p384
      %p387 = scmp.ne.s32.totalorder %s372, %s386
      %p388 = scmp.eq.s32.totalorder %s42, 0
      %p389 = por %p387, %p388
      %s391 = sadd.s32 %s390, 1
      %p394 = scmp.eq.s32.totalorder %s36, 1
      %p395 = scmp.ne.s32.totalorder %s390, %s392
      %p396 = scmp.eq.s32.totalorder %s36, 0
      %p397 = por %p395, %p396
      %p398 = scmp.ne.s32.totalorder %s390, %s392
      %p399 = scmp.eq.s32.totalorder %s41, 1
      %p400 = por %p398, %p399
      %p401 = scmp.ne.s32.totalorder %s392, %s393
      %p402 = scmp.eq.s32.totalorder %s41, 0
      %p403 = por %p401, %p402
      %p404 = scmp.ne.s32.totalorder %s392, %s393
      %p405 = scmp.eq.s32.totalorder %s42, 1
      %p406 = por %p404, %p405
      %p408 = scmp.ne.s32.totalorder %s393, %s407
      %p409 = scmp.eq.s32.totalorder %s42, 0
      %p410 = por %p408, %p409
      %s411 = ssub.s32 %s36, %s43
      %p412 = scmp.eq.s32.totalorder %s411, 0
      %s414 = sadd.s32 %s413, 1
      %s415 = scalar_select %p412, %s413, %s414
      %p418 = pneg %p412
      %p419 = scmp.eq.s32.totalorder %s36, 1
      %p420 = por %p418, %p419
      %p421 = scmp.ne.s32.totalorder %s413, %s416
      %p422 = scmp.eq.s32.totalorder %s36, 0
      %p423 = por %p421, %p422
      %p424 = scmp.ne.s32.totalorder %s413, %s416
      %p425 = scmp.eq.s32.totalorder %s41, 1
      %p426 = por %p424, %p425
      %p427 = scmp.ne.s32.totalorder %s416, %s417
      %p428 = scmp.eq.s32.totalorder %s41, 0
      %p429 = por %p427, %p428
      %p430 = scmp.ne.s32.totalorder %s416, %s417
      %p431 = scmp.eq.s32.totalorder %s42, 1
      %p432 = por %p430, %p431
      %p434 = scmp.ne.s32.totalorder %s417, %s433
      %p435 = scmp.eq.s32.totalorder %s42, 0
      %p436 = por %p434, %p435
      %p437 = scmp.le.s32.totalorder 1, %s36
      %p438 = scmp.lt.s32.totalorder %s36, 3
      %p439 = pnand %p437, %p438
      %p440 = pneg %p439
      // Predicated region
      $region9: #{tpu_custom_call.1} parent=5 // pred_check
        _
      $region10: #{tpu_custom_call.1} parent=5 // pred_check_branch
        %442 = sbr.rel (%p439) target = $region12
      $region11: #{tpu_custom_call.1} parent=5 // pred_region
        %s443 = ssub.s32 %s36, 1
        // Predicated region
        $region13: #{tpu_custom_call.1} parent=11 // pred_check
          %p444 = pneg %p109
        $region14: #{tpu_custom_call.1} parent=11 // pred_check_branch
          %446 = sbr.rel (%p444) target = $region16
        $region15: #{tpu_custom_call.1} parent=11 // pred_region
          %s448 = ssub.s32 256, 256
          %449 = vsyncadd [#allocation6], %s448
          %s450 = sshll.u32 [#allocation7], 4
          %s451 = int_to_ptr.vmem [resolvable:$true] %s450
          %456 = dma.hbm_to_vmem [thread:$0]  %s2, 256, %s451, [#allocation6], 128, 128, 8
        $region16: #{tpu_custom_call.1} parent=11 // pred_fallthru
          _
        // Predicated region
        $region17: #{tpu_custom_call.1} parent=11 // pred_check
          %p457 = pneg %p130
        $region18: #{tpu_custom_call.1} parent=11 // pred_check_branch
          %459 = sbr.rel (%p457) target = $region20
        $region19: #{tpu_custom_call.1} parent=11 // pred_region
          _
        $region20: #{tpu_custom_call.1} parent=11 // pred_fallthru
          _
        // Predicated region
        $region21: #{tpu_custom_call.1} parent=11 // pred_check
          %p460 = pneg %p151
        $region22: #{tpu_custom_call.1} parent=11 // pred_check_branch
          %462 = sbr.rel (%p460) target = $region24
        $region23: #{tpu_custom_call.1} parent=11 // pred_region
          %s464 = ssub.s32 64, 64
          %465 = vsyncadd [#allocation9], %s464
          %s467 = sshll.u32 [#allocation8], 4
          %s468 = int_to_ptr.vmem [resolvable:$true] %s467
          %470 = dma.hbm_to_vmem [thread:$0]  %s4, 64, %s468, [#allocation9]
        $region24: #{tpu_custom_call.1} parent=11 // pred_fallthru
          _
        // Predicated region
        $region25: #{tpu_custom_call.1} parent=11 // pred_check
          %p471 = pneg %p172
        $region26: #{tpu_custom_call.1} parent=11 // pred_check_branch
          %473 = sbr.rel (%p471) target = $region28
        $region27: #{tpu_custom_call.1} parent=11 // pred_region
          _
        $region28: #{tpu_custom_call.1} parent=11 // pred_fallthru
          _
        // Predicated region
        $region29: #{tpu_custom_call.1} parent=11 // pred_check
          %p474 = pneg %p193
        $region30: #{tpu_custom_call.1} parent=11 // pred_check_branch
          %476 = sbr.rel (%p474) target = $region32
        $region31: #{tpu_custom_call.1} parent=11 // pred_region
          %s478 = ssub.s32 256, 256
          %479 = vsyncadd [#allocation9], %s478
          %s480 = sshll.u32 [#allocation10], 4
          %s481 = int_to_ptr.vmem [resolvable:$true] %s480
          %486 = dma.hbm_to_vmem [thread:$0]  %s6, 256, %s481, [#allocation9], 128, 128, 8
        $region32: #{tpu_custom_call.1} parent=11 // pred_fallthru
          _
        // Predicated region
        $region33: #{tpu_custom_call.1} parent=11 // pred_check
          %p487 = pneg %p214
        $region34: #{tpu_custom_call.1} parent=11 // pred_check_branch
          %489 = sbr.rel (%p487) target = $region36
        $region35: #{tpu_custom_call.1} parent=11 // pred_region
          %s491 = ssub.s32 16, 16
          %492 = vsyncadd [#allocation12], %s491
          %s494 = sshll.u32 [#allocation11], 4
          %s495 = int_to_ptr.vmem [resolvable:$true] %s494
          %497 = dma.hbm_to_vmem [thread:$0]  %s7, 16, %s495, [#allocation12]
        $region36: #{tpu_custom_call.1} parent=11 // pred_fallthru
          _
        // Predicated region
        $region37: #{tpu_custom_call.1} parent=11 // pred_check
          %p498 = pneg %p235
        $region38: #{tpu_custom_call.1} parent=11 // pred_check_branch
          %500 = sbr.rel (%p498) target = $region40
        $region39: #{tpu_custom_call.1} parent=11 // pred_region
          %s502 = ssub.s32 256, 256
          %503 = vsyncadd [#allocation12], %s502
          %s504 = sshll.u32 [#allocation13], 4
          %s505 = int_to_ptr.vmem [resolvable:$true] %s504
          %510 = dma.hbm_to_vmem [thread:$0]  %s8, 256, %s505, [#allocation12], 128, 128, 8
        $region40: #{tpu_custom_call.1} parent=11 // pred_fallthru
          _
        // Predicated region
        $region41: #{tpu_custom_call.1} parent=11 // pred_check
          %p511 = pneg %p256
        $region42: #{tpu_custom_call.1} parent=11 // pred_check_branch
          %513 = sbr.rel (%p511) target = $region44
        $region43: #{tpu_custom_call.1} parent=11 // pred_region
          %s515 = ssub.s32 16, 16
          %516 = vsyncadd [#allocation15], %s515
          %s518 = sshll.u32 [#allocation14], 4
          %s519 = int_to_ptr.vmem [resolvable:$true] %s518
          %521 = dma.hbm_to_vmem [thread:$0]  %s9, 16, %s519, [#allocation15]
        $region44: #{tpu_custom_call.1} parent=11 // pred_fallthru
          _
        // Predicated region
        $region45: #{tpu_custom_call.1} parent=11 // pred_check
          %p522 = pneg %p277
        $region46: #{tpu_custom_call.1} parent=11 // pred_check_branch
          %524 = sbr.rel (%p522) target = $region48
        $region47: #{tpu_custom_call.1} parent=11 // pred_region
          _
        $region48: #{tpu_custom_call.1} parent=11 // pred_fallthru
          _
        // Predicated region
        $region49: #{tpu_custom_call.1} parent=11 // pred_check
          %p525 = pneg %p298
        $region50: #{tpu_custom_call.1} parent=11 // pred_check_branch
          %527 = sbr.rel (%p525) target = $region52
        $region51: #{tpu_custom_call.1} parent=11 // pred_region
          _
        $region52: #{tpu_custom_call.1} parent=11 // pred_fallthru
          _
        // Predicated region
        $region53: #{tpu_custom_call.1} parent=11 // pred_check
          %p528 = pneg %p319
        $region54: #{tpu_custom_call.1} parent=11 // pred_check_branch
          %530 = sbr.rel (%p528) target = $region56
        $region55: #{tpu_custom_call.1} parent=11 // pred_region
          %s532 = ssub.s32 256, 256
          %533 = vsyncadd [#allocation15], %s532
          %s534 = sshll.u32 [#allocation16], 4
          %s535 = int_to_ptr.vmem [resolvable:$true] %s534
          %540 = dma.hbm_to_vmem [thread:$0]  %s12, 256, %s535, [#allocation15], 64, 64, 4
        $region56: #{tpu_custom_call.1} parent=11 // pred_fallthru
          _
        // Predicated region
        $region57: #{tpu_custom_call.1} parent=11 // pred_check
          %p541 = pneg %p340
        $region58: #{tpu_custom_call.1} parent=11 // pred_check_branch
          %543 = sbr.rel (%p541) target = $region60
        $region59: #{tpu_custom_call.1} parent=11 // pred_region
          %s545 = ssub.s32 512, 512
          %546 = vsyncadd [#allocation18], %s545
          %s547 = sshll.u32 [#allocation17], 4
          %s548 = int_to_ptr.vmem [resolvable:$true] %s547
          %553 = dma.hbm_to_vmem [thread:$0]  %s13, 512, %s548, [#allocation18], 128, 128, 8
        $region60: #{tpu_custom_call.1} parent=11 // pred_fallthru
          _
        // Predicated region
        $region61: #{tpu_custom_call.1} parent=11 // pred_check
          %p554 = pneg %p361
        $region62: #{tpu_custom_call.1} parent=11 // pred_check_branch
          %556 = sbr.rel (%p554) target = $region64
        $region63: #{tpu_custom_call.1} parent=11 // pred_region
          _
        $region64: #{tpu_custom_call.1} parent=11 // pred_fallthru
          _
        // Predicated region
        $region65: #{tpu_custom_call.1} parent=11 // pred_check
          %p557 = pneg %p382
        $region66: #{tpu_custom_call.1} parent=11 // pred_check_branch
          %559 = sbr.rel (%p557) target = $region68
        $region67: #{tpu_custom_call.1} parent=11 // pred_region
          _
        $region68: #{tpu_custom_call.1} parent=11 // pred_fallthru
          _
        // Predicated region
        $region69: #{tpu_custom_call.1} parent=11 // pred_check
          %p560 = pneg %p403
        $region70: #{tpu_custom_call.1} parent=11 // pred_check_branch
          %562 = sbr.rel (%p560) target = $region72
        $region71: #{tpu_custom_call.1} parent=11 // pred_region
          _
        $region72: #{tpu_custom_call.1} parent=11 // pred_fallthru
          _
      $region12: #{tpu_custom_call.1} parent=5 // pred_fallthru
        _
      %p563 = scmp.lt.s32.totalorder %s36, 2
      // Predicated region
      $region73: #{tpu_custom_call.1} parent=5 // pred_check
        %p564 = pneg %p563
      $region74: #{tpu_custom_call.1} parent=5 // pred_check_branch
        %566 = sbr.rel (%p564) target = $region76
      $region75: #{tpu_custom_call.1} parent=5 // pred_region
        // Predicated region
        $region77: #{tpu_custom_call.1} parent=75 // pred_check
          %p567 = pneg %p56
        $region78: #{tpu_custom_call.1} parent=75 // pred_check_branch
          %569 = sbr.rel (%p567) target = $region80
        $region79: #{tpu_custom_call.1} parent=75 // pred_region
          %s570 = sand.u32 %s46, 1
          %s571 = scalar_lea.sflag [#allocation3], %s570
          %s572 = sand.u32 %s46, 1
          %s573 = smul.addr %s572, 8
          %s574 = scalar_lea.vmem [#allocation2], %s573
          %s576 = ssub.s32 128, 128
          %577 = vsyncadd %s571, %s576
          %s578 = smul.addr %s36, 128
          %s579 = scalar_lea.hbm %s0, %s578
          %s581 = sshll.u32 %s574, 4
          %s582 = int_to_ptr.vmem [resolvable:$true] %s581
          %584 = dma.hbm_to_vmem [thread:$0]  %s579, 128, %s582, %s571
        $region80: #{tpu_custom_call.1} parent=75 // pred_fallthru
          _
        // Predicated region
        $region81: #{tpu_custom_call.1} parent=75 // pred_check
          %p585 = pneg %p82
        $region82: #{tpu_custom_call.1} parent=75 // pred_check_branch
          %587 = sbr.rel (%p585) target = $region84
        $region83: #{tpu_custom_call.1} parent=75 // pred_region
          %s588 = sand.u32 %s36, 1
          %s589 = scalar_lea.sflag [#allocation6], %s588
          %s590 = sand.u32 %s72, 1
          %s591 = smul.addr %s590, 8
          %s592 = scalar_lea.vmem [#allocation5], %s591
          %s594 = ssub.s32 128, 128
          %595 = vsyncadd %s589, %s594
          %s596 = smul.addr %s36, 128
          %s597 = scalar_lea.hbm %s1, %s596
          %s599 = sshll.u32 %s592, 4
          %s600 = int_to_ptr.vmem [resolvable:$true] %s599
          %602 = dma.hbm_to_vmem [thread:$0]  %s597, 128, %s600, %s589
        $region84: #{tpu_custom_call.1} parent=75 // pred_fallthru
          _
      $region76: #{tpu_custom_call.1} parent=5 // pred_fallthru
        _
      %p603 = scmp.le.s32.totalorder 1, %s36
      %p604 = scmp.lt.s32.totalorder %s36, 3
      %p605 = pnand %p603, %p604
      %p606 = pneg %p605
      // Predicated region
      $region85: #{tpu_custom_call.1} parent=5 // pred_check
        _
      $region86: #{tpu_custom_call.1} parent=5 // pred_check_branch
        %608 = sbr.rel (%p605) target = $region88
      $region87: #{tpu_custom_call.1} parent=5 // pred_region
        %s609 = ssub.s32 %s36, 1
        %s610 = sand.u32 %s49, 1
        %s611 = scalar_lea.sflag [#allocation3], %s610
        %s612 = sand.u32 %s49, 1
        %s613 = smul.addr %s612, 8
        %s614 = scalar_lea.vmem [#allocation2], %s613
        // Predicated region
        $region89: #{tpu_custom_call.1} parent=87 // pred_check
          %p615 = pneg %p62
        $region90: #{tpu_custom_call.1} parent=87 // pred_check_branch
          %617 = sbr.rel (%p615) target = $region92
        $region91: #{tpu_custom_call.1} parent=87 // pred_region
          %618 = dma.done %s611, 128
        $region92: #{tpu_custom_call.1} parent=87 // pred_fallthru
          _
        %s619 = sand.u32 %s41, 1
        %s620 = scalar_lea.sflag [#allocation6], %s619
        %s621 = sand.u32 %s75, 1
        %s622 = smul.addr %s621, 8
        %s623 = scalar_lea.vmem [#allocation5], %s622
        // Predicated region
        $region93: #{tpu_custom_call.1} parent=87 // pred_check
          %p624 = pneg %p88
        $region94: #{tpu_custom_call.1} parent=87 // pred_check_branch
          %626 = sbr.rel (%p624) target = $region96
        $region95: #{tpu_custom_call.1} parent=87 // pred_region
          %627 = dma.done %s620, 128
        $region96: #{tpu_custom_call.1} parent=87 // pred_fallthru
          _
        // Predicated region
        $region97: #{tpu_custom_call.1} parent=87 // pred_check
          %p628 = pneg %p109
        $region98: #{tpu_custom_call.1} parent=87 // pred_check_branch
          %630 = sbr.rel (%p628) target = $region100
        $region99: #{tpu_custom_call.1} parent=87 // pred_region
          %631 = dma.done [#allocation6], 256
        $region100: #{tpu_custom_call.1} parent=87 // pred_fallthru
          _
        // Predicated region
        $region101: #{tpu_custom_call.1} parent=87 // pred_check
          %p632 = pneg %p151
        $region102: #{tpu_custom_call.1} parent=87 // pred_check_branch
          %634 = sbr.rel (%p632) target = $region104
        $region103: #{tpu_custom_call.1} parent=87 // pred_region
          %635 = dma.done [#allocation9], 64
        $region104: #{tpu_custom_call.1} parent=87 // pred_fallthru
          _
        // Predicated region
        $region105: #{tpu_custom_call.1} parent=87 // pred_check
          %p636 = pneg %p193
        $region106: #{tpu_custom_call.1} parent=87 // pred_check_branch
          %638 = sbr.rel (%p636) target = $region108
        $region107: #{tpu_custom_call.1} parent=87 // pred_region
          %639 = dma.done [#allocation9], 256
        $region108: #{tpu_custom_call.1} parent=87 // pred_fallthru
          _
        // Predicated region
        $region109: #{tpu_custom_call.1} parent=87 // pred_check
          %p640 = pneg %p214
        $region110: #{tpu_custom_call.1} parent=87 // pred_check_branch
          %642 = sbr.rel (%p640) target = $region112
        $region111: #{tpu_custom_call.1} parent=87 // pred_region
          %643 = dma.done [#allocation12], 16
        $region112: #{tpu_custom_call.1} parent=87 // pred_fallthru
          _
        // Predicated region
        $region113: #{tpu_custom_call.1} parent=87 // pred_check
          %p644 = pneg %p235
        $region114: #{tpu_custom_call.1} parent=87 // pred_check_branch
          %646 = sbr.rel (%p644) target = $region116
        $region115: #{tpu_custom_call.1} parent=87 // pred_region
          %647 = dma.done [#allocation12], 256
        $region116: #{tpu_custom_call.1} parent=87 // pred_fallthru
          _
        // Predicated region
        $region117: #{tpu_custom_call.1} parent=87 // pred_check
          %p648 = pneg %p256
        $region118: #{tpu_custom_call.1} parent=87 // pred_check_branch
          %650 = sbr.rel (%p648) target = $region120
        $region119: #{tpu_custom_call.1} parent=87 // pred_region
          %651 = dma.done [#allocation15], 16
        $region120: #{tpu_custom_call.1} parent=87 // pred_fallthru
          _
        // Predicated region
        $region121: #{tpu_custom_call.1} parent=87 // pred_check
          %p652 = pneg %p319
        $region122: #{tpu_custom_call.1} parent=87 // pred_check_branch
          %654 = sbr.rel (%p652) target = $region124
        $region123: #{tpu_custom_call.1} parent=87 // pred_region
          %655 = dma.done [#allocation15], 256
        $region124: #{tpu_custom_call.1} parent=87 // pred_fallthru
          _
        // Predicated region
        $region125: #{tpu_custom_call.1} parent=87 // pred_check
          %p656 = pneg %p340
        $region126: #{tpu_custom_call.1} parent=87 // pred_check_branch
          %658 = sbr.rel (%p656) target = $region128
        $region127: #{tpu_custom_call.1} parent=87 // pred_region
          %659 = dma.done [#allocation18], 512
        $region128: #{tpu_custom_call.1} parent=87 // pred_fallthru
          _
        %s660 = sand.u32 %s49, 1
        %s661 = scalar_lea.sflag [#allocation3], %s660
        %s662 = sand.u32 %s49, 1
        %s663 = smul.addr %s662, 8
        %s664 = scalar_lea.vmem [#allocation2], %s663
        %p665 = pneg %p62
        %p666 = pneg %p59
        %s667 = sand.u32 %s41, 1
        %s668 = scalar_lea.sflag [#allocation6], %s667
        %s669 = sand.u32 %s75, 1
        %s670 = smul.addr %s669, 8
        %s671 = scalar_lea.vmem [#allocation5], %s670
        %p672 = pneg %p88
        %p673 = pneg %p85
        %p674 = pneg %p109
        %p675 = pneg %p106
        %p676 = pneg %p130
        %p677 = pneg %p127
        %p678 = pneg %p151
        %p679 = pneg %p148
        %p680 = pneg %p172
        %p681 = pneg %p169
        %p682 = pneg %p193
        %p683 = pneg %p190
        %p684 = pneg %p214
        %p685 = pneg %p211
        %p686 = pneg %p235
        %p687 = pneg %p232
        %p688 = pneg %p256
        %p689 = pneg %p253
        %p690 = pneg %p277
        %p691 = pneg %p274
        %p692 = pneg %p298
        %p693 = pneg %p295
        %p694 = pneg %p319
        %p695 = pneg %p316
        %p696 = pneg %p340
        %p697 = pneg %p337
        %p698 = pneg %p361
        %p699 = pneg %p358
        %p700 = pneg %p382
        %p701 = pneg %p379
        %p702 = pneg %p403
        %p703 = pneg %p400
        %p704 = pneg %p429
        %p705 = pneg %p426
        %s706 = sand.u32 %s416, 1
        %s707 = scalar_lea.sflag [#allocation4], %s706
        %s708 = sand.u32 %s416, 1
        %s709 = smul.addr %s708, 8
        %s710 = scalar_lea.vmem [#allocation19], %s709
        %v711 = vld [vmem:[%s614] sm:$0xff]
        %v712 = vld [vmem:[%s623] sm:$0xff]
        %v713 = vld [vmem:[#allocation10] sm:$0xff]
        %v714 = vld [vmem:[#allocation10 + $0x8] sm:$0xf]
        %v715 = vld [vmem:[#allocation11] sm:$0x1]
        %v717 = vlaneseq
        %v718 = vshrl.u32 %v717, 7
        %v719 = vsub.s32 0, %v718
        %v720 = vrot.slane %v715, %v719
        %vm722 = vcmask 97280
        %v724 = vsel %vm722, %v711, 0
        %vm726 = vcmask 1043456
        %v728 = vsel %vm726, %v714, 0
        %730 = vmatprep.subr.mxu0 0.0
        %731 = vmatpush1.msra.mxu0 0.0
        %732 = vmatprep.subr.mxu0 0.0
        %733 = vmatpush1.msra.mxu0 0.0
        %734 = vmatprep.subr.mxu0 0.0
        %735 = vmatpush1.msra.mxu0 0.0
        %736 = vmatprep.subr.mxu0 0.0
        %737 = vmatpush1.msra.mxu0 0.0
        %738 = vmatprep.subr.mxu0 0.0
        %739 = vmatpush1.msra.mxu0 0.0
        %740 = vmatprep.subr.mxu0 0.0
        %741 = vmatpush1.msra.mxu0 0.0
        %742 = vmatprep.subr.mxu0 0.0
        %743 = vmatpush1.msra.mxu0 0.0
        %744 = vmatprep.subr.mxu0 0.0
        %745 = vmatpush1.msra.mxu0 0.0
        %746 = vmatprep.subr.mxu0 0.0
        %747 = vmatpush1.msra.mxu0 0.0
        %748 = vmatprep.subr.mxu0 0.0
        %749 = vmatpush1.msra.mxu0 0.0
        %750 = vmatprep.subr.mxu0 0.0
        %751 = vmatpush1.msra.mxu0 0.0
        %752 = vmatprep.subr.mxu0 0.0
        %753 = vmatpush1.msra.mxu0 0.0
        %754 = vmatprep.subr.mxu0 0.0
        %755 = vmatpush1.msra.mxu0 0.0
        %756 = vmatprep.subr.mxu0 0.0
        %757 = vmatpush1.msra.mxu0 0.0
        %758 = vmatprep.subr.mxu0 0.0
        %759 = vmatpush1.msra.mxu0 %v728
        %760 = vmatprep.subr.mxu0 0.0
        %761 = vmatpush1.msra.mxu0 %v713
        %762 = vmatprep.subr.mxu0 0.0
        %763 = vmatpush2.msra.mxu0 0.0
        %764 = vmatprep.subr.mxu0 0.0
        %765 = vmatpush2.msra.mxu0 0.0
        %766 = vmatprep.subr.mxu0 0.0
        %767 = vmatpush2.msra.mxu0 0.0
        %768 = vmatprep.subr.mxu0 0.0
        %769 = vmatpush2.msra.mxu0 0.0
        %770 = vmatprep.subr.mxu0 0.0
        %771 = vmatpush2.msra.mxu0 0.0
        %772 = vmatprep.subr.mxu0 0.0
        %773 = vmatpush2.msra.mxu0 0.0
        %774 = vmatprep.subr.mxu0 0.0
        %775 = vmatpush2.msra.mxu0 0.0
        %776 = vmatprep.subr.mxu0 0.0
        %777 = vmatpush2.msra.mxu0 0.0
        %778 = vmatprep.subr.mxu0 0.0
        %779 = vmatpush2.msra.mxu0 0.0
        %780 = vmatprep.subr.mxu0 0.0
        %781 = vmatpush2.msra.mxu0 0.0
        %782 = vmatprep.subr.mxu0 0.0
        %783 = vmatpush2.msra.mxu0 0.0
        %784 = vmatprep.subr.mxu0 0.0
        %785 = vmatpush2.msra.mxu0 0.0
        %786 = vmatprep.subr.mxu0 0.0
        %787 = vmatpush2.msra.mxu0 0.0
        %788 = vmatprep.subr.mxu0 0.0
        %789 = vmatpush2.msra.mxu0 0.0
        %790 = vmatprep.subr.mxu0 0.0
        %791 = vmatpush2.msra.mxu0 0.0
        %792 = vmatprep.subr.mxu0 0.0
        %793 = vmatpush2.msra.mxu0 0.0
        %794 = vmatprep.mubr.f32.mxu0 0.0
        %795 = vmatmul.mubr.f32.gmra.mxu0 %v724
        %v796 = vpop.f32.mrf.mxu0
        %v797 = vadd.f32 %v720, %v796
        %v798 = vpop.f32.mrf.mxu0
        %799 = vdwg.mxu0
        %v800 = vmax.f32 %v797, 0.0
        %v801 = vld [vmem:[#allocation13] sm:$0xff]
        %v802 = vld [vmem:[#allocation13 + $0x8] sm:$0xff]
        %v803 = vld [vmem:[#allocation14] sm:$0x1]
        %v805 = vlaneseq
        %v806 = vshrl.u32 %v805, 7
        %v807 = vsub.s32 0, %v806
        %v808 = vrot.slane %v803, %v807
        %vm810 = vcmask 130048
        %v812 = vsel %vm810, %v800, 0
        %814 = vmatprep.subr.mxu0 0.0
        %815 = vmatpush1.msra.mxu0 0.0
        %816 = vmatprep.subr.mxu0 0.0
        %817 = vmatpush1.msra.mxu0 0.0
        %818 = vmatprep.subr.mxu0 0.0
        %819 = vmatpush1.msra.mxu0 0.0
        %820 = vmatprep.subr.mxu0 0.0
        %821 = vmatpush1.msra.mxu0 0.0
        %822 = vmatprep.subr.mxu0 0.0
        %823 = vmatpush1.msra.mxu0 0.0
        %824 = vmatprep.subr.mxu0 0.0
        %825 = vmatpush1.msra.mxu0 0.0
        %826 = vmatprep.subr.mxu0 0.0
        %827 = vmatpush1.msra.mxu0 0.0
        %828 = vmatprep.subr.mxu0 0.0
        %829 = vmatpush1.msra.mxu0 0.0
        %830 = vmatprep.subr.mxu0 0.0
        %831 = vmatpush1.msra.mxu0 0.0
        %832 = vmatprep.subr.mxu0 0.0
        %833 = vmatpush1.msra.mxu0 0.0
        %834 = vmatprep.subr.mxu0 0.0
        %835 = vmatpush1.msra.mxu0 0.0
        %836 = vmatprep.subr.mxu0 0.0
        %837 = vmatpush1.msra.mxu0 0.0
        %838 = vmatprep.subr.mxu0 0.0
        %839 = vmatpush1.msra.mxu0 0.0
        %840 = vmatprep.subr.mxu0 0.0
        %841 = vmatpush1.msra.mxu0 0.0
        %842 = vmatprep.subr.mxu0 0.0
        %843 = vmatpush1.msra.mxu0 %v802
        %844 = vmatprep.subr.mxu0 0.0
        %845 = vmatpush1.msra.mxu0 %v801
        %846 = vmatprep.subr.mxu0 0.0
        %847 = vmatpush2.msra.mxu0 0.0
        %848 = vmatprep.subr.mxu0 0.0
        %849 = vmatpush2.msra.mxu0 0.0
        %850 = vmatprep.subr.mxu0 0.0
        %851 = vmatpush2.msra.mxu0 0.0
        %852 = vmatprep.subr.mxu0 0.0
        %853 = vmatpush2.msra.mxu0 0.0
        %854 = vmatprep.subr.mxu0 0.0
        %855 = vmatpush2.msra.mxu0 0.0
        %856 = vmatprep.subr.mxu0 0.0
        %857 = vmatpush2.msra.mxu0 0.0
        %858 = vmatprep.subr.mxu0 0.0
        %859 = vmatpush2.msra.mxu0 0.0
        %860 = vmatprep.subr.mxu0 0.0
        %861 = vmatpush2.msra.mxu0 0.0
        %862 = vmatprep.subr.mxu0 0.0
        %863 = vmatpush2.msra.mxu0 0.0
        %864 = vmatprep.subr.mxu0 0.0
        %865 = vmatpush2.msra.mxu0 0.0
        %866 = vmatprep.subr.mxu0 0.0
        %867 = vmatpush2.msra.mxu0 0.0
        %868 = vmatprep.subr.mxu0 0.0
        %869 = vmatpush2.msra.mxu0 0.0
        %870 = vmatprep.subr.mxu0 0.0
        %871 = vmatpush2.msra.mxu0 0.0
        %872 = vmatprep.subr.mxu0 0.0
        %873 = vmatpush2.msra.mxu0 0.0
        %874 = vmatprep.subr.mxu0 0.0
        %875 = vmatpush2.msra.mxu0 0.0
        %876 = vmatprep.subr.mxu0 0.0
        %877 = vmatpush2.msra.mxu0 0.0
        %878 = vmatprep.mubr.f32.mxu0 0.0
        %879 = vmatmul.mubr.f32.gmra.mxu0 %v812
        %v880 = vpop.f32.mrf.mxu0
        %v881 = vadd.f32 %v808, %v880
        %v882 = vpop.f32.mrf.mxu0
        %883 = vdwg.mxu0
        %v884 = vmax.f32 %v881, 0.0
        %v885 = vld [vmem:[%s10] sm:$0xff]
        %v886 = vld [vmem:[%s10 + $0x8] sm:$0xff]
        %v887 = vld [vmem:[%s11] sm:$0x1]
        %v889 = vlaneseq
        %v890 = vshrl.u32 %v889, 7
        %v891 = vsub.s32 0, %v890
        %v892 = vrot.slane %v887, %v891
        %v895 = vsel %vm810, %v884, 0
        %897 = vmatprep.subr.mxu0 0.0
        %898 = vmatpush1.msra.mxu0 0.0
        %899 = vmatprep.subr.mxu0 0.0
        %900 = vmatpush1.msra.mxu0 0.0
        %901 = vmatprep.subr.mxu0 0.0
        %902 = vmatpush1.msra.mxu0 0.0
        %903 = vmatprep.subr.mxu0 0.0
        %904 = vmatpush1.msra.mxu0 0.0
        %905 = vmatprep.subr.mxu0 0.0
        %906 = vmatpush1.msra.mxu0 0.0
        %907 = vmatprep.subr.mxu0 0.0
        %908 = vmatpush1.msra.mxu0 0.0
        %909 = vmatprep.subr.mxu0 0.0
        %910 = vmatpush1.msra.mxu0 0.0
        %911 = vmatprep.subr.mxu0 0.0
        %912 = vmatpush1.msra.mxu0 0.0
        %913 = vmatprep.subr.mxu0 0.0
        %914 = vmatpush1.msra.mxu0 0.0
        %915 = vmatprep.subr.mxu0 0.0
        %916 = vmatpush1.msra.mxu0 0.0
        %917 = vmatprep.subr.mxu0 0.0
        %918 = vmatpush1.msra.mxu0 0.0
        %919 = vmatprep.subr.mxu0 0.0
        %920 = vmatpush1.msra.mxu0 0.0
        %921 = vmatprep.subr.mxu0 0.0
        %922 = vmatpush1.msra.mxu0 0.0
        %923 = vmatprep.subr.mxu0 0.0
        %924 = vmatpush1.msra.mxu0 0.0
        %925 = vmatprep.subr.mxu0 0.0
        %926 = vmatpush1.msra.mxu0 %v886
        %927 = vmatprep.subr.mxu0 0.0
        %928 = vmatpush1.msra.mxu0 %v885
        %929 = vmatprep.subr.mxu0 0.0
        %930 = vmatpush2.msra.mxu0 0.0
        %931 = vmatprep.subr.mxu0 0.0
        %932 = vmatpush2.msra.mxu0 0.0
        %933 = vmatprep.subr.mxu0 0.0
        %934 = vmatpush2.msra.mxu0 0.0
        %935 = vmatprep.subr.mxu0 0.0
        %936 = vmatpush2.msra.mxu0 0.0
        %937 = vmatprep.subr.mxu0 0.0
        %938 = vmatpush2.msra.mxu0 0.0
        %939 = vmatprep.subr.mxu0 0.0
        %940 = vmatpush2.msra.mxu0 0.0
        %941 = vmatprep.subr.mxu0 0.0
        %942 = vmatpush2.msra.mxu0 0.0
        %943 = vmatprep.subr.mxu0 0.0
        %944 = vmatpush2.msra.mxu0 0.0
        %945 = vmatprep.subr.mxu0 0.0
        %946 = vmatpush2.msra.mxu0 0.0
        %947 = vmatprep.subr.mxu0 0.0
        %948 = vmatpush2.msra.mxu0 0.0
        %949 = vmatprep.subr.mxu0 0.0
        %950 = vmatpush2.msra.mxu0 0.0
        %951 = vmatprep.subr.mxu0 0.0
        %952 = vmatpush2.msra.mxu0 0.0
        %953 = vmatprep.subr.mxu0 0.0
        %954 = vmatpush2.msra.mxu0 0.0
        %955 = vmatprep.subr.mxu0 0.0
        %956 = vmatpush2.msra.mxu0 0.0
        %957 = vmatprep.subr.mxu0 0.0
        %958 = vmatpush2.msra.mxu0 0.0
        %959 = vmatprep.subr.mxu0 0.0
        %960 = vmatpush2.msra.mxu0 0.0
        %961 = vmatprep.mubr.f32.mxu0 0.0
        %962 = vmatmul.mubr.f32.gmra.mxu0 %v895
        %v963 = vpop.f32.mrf.mxu0
        %v964 = vadd.f32 %v892, %v963
        %v965 = vpop.f32.mrf.mxu0
        %966 = vdwg.mxu0
        %v967 = vld [vmem:[#allocation7] sm:$0xff]
        %v968 = vld [vmem:[#allocation7 + $0x8] sm:$0xf]
        %v969 = vld [vmem:[%s3] sm:$0x1]
        %v971 = vlaneseq
        %v972 = vshrl.u32 %v971, 7
        %v973 = vsub.s32 0, %v972
        %v974 = vrot.slane %v969, %v973
        %v977 = vsel %vm726, %v968, 0
        %979 = vmatprep.subr.mxu0 0.0
        %980 = vmatpush1.msra.mxu0 0.0
        %981 = vmatprep.subr.mxu0 0.0
        %982 = vmatpush1.msra.mxu0 0.0
        %983 = vmatprep.subr.mxu0 0.0
        %984 = vmatpush1.msra.mxu0 0.0
        %985 = vmatprep.subr.mxu0 0.0
        %986 = vmatpush1.msra.mxu0 0.0
        %987 = vmatprep.subr.mxu0 0.0
        %988 = vmatpush1.msra.mxu0 0.0
        %989 = vmatprep.subr.mxu0 0.0
        %990 = vmatpush1.msra.mxu0 0.0
        %991 = vmatprep.subr.mxu0 0.0
        %992 = vmatpush1.msra.mxu0 0.0
        %993 = vmatprep.subr.mxu0 0.0
        %994 = vmatpush1.msra.mxu0 0.0
        %995 = vmatprep.subr.mxu0 0.0
        %996 = vmatpush1.msra.mxu0 0.0
        %997 = vmatprep.subr.mxu0 0.0
        %998 = vmatpush1.msra.mxu0 0.0
        %999 = vmatprep.subr.mxu0 0.0
        %1000 = vmatpush1.msra.mxu0 0.0
        %1001 = vmatprep.subr.mxu0 0.0
        %1002 = vmatpush1.msra.mxu0 0.0
        %1003 = vmatprep.subr.mxu0 0.0
        %1004 = vmatpush1.msra.mxu0 0.0
        %1005 = vmatprep.subr.mxu0 0.0
        %1006 = vmatpush1.msra.mxu0 0.0
        %1007 = vmatprep.subr.mxu0 0.0
        %1008 = vmatpush1.msra.mxu0 %v977
        %1009 = vmatprep.subr.mxu0 0.0
        %1010 = vmatpush1.msra.mxu0 %v967
        %1011 = vmatprep.subr.mxu0 0.0
        %1012 = vmatpush2.msra.mxu0 0.0
        %1013 = vmatprep.subr.mxu0 0.0
        %1014 = vmatpush2.msra.mxu0 0.0
        %1015 = vmatprep.subr.mxu0 0.0
        %1016 = vmatpush2.msra.mxu0 0.0
        %1017 = vmatprep.subr.mxu0 0.0
        %1018 = vmatpush2.msra.mxu0 0.0
        %1019 = vmatprep.subr.mxu0 0.0
        %1020 = vmatpush2.msra.mxu0 0.0
        %1021 = vmatprep.subr.mxu0 0.0
        %1022 = vmatpush2.msra.mxu0 0.0
        %1023 = vmatprep.subr.mxu0 0.0
        %1024 = vmatpush2.msra.mxu0 0.0
        %1025 = vmatprep.subr.mxu0 0.0
        %1026 = vmatpush2.msra.mxu0 0.0
        %1027 = vmatprep.subr.mxu0 0.0
        %1028 = vmatpush2.msra.mxu0 0.0
        %1029 = vmatprep.subr.mxu0 0.0
        %1030 = vmatpush2.msra.mxu0 0.0
        %1031 = vmatprep.subr.mxu0 0.0
        %1032 = vmatpush2.msra.mxu0 0.0
        %1033 = vmatprep.subr.mxu0 0.0
        %1034 = vmatpush2.msra.mxu0 0.0
        %1035 = vmatprep.subr.mxu0 0.0
        %1036 = vmatpush2.msra.mxu0 0.0
        %1037 = vmatprep.subr.mxu0 0.0
        %1038 = vmatpush2.msra.mxu0 0.0
        %1039 = vmatprep.subr.mxu0 0.0
        %1040 = vmatpush2.msra.mxu0 0.0
        %1041 = vmatprep.subr.mxu0 0.0
        %1042 = vmatpush2.msra.mxu0 0.0
        %1043 = vmatprep.mubr.f32.mxu0 0.0
        %1044 = vmatmul.mubr.f32.gmra.mxu0 %v724
        %v1045 = vpop.f32.mrf.mxu0
        %v1046 = vadd.f32 %v974, %v1045
        %v1047 = vpop.f32.mrf.mxu0
        %1048 = vdwg.mxu0
        %v1049 = vmax.f32 %v1046, 0.0
        %v1050 = vld [vmem:[#allocation8] sm:$0xf]
        %v1051 = vld [vmem:[%s5] sm:$0x1]
        %v1053 = vlaneseq
        %v1054 = vshrl.u32 %v1053, 7
        %v1055 = vsub.s32 0, %v1054
        %v1056 = vrot.slane %v1051, %v1055
        %vm1058 = vcmask 31744
        %v1060 = vsel %vm1058, %v1049, 0
        %v1063 = vsel %vm726, %v1050, 0
        %1065 = vmatprep.subr.mxu0 0.0
        %1066 = vmatpush1.msra.mxu0 0.0
        %1067 = vmatprep.subr.mxu0 0.0
        %1068 = vmatpush1.msra.mxu0 0.0
        %1069 = vmatprep.subr.mxu0 0.0
        %1070 = vmatpush1.msra.mxu0 0.0
        %1071 = vmatprep.subr.mxu0 0.0
        %1072 = vmatpush1.msra.mxu0 0.0
        %1073 = vmatprep.subr.mxu0 0.0
        %1074 = vmatpush1.msra.mxu0 0.0
        %1075 = vmatprep.subr.mxu0 0.0
        %1076 = vmatpush1.msra.mxu0 0.0
        %1077 = vmatprep.subr.mxu0 0.0
        %1078 = vmatpush1.msra.mxu0 0.0
        %1079 = vmatprep.subr.mxu0 0.0
        %1080 = vmatpush1.msra.mxu0 0.0
        %1081 = vmatprep.subr.mxu0 0.0
        %1082 = vmatpush1.msra.mxu0 0.0
        %1083 = vmatprep.subr.mxu0 0.0
        %1084 = vmatpush1.msra.mxu0 0.0
        %1085 = vmatprep.subr.mxu0 0.0
        %1086 = vmatpush1.msra.mxu0 0.0
        %1087 = vmatprep.subr.mxu0 0.0
        %1088 = vmatpush1.msra.mxu0 0.0
        %1089 = vmatprep.subr.mxu0 0.0
        %1090 = vmatpush1.msra.mxu0 0.0
        %1091 = vmatprep.subr.mxu0 0.0
        %1092 = vmatpush1.msra.mxu0 0.0
        %1093 = vmatprep.subr.mxu0 0.0
        %1094 = vmatpush1.msra.mxu0 0.0
        %1095 = vmatprep.subr.mxu0 0.0
        %1096 = vmatpush1.msra.mxu0 %v1063
        %1097 = vmatprep.subr.mxu0 0.0
        %1098 = vmatpush2.msra.mxu0 0.0
        %1099 = vmatprep.subr.mxu0 0.0
        %1100 = vmatpush2.msra.mxu0 0.0
        %1101 = vmatprep.subr.mxu0 0.0
        %1102 = vmatpush2.msra.mxu0 0.0
        %1103 = vmatprep.subr.mxu0 0.0
        %1104 = vmatpush2.msra.mxu0 0.0
        %1105 = vmatprep.subr.mxu0 0.0
        %1106 = vmatpush2.msra.mxu0 0.0
        %1107 = vmatprep.subr.mxu0 0.0
        %1108 = vmatpush2.msra.mxu0 0.0
        %1109 = vmatprep.subr.mxu0 0.0
        %1110 = vmatpush2.msra.mxu0 0.0
        %1111 = vmatprep.subr.mxu0 0.0
        %1112 = vmatpush2.msra.mxu0 0.0
        %1113 = vmatprep.subr.mxu0 0.0
        %1114 = vmatpush2.msra.mxu0 0.0
        %1115 = vmatprep.subr.mxu0 0.0
        %1116 = vmatpush2.msra.mxu0 0.0
        %1117 = vmatprep.subr.mxu0 0.0
        %1118 = vmatpush2.msra.mxu0 0.0
        %1119 = vmatprep.subr.mxu0 0.0
        %1120 = vmatpush2.msra.mxu0 0.0
        %1121 = vmatprep.subr.mxu0 0.0
        %1122 = vmatpush2.msra.mxu0 0.0
        %1123 = vmatprep.subr.mxu0 0.0
        %1124 = vmatpush2.msra.mxu0 0.0
        %1125 = vmatprep.subr.mxu0 0.0
        %1126 = vmatpush2.msra.mxu0 0.0
        %1127 = vmatprep.subr.mxu0 0.0
        %1128 = vmatpush2.msra.mxu0 0.0
        %1129 = vmatprep.mubr.f32.mxu0 0.0
        %1130 = vmatmul.mubr.f32.gmra.mxu0 %v1060
        %v1131 = vpop.f32.mrf.mxu0
        %v1132 = vadd.f32 %v1056, %v1131
        %v1133 = vpop.f32.mrf.mxu0
        %1134 = vdwg.mxu0
        %v1135 = vmax.f32 %v1132, 0.0
        %1136 = vrot.lane.b32.xlu0 %v1049, 124
        %v1137 = vpop.permute.xlu0 %1136
        %v1138 = vsel %vm1058, %v1137, 0
        %1140 = vmatprep.subr.mxu0 0.0
        %1141 = vmatpush1.msra.mxu0 0.0
        %1142 = vmatprep.subr.mxu0 0.0
        %1143 = vmatpush1.msra.mxu0 0.0
        %1144 = vmatprep.subr.mxu0 0.0
        %1145 = vmatpush1.msra.mxu0 0.0
        %1146 = vmatprep.subr.mxu0 0.0
        %1147 = vmatpush1.msra.mxu0 0.0
        %1148 = vmatprep.subr.mxu0 0.0
        %1149 = vmatpush1.msra.mxu0 0.0
        %1150 = vmatprep.subr.mxu0 0.0
        %1151 = vmatpush1.msra.mxu0 0.0
        %1152 = vmatprep.subr.mxu0 0.0
        %1153 = vmatpush1.msra.mxu0 0.0
        %1154 = vmatprep.subr.mxu0 0.0
        %1155 = vmatpush1.msra.mxu0 0.0
        %1156 = vmatprep.subr.mxu0 0.0
        %1157 = vmatpush1.msra.mxu0 0.0
        %1158 = vmatprep.subr.mxu0 0.0
        %1159 = vmatpush1.msra.mxu0 0.0
        %1160 = vmatprep.subr.mxu0 0.0
        %1161 = vmatpush1.msra.mxu0 0.0
        %1162 = vmatprep.subr.mxu0 0.0
        %1163 = vmatpush1.msra.mxu0 0.0
        %1164 = vmatprep.subr.mxu0 0.0
        %1165 = vmatpush1.msra.mxu0 0.0
        %1166 = vmatprep.subr.mxu0 0.0
        %1167 = vmatpush1.msra.mxu0 0.0
        %1168 = vmatprep.subr.mxu0 0.0
        %1169 = vmatpush1.msra.mxu0 0.0
        %1170 = vmatprep.subr.mxu0 0.0
        %1171 = vmatpush1.msra.mxu0 %v1063
        %1172 = vmatprep.subr.mxu0 0.0
        %1173 = vmatpush2.msra.mxu0 0.0
        %1174 = vmatprep.subr.mxu0 0.0
        %1175 = vmatpush2.msra.mxu0 0.0
        %1176 = vmatprep.subr.mxu0 0.0
        %1177 = vmatpush2.msra.mxu0 0.0
        %1178 = vmatprep.subr.mxu0 0.0
        %1179 = vmatpush2.msra.mxu0 0.0
        %1180 = vmatprep.subr.mxu0 0.0
        %1181 = vmatpush2.msra.mxu0 0.0
        %1182 = vmatprep.subr.mxu0 0.0
        %1183 = vmatpush2.msra.mxu0 0.0
        %1184 = vmatprep.subr.mxu0 0.0
        %1185 = vmatpush2.msra.mxu0 0.0
        %1186 = vmatprep.subr.mxu0 0.0
        %1187 = vmatpush2.msra.mxu0 0.0
        %1188 = vmatprep.subr.mxu0 0.0
        %1189 = vmatpush2.msra.mxu0 0.0
        %1190 = vmatprep.subr.mxu0 0.0
        %1191 = vmatpush2.msra.mxu0 0.0
        %1192 = vmatprep.subr.mxu0 0.0
        %1193 = vmatpush2.msra.mxu0 0.0
        %1194 = vmatprep.subr.mxu0 0.0
        %1195 = vmatpush2.msra.mxu0 0.0
        %1196 = vmatprep.subr.mxu0 0.0
        %1197 = vmatpush2.msra.mxu0 0.0
        %1198 = vmatprep.subr.mxu0 0.0
        %1199 = vmatpush2.msra.mxu0 0.0
        %1200 = vmatprep.subr.mxu0 0.0
        %1201 = vmatpush2.msra.mxu0 0.0
        %1202 = vmatprep.subr.mxu0 0.0
        %1203 = vmatpush2.msra.mxu0 0.0
        %1204 = vmatprep.mubr.f32.mxu0 0.0
        %1205 = vmatmul.mubr.f32.gmra.mxu0 %v1138
        %v1206 = vpop.f32.mrf.mxu0
        %v1207 = vadd.f32 %v1056, %v1206
        %v1208 = vpop.f32.mrf.mxu0
        %1209 = vdwg.mxu0
        %v1210 = vmax.f32 %v1207, 0.0
        %1211 = vrot.lane.b32.xlu0 %v1049, 120
        %v1212 = vpop.permute.xlu0 %1211
        %v1213 = vsel %vm1058, %v1212, 0
        %1215 = vmatprep.subr.mxu0 0.0
        %1216 = vmatpush1.msra.mxu0 0.0
        %1217 = vmatprep.subr.mxu0 0.0
        %1218 = vmatpush1.msra.mxu0 0.0
        %1219 = vmatprep.subr.mxu0 0.0
        %1220 = vmatpush1.msra.mxu0 0.0
        %1221 = vmatprep.subr.mxu0 0.0
        %1222 = vmatpush1.msra.mxu0 0.0
        %1223 = vmatprep.subr.mxu0 0.0
        %1224 = vmatpush1.msra.mxu0 0.0
        %1225 = vmatprep.subr.mxu0 0.0
        %1226 = vmatpush1.msra.mxu0 0.0
        %1227 = vmatprep.subr.mxu0 0.0
        %1228 = vmatpush1.msra.mxu0 0.0
        %1229 = vmatprep.subr.mxu0 0.0
        %1230 = vmatpush1.msra.mxu0 0.0
        %1231 = vmatprep.subr.mxu0 0.0
        %1232 = vmatpush1.msra.mxu0 0.0
        %1233 = vmatprep.subr.mxu0 0.0
        %1234 = vmatpush1.msra.mxu0 0.0
        %1235 = vmatprep.subr.mxu0 0.0
        %1236 = vmatpush1.msra.mxu0 0.0
        %1237 = vmatprep.subr.mxu0 0.0
        %1238 = vmatpush1.msra.mxu0 0.0
        %1239 = vmatprep.subr.mxu0 0.0
        %1240 = vmatpush1.msra.mxu0 0.0
        %1241 = vmatprep.subr.mxu0 0.0
        %1242 = vmatpush1.msra.mxu0 0.0
        %1243 = vmatprep.subr.mxu0 0.0
        %1244 = vmatpush1.msra.mxu0 0.0
        %1245 = vmatprep.subr.mxu0 0.0
        %1246 = vmatpush1.msra.mxu0 %v1063
        %1247 = vmatprep.subr.mxu0 0.0
        %1248 = vmatpush2.msra.mxu0 0.0
        %1249 = vmatprep.subr.mxu0 0.0
        %1250 = vmatpush2.msra.mxu0 0.0
        %1251 = vmatprep.subr.mxu0 0.0
        %1252 = vmatpush2.msra.mxu0 0.0
        %1253 = vmatprep.subr.mxu0 0.0
        %1254 = vmatpush2.msra.mxu0 0.0
        %1255 = vmatprep.subr.mxu0 0.0
        %1256 = vmatpush2.msra.mxu0 0.0
        %1257 = vmatprep.subr.mxu0 0.0
        %1258 = vmatpush2.msra.mxu0 0.0
        %1259 = vmatprep.subr.mxu0 0.0
        %1260 = vmatpush2.msra.mxu0 0.0
        %1261 = vmatprep.subr.mxu0 0.0
        %1262 = vmatpush2.msra.mxu0 0.0
        %1263 = vmatprep.subr.mxu0 0.0
        %1264 = vmatpush2.msra.mxu0 0.0
        %1265 = vmatprep.subr.mxu0 0.0
        %1266 = vmatpush2.msra.mxu0 0.0
        %1267 = vmatprep.subr.mxu0 0.0
        %1268 = vmatpush2.msra.mxu0 0.0
        %1269 = vmatprep.subr.mxu0 0.0
        %1270 = vmatpush2.msra.mxu0 0.0
        %1271 = vmatprep.subr.mxu0 0.0
        %1272 = vmatpush2.msra.mxu0 0.0
        %1273 = vmatprep.subr.mxu0 0.0
        %1274 = vmatpush2.msra.mxu0 0.0
        %1275 = vmatprep.subr.mxu0 0.0
        %1276 = vmatpush2.msra.mxu0 0.0
        %1277 = vmatprep.subr.mxu0 0.0
        %1278 = vmatpush2.msra.mxu0 0.0
        %1279 = vmatprep.mubr.f32.mxu0 0.0
        %1280 = vmatmul.mubr.f32.gmra.mxu0 %v1213
        %v1281 = vpop.f32.mrf.mxu0
        %v1282 = vadd.f32 %v1056, %v1281
        %v1283 = vpop.f32.mrf.mxu0
        %1284 = vdwg.mxu0
        %v1285 = vmax.f32 %v1282, 0.0
        %1286 = vrot.lane.b32.xlu0 %v1049, 116
        %v1287 = vpop.permute.xlu0 %1286
        %v1288 = vsel %vm1058, %v1287, 0
        %1290 = vmatprep.subr.mxu0 0.0
        %1291 = vmatpush1.msra.mxu0 0.0
        %1292 = vmatprep.subr.mxu0 0.0
        %1293 = vmatpush1.msra.mxu0 0.0
        %1294 = vmatprep.subr.mxu0 0.0
        %1295 = vmatpush1.msra.mxu0 0.0
        %1296 = vmatprep.subr.mxu0 0.0
        %1297 = vmatpush1.msra.mxu0 0.0
        %1298 = vmatprep.subr.mxu0 0.0
        %1299 = vmatpush1.msra.mxu0 0.0
        %1300 = vmatprep.subr.mxu0 0.0
        %1301 = vmatpush1.msra.mxu0 0.0
        %1302 = vmatprep.subr.mxu0 0.0
        %1303 = vmatpush1.msra.mxu0 0.0
        %1304 = vmatprep.subr.mxu0 0.0
        %1305 = vmatpush1.msra.mxu0 0.0
        %1306 = vmatprep.subr.mxu0 0.0
        %1307 = vmatpush1.msra.mxu0 0.0
        %1308 = vmatprep.subr.mxu0 0.0
        %1309 = vmatpush1.msra.mxu0 0.0
        %1310 = vmatprep.subr.mxu0 0.0
        %1311 = vmatpush1.msra.mxu0 0.0
        %1312 = vmatprep.subr.mxu0 0.0
        %1313 = vmatpush1.msra.mxu0 0.0
        %1314 = vmatprep.subr.mxu0 0.0
        %1315 = vmatpush1.msra.mxu0 0.0
        %1316 = vmatprep.subr.mxu0 0.0
        %1317 = vmatpush1.msra.mxu0 0.0
        %1318 = vmatprep.subr.mxu0 0.0
        %1319 = vmatpush1.msra.mxu0 0.0
        %1320 = vmatprep.subr.mxu0 0.0
        %1321 = vmatpush1.msra.mxu0 %v1063
        %1322 = vmatprep.subr.mxu0 0.0
        %1323 = vmatpush2.msra.mxu0 0.0
        %1324 = vmatprep.subr.mxu0 0.0
        %1325 = vmatpush2.msra.mxu0 0.0
        %1326 = vmatprep.subr.mxu0 0.0
        %1327 = vmatpush2.msra.mxu0 0.0
        %1328 = vmatprep.subr.mxu0 0.0
        %1329 = vmatpush2.msra.mxu0 0.0
        %1330 = vmatprep.subr.mxu0 0.0
        %1331 = vmatpush2.msra.mxu0 0.0
        %1332 = vmatprep.subr.mxu0 0.0
        %1333 = vmatpush2.msra.mxu0 0.0
        %1334 = vmatprep.subr.mxu0 0.0
        %1335 = vmatpush2.msra.mxu0 0.0
        %1336 = vmatprep.subr.mxu0 0.0
        %1337 = vmatpush2.msra.mxu0 0.0
        %1338 = vmatprep.subr.mxu0 0.0
        %1339 = vmatpush2.msra.mxu0 0.0
        %1340 = vmatprep.subr.mxu0 0.0
        %1341 = vmatpush2.msra.mxu0 0.0
        %1342 = vmatprep.subr.mxu0 0.0
        %1343 = vmatpush2.msra.mxu0 0.0
        %1344 = vmatprep.subr.mxu0 0.0
        %1345 = vmatpush2.msra.mxu0 0.0
        %1346 = vmatprep.subr.mxu0 0.0
        %1347 = vmatpush2.msra.mxu0 0.0
        %1348 = vmatprep.subr.mxu0 0.0
        %1349 = vmatpush2.msra.mxu0 0.0
        %1350 = vmatprep.subr.mxu0 0.0
        %1351 = vmatpush2.msra.mxu0 0.0
        %1352 = vmatprep.subr.mxu0 0.0
        %1353 = vmatpush2.msra.mxu0 0.0
        %1354 = vmatprep.mubr.f32.mxu0 0.0
        %1355 = vmatmul.mubr.f32.gmra.mxu0 %v1288
        %v1356 = vpop.f32.mrf.mxu0
        %v1357 = vadd.f32 %v1056, %v1356
        %v1358 = vpop.f32.mrf.mxu0
        %1359 = vdwg.mxu0
        %v1360 = vmax.f32 %v1357, 0.0
        %v1361 = vld [vmem:[%s14] sm:$0x1]
        %v1363 = vlaneseq
        %v1364 = vshrl.u32 %v1363, 7
        %v1365 = vsub.s32 0, %v1364
        %v1366 = vrot.slane %v1361, %v1365
        %v1368 = vadd.f32 %v1366, 0.0
        %1370 = vset.pattern.permute.xlu0 0
        %1371 = vperm.xlu0 %1370, %v964
        %v1372 = vpop.permute.xlu0 %1371
        %v1374 = vmul.f32 %v1372, %v1135
        %v1375 = vmul.f32 %v1372, %v712
        %1376 = vset.pattern.permute.xlu0 1
        %1377 = vperm.xlu0 %1376, %v964
        %v1378 = vpop.permute.xlu0 %1377
        %v1380 = vmul.f32 %v1378, %v1210
        %v1381 = vadd.f32 %v1374, %v1380
        %v1382 = vmul.f32 %v1378, %v712
        %1384 = vrot.lane.b32.xlu0 %v1382, 120
        %v1385 = vpop.permute.xlu0 %1384
        %v1387 = vadd.f32 %v1375, %v1385
        %1388 = vset.pattern.permute.xlu0 2
        %1389 = vperm.xlu0 %1388, %v964
        %v1390 = vpop.permute.xlu0 %1389
        %v1392 = vmul.f32 %v1390, %v1285
        %v1393 = vadd.f32 %v1381, %v1392
        %v1394 = vmul.f32 %v1390, %v712
        %1396 = vrot.lane.b32.xlu0 %v1394, 112
        %v1397 = vpop.permute.xlu0 %1396
        %v1399 = vadd.f32 %v1387, %v1397
        %1400 = vset.pattern.permute.xlu0 3
        %1401 = vperm.xlu0 %1400, %v964
        %v1402 = vpop.permute.xlu0 %1401
        %v1404 = vmul.f32 %v1402, %v1360
        %v1405 = vadd.f32 %v1393, %v1404
        %v1406 = vmul.f32 %v1402, %v712
        %1408 = vrot.lane.b32.xlu0 %v1406, 104
        %v1409 = vpop.permute.xlu0 %1408
        %v1411 = vadd.f32 %v1399, %v1409
        %v1412 = vld [vmem:[#allocation16] sm:$0xf]
        %v1414 = vsel %vm1058, %v1405, 0
        %v1417 = vsel %vm726, %v1412, 0
        %1419 = vmatprep.subr.mxu0 0.0
        %1420 = vmatpush1.msra.mxu0 0.0
        %1421 = vmatprep.subr.mxu0 0.0
        %1422 = vmatpush1.msra.mxu0 0.0
        %1423 = vmatprep.subr.mxu0 0.0
        %1424 = vmatpush1.msra.mxu0 0.0
        %1425 = vmatprep.subr.mxu0 0.0
        %1426 = vmatpush1.msra.mxu0 0.0
        %1427 = vmatprep.subr.mxu0 0.0
        %1428 = vmatpush1.msra.mxu0 0.0
        %1429 = vmatprep.subr.mxu0 0.0
        %1430 = vmatpush1.msra.mxu0 0.0
        %1431 = vmatprep.subr.mxu0 0.0
        %1432 = vmatpush1.msra.mxu0 0.0
        %1433 = vmatprep.subr.mxu0 0.0
        %1434 = vmatpush1.msra.mxu0 0.0
        %1435 = vmatprep.subr.mxu0 0.0
        %1436 = vmatpush1.msra.mxu0 0.0
        %1437 = vmatprep.subr.mxu0 0.0
        %1438 = vmatpush1.msra.mxu0 0.0
        %1439 = vmatprep.subr.mxu0 0.0
        %1440 = vmatpush1.msra.mxu0 0.0
        %1441 = vmatprep.subr.mxu0 0.0
        %1442 = vmatpush1.msra.mxu0 0.0
        %1443 = vmatprep.subr.mxu0 0.0
        %1444 = vmatpush1.msra.mxu0 0.0
        %1445 = vmatprep.subr.mxu0 0.0
        %1446 = vmatpush1.msra.mxu0 0.0
        %1447 = vmatprep.subr.mxu0 0.0
        %1448 = vmatpush1.msra.mxu0 0.0
        %1449 = vmatprep.subr.mxu0 0.0
        %1450 = vmatpush1.msra.mxu0 %v1417
        %1451 = vmatprep.subr.mxu0 0.0
        %1452 = vmatpush2.msra.mxu0 0.0
        %1453 = vmatprep.subr.mxu0 0.0
        %1454 = vmatpush2.msra.mxu0 0.0
        %1455 = vmatprep.subr.mxu0 0.0
        %1456 = vmatpush2.msra.mxu0 0.0
        %1457 = vmatprep.subr.mxu0 0.0
        %1458 = vmatpush2.msra.mxu0 0.0
        %1459 = vmatprep.subr.mxu0 0.0
        %1460 = vmatpush2.msra.mxu0 0.0
        %1461 = vmatprep.subr.mxu0 0.0
        %1462 = vmatpush2.msra.mxu0 0.0
        %1463 = vmatprep.subr.mxu0 0.0
        %1464 = vmatpush2.msra.mxu0 0.0
        %1465 = vmatprep.subr.mxu0 0.0
        %1466 = vmatpush2.msra.mxu0 0.0
        %1467 = vmatprep.subr.mxu0 0.0
        %1468 = vmatpush2.msra.mxu0 0.0
        %1469 = vmatprep.subr.mxu0 0.0
        %1470 = vmatpush2.msra.mxu0 0.0
        %1471 = vmatprep.subr.mxu0 0.0
        %1472 = vmatpush2.msra.mxu0 0.0
        %1473 = vmatprep.subr.mxu0 0.0
        %1474 = vmatpush2.msra.mxu0 0.0
        %1475 = vmatprep.subr.mxu0 0.0
        %1476 = vmatpush2.msra.mxu0 0.0
        %1477 = vmatprep.subr.mxu0 0.0
        %1478 = vmatpush2.msra.mxu0 0.0
        %1479 = vmatprep.subr.mxu0 0.0
        %1480 = vmatpush2.msra.mxu0 0.0
        %1481 = vmatprep.subr.mxu0 0.0
        %1482 = vmatpush2.msra.mxu0 0.0
        %1483 = vmatprep.mubr.f32.mxu0 0.0
        %1484 = vmatmul.mubr.f32.gmra.mxu0 %v1414
        %v1485 = vpop.f32.mrf.mxu0
        %v1486 = vadd.f32 0.0, %v1485
        %v1487 = vpop.f32.mrf.mxu0
        %1488 = vdwg.mxu0
        %v1489 = vadd.f32 %v1368, %v1486
        %v1490 = vld [vmem:[#allocation17] sm:$0xff]
        %vm1491 = vcmask 64512
        %v1493 = vsel %vm1491, %v1411, 0
        %1495 = vmatprep.subr.mxu0 0.0
        %1496 = vmatpush1.msra.mxu0 0.0
        %1497 = vmatprep.subr.mxu0 0.0
        %1498 = vmatpush1.msra.mxu0 0.0
        %1499 = vmatprep.subr.mxu0 0.0
        %1500 = vmatpush1.msra.mxu0 0.0
        %1501 = vmatprep.subr.mxu0 0.0
        %1502 = vmatpush1.msra.mxu0 0.0
        %1503 = vmatprep.subr.mxu0 0.0
        %1504 = vmatpush1.msra.mxu0 0.0
        %1505 = vmatprep.subr.mxu0 0.0
        %1506 = vmatpush1.msra.mxu0 0.0
        %1507 = vmatprep.subr.mxu0 0.0
        %1508 = vmatpush1.msra.mxu0 0.0
        %1509 = vmatprep.subr.mxu0 0.0
        %1510 = vmatpush1.msra.mxu0 0.0
        %1511 = vmatprep.subr.mxu0 0.0
        %1512 = vmatpush1.msra.mxu0 0.0
        %1513 = vmatprep.subr.mxu0 0.0
        %1514 = vmatpush1.msra.mxu0 0.0
        %1515 = vmatprep.subr.mxu0 0.0
        %1516 = vmatpush1.msra.mxu0 0.0
        %1517 = vmatprep.subr.mxu0 0.0
        %1518 = vmatpush1.msra.mxu0 0.0
        %1519 = vmatprep.subr.mxu0 0.0
        %1520 = vmatpush1.msra.mxu0 0.0
        %1521 = vmatprep.subr.mxu0 0.0
        %1522 = vmatpush1.msra.mxu0 0.0
        %1523 = vmatprep.subr.mxu0 0.0
        %1524 = vmatpush1.msra.mxu0 0.0
        %1525 = vmatprep.subr.mxu0 0.0
        %1526 = vmatpush1.msra.mxu0 %v1490
        %1527 = vmatprep.subr.mxu0 0.0
        %1528 = vmatpush2.msra.mxu0 0.0
        %1529 = vmatprep.subr.mxu0 0.0
        %1530 = vmatpush2.msra.mxu0 0.0
        %1531 = vmatprep.subr.mxu0 0.0
        %1532 = vmatpush2.msra.mxu0 0.0
        %1533 = vmatprep.subr.mxu0 0.0
        %1534 = vmatpush2.msra.mxu0 0.0
        %1535 = vmatprep.subr.mxu0 0.0
        %1536 = vmatpush2.msra.mxu0 0.0
        %1537 = vmatprep.subr.mxu0 0.0
        %1538 = vmatpush2.msra.mxu0 0.0
        %1539 = vmatprep.subr.mxu0 0.0
        %1540 = vmatpush2.msra.mxu0 0.0
        %1541 = vmatprep.subr.mxu0 0.0
        %1542 = vmatpush2.msra.mxu0 0.0
        %1543 = vmatprep.subr.mxu0 0.0
        %1544 = vmatpush2.msra.mxu0 0.0
        %1545 = vmatprep.subr.mxu0 0.0
        %1546 = vmatpush2.msra.mxu0 0.0
        %1547 = vmatprep.subr.mxu0 0.0
        %1548 = vmatpush2.msra.mxu0 0.0
        %1549 = vmatprep.subr.mxu0 0.0
        %1550 = vmatpush2.msra.mxu0 0.0
        %1551 = vmatprep.subr.mxu0 0.0
        %1552 = vmatpush2.msra.mxu0 0.0
        %1553 = vmatprep.subr.mxu0 0.0
        %1554 = vmatpush2.msra.mxu0 0.0
        %1555 = vmatprep.subr.mxu0 0.0
        %1556 = vmatpush2.msra.mxu0 0.0
        %1557 = vmatprep.subr.mxu0 0.0
        %1558 = vmatpush2.msra.mxu0 0.0
        %1559 = vmatprep.mubr.f32.mxu0 0.0
        %1560 = vmatmul.mubr.f32.gmra.mxu0 %v1493
        %v1561 = vpop.f32.mrf.mxu0
        %v1562 = vadd.f32 0.0, %v1561
        %v1563 = vpop.f32.mrf.mxu0
        %1564 = vdwg.mxu0
        %v1565 = vadd.f32 %v1489, %v1562
        %1566 = vset.pattern.permute.xlu0 4
        %1567 = vperm.xlu0 %1566, %v964
        %v1568 = vpop.permute.xlu0 %1567
        %v1570 = vmul.f32 %v1568, %v1135
        %v1571 = vmul.f32 %v1568, %v712
        %1572 = vset.pattern.permute.xlu0 5
        %1573 = vperm.xlu0 %1572, %v964
        %v1574 = vpop.permute.xlu0 %1573
        %v1576 = vmul.f32 %v1574, %v1210
        %v1577 = vadd.f32 %v1570, %v1576
        %v1578 = vmul.f32 %v1574, %v712
        %1580 = vrot.lane.b32.xlu0 %v1578, 120
        %v1581 = vpop.permute.xlu0 %1580
        %v1583 = vadd.f32 %v1571, %v1581
        %1584 = vset.pattern.permute.xlu0 6
        %1585 = vperm.xlu0 %1584, %v964
        %v1586 = vpop.permute.xlu0 %1585
        %v1588 = vmul.f32 %v1586, %v1285
        %v1589 = vadd.f32 %v1577, %v1588
        %v1590 = vmul.f32 %v1586, %v712
        %1592 = vrot.lane.b32.xlu0 %v1590, 112
        %v1593 = vpop.permute.xlu0 %1592
        %v1595 = vadd.f32 %v1583, %v1593
        %1596 = vset.pattern.permute.xlu0 7
        %1597 = vperm.xlu0 %1596, %v964
        %v1598 = vpop.permute.xlu0 %1597
        %v1600 = vmul.f32 %v1598, %v1360
        %v1601 = vadd.f32 %v1589, %v1600
        %v1602 = vmul.f32 %v1598, %v712
        %1604 = vrot.lane.b32.xlu0 %v1602, 104
        %v1605 = vpop.permute.xlu0 %1604
        %v1607 = vadd.f32 %v1595, %v1605
        %s1608 = scalar_lea.vmem [#allocation16], 4
        %v1609 = vld [vmem:[%s1608] sm:$0xf]
        %v1611 = vsel %vm1058, %v1601, 0
        %v1614 = vsel %vm726, %v1609, 0
        %1616 = vmatprep.subr.mxu0 0.0
        %1617 = vmatpush1.msra.mxu0 0.0
        %1618 = vmatprep.subr.mxu0 0.0
        %1619 = vmatpush1.msra.mxu0 0.0
        %1620 = vmatprep.subr.mxu0 0.0
        %1621 = vmatpush1.msra.mxu0 0.0
        %1622 = vmatprep.subr.mxu0 0.0
        %1623 = vmatpush1.msra.mxu0 0.0
        %1624 = vmatprep.subr.mxu0 0.0
        %1625 = vmatpush1.msra.mxu0 0.0
        %1626 = vmatprep.subr.mxu0 0.0
        %1627 = vmatpush1.msra.mxu0 0.0
        %1628 = vmatprep.subr.mxu0 0.0
        %1629 = vmatpush1.msra.mxu0 0.0
        %1630 = vmatprep.subr.mxu0 0.0
        %1631 = vmatpush1.msra.mxu0 0.0
        %1632 = vmatprep.subr.mxu0 0.0
        %1633 = vmatpush1.msra.mxu0 0.0
        %1634 = vmatprep.subr.mxu0 0.0
        %1635 = vmatpush1.msra.mxu0 0.0
        %1636 = vmatprep.subr.mxu0 0.0
        %1637 = vmatpush1.msra.mxu0 0.0
        %1638 = vmatprep.subr.mxu0 0.0
        %1639 = vmatpush1.msra.mxu0 0.0
        %1640 = vmatprep.subr.mxu0 0.0
        %1641 = vmatpush1.msra.mxu0 0.0
        %1642 = vmatprep.subr.mxu0 0.0
        %1643 = vmatpush1.msra.mxu0 0.0
        %1644 = vmatprep.subr.mxu0 0.0
        %1645 = vmatpush1.msra.mxu0 0.0
        %1646 = vmatprep.subr.mxu0 0.0
        %1647 = vmatpush1.msra.mxu0 %v1614
        %1648 = vmatprep.subr.mxu0 0.0
        %1649 = vmatpush2.msra.mxu0 0.0
        %1650 = vmatprep.subr.mxu0 0.0
        %1651 = vmatpush2.msra.mxu0 0.0
        %1652 = vmatprep.subr.mxu0 0.0
        %1653 = vmatpush2.msra.mxu0 0.0
        %1654 = vmatprep.subr.mxu0 0.0
        %1655 = vmatpush2.msra.mxu0 0.0
        %1656 = vmatprep.subr.mxu0 0.0
        %1657 = vmatpush2.msra.mxu0 0.0
        %1658 = vmatprep.subr.mxu0 0.0
        %1659 = vmatpush2.msra.mxu0 0.0
        %1660 = vmatprep.subr.mxu0 0.0
        %1661 = vmatpush2.msra.mxu0 0.0
        %1662 = vmatprep.subr.mxu0 0.0
        %1663 = vmatpush2.msra.mxu0 0.0
        %1664 = vmatprep.subr.mxu0 0.0
        %1665 = vmatpush2.msra.mxu0 0.0
        %1666 = vmatprep.subr.mxu0 0.0
        %1667 = vmatpush2.msra.mxu0 0.0
        %1668 = vmatprep.subr.mxu0 0.0
        %1669 = vmatpush2.msra.mxu0 0.0
        %1670 = vmatprep.subr.mxu0 0.0
        %1671 = vmatpush2.msra.mxu0 0.0
        %1672 = vmatprep.subr.mxu0 0.0
        %1673 = vmatpush2.msra.mxu0 0.0
        %1674 = vmatprep.subr.mxu0 0.0
        %1675 = vmatpush2.msra.mxu0 0.0
        %1676 = vmatprep.subr.mxu0 0.0
        %1677 = vmatpush2.msra.mxu0 0.0
        %1678 = vmatprep.subr.mxu0 0.0
        %1679 = vmatpush2.msra.mxu0 0.0
        %1680 = vmatprep.mubr.f32.mxu0 0.0
        %1681 = vmatmul.mubr.f32.gmra.mxu0 %v1611
        %v1682 = vpop.f32.mrf.mxu0
        %v1683 = vadd.f32 0.0, %v1682
        %v1684 = vpop.f32.mrf.mxu0
        %1685 = vdwg.mxu0
        %v1686 = vadd.f32 %v1565, %v1683
        %s1687 = scalar_lea.vmem [#allocation17], 8
        %v1688 = vld [vmem:[%s1687] sm:$0xff]
        %v1690 = vsel %vm1491, %v1607, 0
        %1692 = vmatprep.subr.mxu0 0.0
        %1693 = vmatpush1.msra.mxu0 0.0
        %1694 = vmatprep.subr.mxu0 0.0
        %1695 = vmatpush1.msra.mxu0 0.0
        %1696 = vmatprep.subr.mxu0 0.0
        %1697 = vmatpush1.msra.mxu0 0.0
        %1698 = vmatprep.subr.mxu0 0.0
        %1699 = vmatpush1.msra.mxu0 0.0
        %1700 = vmatprep.subr.mxu0 0.0
        %1701 = vmatpush1.msra.mxu0 0.0
        %1702 = vmatprep.subr.mxu0 0.0
        %1703 = vmatpush1.msra.mxu0 0.0
        %1704 = vmatprep.subr.mxu0 0.0
        %1705 = vmatpush1.msra.mxu0 0.0
        %1706 = vmatprep.subr.mxu0 0.0
        %1707 = vmatpush1.msra.mxu0 0.0
        %1708 = vmatprep.subr.mxu0 0.0
        %1709 = vmatpush1.msra.mxu0 0.0
        %1710 = vmatprep.subr.mxu0 0.0
        %1711 = vmatpush1.msra.mxu0 0.0
        %1712 = vmatprep.subr.mxu0 0.0
        %1713 = vmatpush1.msra.mxu0 0.0
        %1714 = vmatprep.subr.mxu0 0.0
        %1715 = vmatpush1.msra.mxu0 0.0
        %1716 = vmatprep.subr.mxu0 0.0
        %1717 = vmatpush1.msra.mxu0 0.0
        %1718 = vmatprep.subr.mxu0 0.0
        %1719 = vmatpush1.msra.mxu0 0.0
        %1720 = vmatprep.subr.mxu0 0.0
        %1721 = vmatpush1.msra.mxu0 0.0
        %1722 = vmatprep.subr.mxu0 0.0
        %1723 = vmatpush1.msra.mxu0 %v1688
        %1724 = vmatprep.subr.mxu0 0.0
        %1725 = vmatpush2.msra.mxu0 0.0
        %1726 = vmatprep.subr.mxu0 0.0
        %1727 = vmatpush2.msra.mxu0 0.0
        %1728 = vmatprep.subr.mxu0 0.0
        %1729 = vmatpush2.msra.mxu0 0.0
        %1730 = vmatprep.subr.mxu0 0.0
        %1731 = vmatpush2.msra.mxu0 0.0
        %1732 = vmatprep.subr.mxu0 0.0
        %1733 = vmatpush2.msra.mxu0 0.0
        %1734 = vmatprep.subr.mxu0 0.0
        %1735 = vmatpush2.msra.mxu0 0.0
        %1736 = vmatprep.subr.mxu0 0.0
        %1737 = vmatpush2.msra.mxu0 0.0
        %1738 = vmatprep.subr.mxu0 0.0
        %1739 = vmatpush2.msra.mxu0 0.0
        %1740 = vmatprep.subr.mxu0 0.0
        %1741 = vmatpush2.msra.mxu0 0.0
        %1742 = vmatprep.subr.mxu0 0.0
        %1743 = vmatpush2.msra.mxu0 0.0
        %1744 = vmatprep.subr.mxu0 0.0
        %1745 = vmatpush2.msra.mxu0 0.0
        %1746 = vmatprep.subr.mxu0 0.0
        %1747 = vmatpush2.msra.mxu0 0.0
        %1748 = vmatprep.subr.mxu0 0.0
        %1749 = vmatpush2.msra.mxu0 0.0
        %1750 = vmatprep.subr.mxu0 0.0
        %1751 = vmatpush2.msra.mxu0 0.0
        %1752 = vmatprep.subr.mxu0 0.0
        %1753 = vmatpush2.msra.mxu0 0.0
        %1754 = vmatprep.subr.mxu0 0.0
        %1755 = vmatpush2.msra.mxu0 0.0
        %1756 = vmatprep.mubr.f32.mxu0 0.0
        %1757 = vmatmul.mubr.f32.gmra.mxu0 %v1690
        %v1758 = vpop.f32.mrf.mxu0
        %v1759 = vadd.f32 0.0, %v1758
        %v1760 = vpop.f32.mrf.mxu0
        %1761 = vdwg.mxu0
        %v1762 = vadd.f32 %v1686, %v1759
        %1763 = vset.pattern.permute.xlu0 8
        %1764 = vperm.xlu0 %1763, %v964
        %v1765 = vpop.permute.xlu0 %1764
        %v1767 = vmul.f32 %v1765, %v1135
        %v1768 = vmul.f32 %v1765, %v712
        %1769 = vset.pattern.permute.xlu0 9
        %1770 = vperm.xlu0 %1769, %v964
        %v1771 = vpop.permute.xlu0 %1770
        %v1773 = vmul.f32 %v1771, %v1210
        %v1774 = vadd.f32 %v1767, %v1773
        %v1775 = vmul.f32 %v1771, %v712
        %1777 = vrot.lane.b32.xlu0 %v1775, 120
        %v1778 = vpop.permute.xlu0 %1777
        %v1780 = vadd.f32 %v1768, %v1778
        %1781 = vset.pattern.permute.xlu0 10
        %1782 = vperm.xlu0 %1781, %v964
        %v1783 = vpop.permute.xlu0 %1782
        %v1785 = vmul.f32 %v1783, %v1285
        %v1786 = vadd.f32 %v1774, %v1785
        %v1787 = vmul.f32 %v1783, %v712
        %1789 = vrot.lane.b32.xlu0 %v1787, 112
        %v1790 = vpop.permute.xlu0 %1789
        %v1792 = vadd.f32 %v1780, %v1790
        %1793 = vset.pattern.permute.xlu0 11
        %1794 = vperm.xlu0 %1793, %v964
        %v1795 = vpop.permute.xlu0 %1794
        %v1797 = vmul.f32 %v1795, %v1360
        %v1798 = vadd.f32 %v1786, %v1797
        %v1799 = vmul.f32 %v1795, %v712
        %1801 = vrot.lane.b32.xlu0 %v1799, 104
        %v1802 = vpop.permute.xlu0 %1801
        %v1804 = vadd.f32 %v1792, %v1802
        %s1805 = scalar_lea.vmem [#allocation16], 8
        %v1806 = vld [vmem:[%s1805] sm:$0xf]
        %v1808 = vsel %vm1058, %v1798, 0
        %v1811 = vsel %vm726, %v1806, 0
        %1813 = vmatprep.subr.mxu0 0.0
        %1814 = vmatpush1.msra.mxu0 0.0
        %1815 = vmatprep.subr.mxu0 0.0
        %1816 = vmatpush1.msra.mxu0 0.0
        %1817 = vmatprep.subr.mxu0 0.0
        %1818 = vmatpush1.msra.mxu0 0.0
        %1819 = vmatprep.subr.mxu0 0.0
        %1820 = vmatpush1.msra.mxu0 0.0
        %1821 = vmatprep.subr.mxu0 0.0
        %1822 = vmatpush1.msra.mxu0 0.0
        %1823 = vmatprep.subr.mxu0 0.0
        %1824 = vmatpush1.msra.mxu0 0.0
        %1825 = vmatprep.subr.mxu0 0.0
        %1826 = vmatpush1.msra.mxu0 0.0
        %1827 = vmatprep.subr.mxu0 0.0
        %1828 = vmatpush1.msra.mxu0 0.0
        %1829 = vmatprep.subr.mxu0 0.0
        %1830 = vmatpush1.msra.mxu0 0.0
        %1831 = vmatprep.subr.mxu0 0.0
        %1832 = vmatpush1.msra.mxu0 0.0
        %1833 = vmatprep.subr.mxu0 0.0
        %1834 = vmatpush1.msra.mxu0 0.0
        %1835 = vmatprep.subr.mxu0 0.0
        %1836 = vmatpush1.msra.mxu0 0.0
        %1837 = vmatprep.subr.mxu0 0.0
        %1838 = vmatpush1.msra.mxu0 0.0
        %1839 = vmatprep.subr.mxu0 0.0
        %1840 = vmatpush1.msra.mxu0 0.0
        %1841 = vmatprep.subr.mxu0 0.0
        %1842 = vmatpush1.msra.mxu0 0.0
        %1843 = vmatprep.subr.mxu0 0.0
        %1844 = vmatpush1.msra.mxu0 %v1811
        %1845 = vmatprep.subr.mxu0 0.0
        %1846 = vmatpush2.msra.mxu0 0.0
        %1847 = vmatprep.subr.mxu0 0.0
        %1848 = vmatpush2.msra.mxu0 0.0
        %1849 = vmatprep.subr.mxu0 0.0
        %1850 = vmatpush2.msra.mxu0 0.0
        %1851 = vmatprep.subr.mxu0 0.0
        %1852 = vmatpush2.msra.mxu0 0.0
        %1853 = vmatprep.subr.mxu0 0.0
        %1854 = vmatpush2.msra.mxu0 0.0
        %1855 = vmatprep.subr.mxu0 0.0
        %1856 = vmatpush2.msra.mxu0 0.0
        %1857 = vmatprep.subr.mxu0 0.0
        %1858 = vmatpush2.msra.mxu0 0.0
        %1859 = vmatprep.subr.mxu0 0.0
        %1860 = vmatpush2.msra.mxu0 0.0
        %1861 = vmatprep.subr.mxu0 0.0
        %1862 = vmatpush2.msra.mxu0 0.0
        %1863 = vmatprep.subr.mxu0 0.0
        %1864 = vmatpush2.msra.mxu0 0.0
        %1865 = vmatprep.subr.mxu0 0.0
        %1866 = vmatpush2.msra.mxu0 0.0
        %1867 = vmatprep.subr.mxu0 0.0
        %1868 = vmatpush2.msra.mxu0 0.0
        %1869 = vmatprep.subr.mxu0 0.0
        %1870 = vmatpush2.msra.mxu0 0.0
        %1871 = vmatprep.subr.mxu0 0.0
        %1872 = vmatpush2.msra.mxu0 0.0
        %1873 = vmatprep.subr.mxu0 0.0
        %1874 = vmatpush2.msra.mxu0 0.0
        %1875 = vmatprep.subr.mxu0 0.0
        %1876 = vmatpush2.msra.mxu0 0.0
        %1877 = vmatprep.mubr.f32.mxu0 0.0
        %1878 = vmatmul.mubr.f32.gmra.mxu0 %v1808
        %v1879 = vpop.f32.mrf.mxu0
        %v1880 = vadd.f32 0.0, %v1879
        %v1881 = vpop.f32.mrf.mxu0
        %1882 = vdwg.mxu0
        %v1883 = vadd.f32 %v1762, %v1880
        %s1884 = scalar_lea.vmem [#allocation17], 16
        %v1885 = vld [vmem:[%s1884] sm:$0xff]
        %v1887 = vsel %vm1491, %v1804, 0
        %1889 = vmatprep.subr.mxu0 0.0
        %1890 = vmatpush1.msra.mxu0 0.0
        %1891 = vmatprep.subr.mxu0 0.0
        %1892 = vmatpush1.msra.mxu0 0.0
        %1893 = vmatprep.subr.mxu0 0.0
        %1894 = vmatpush1.msra.mxu0 0.0
        %1895 = vmatprep.subr.mxu0 0.0
        %1896 = vmatpush1.msra.mxu0 0.0
        %1897 = vmatprep.subr.mxu0 0.0
        %1898 = vmatpush1.msra.mxu0 0.0
        %1899 = vmatprep.subr.mxu0 0.0
        %1900 = vmatpush1.msra.mxu0 0.0
        %1901 = vmatprep.subr.mxu0 0.0
        %1902 = vmatpush1.msra.mxu0 0.0
        %1903 = vmatprep.subr.mxu0 0.0
        %1904 = vmatpush1.msra.mxu0 0.0
        %1905 = vmatprep.subr.mxu0 0.0
        %1906 = vmatpush1.msra.mxu0 0.0
        %1907 = vmatprep.subr.mxu0 0.0
        %1908 = vmatpush1.msra.mxu0 0.0
        %1909 = vmatprep.subr.mxu0 0.0
        %1910 = vmatpush1.msra.mxu0 0.0
        %1911 = vmatprep.subr.mxu0 0.0
        %1912 = vmatpush1.msra.mxu0 0.0
        %1913 = vmatprep.subr.mxu0 0.0
        %1914 = vmatpush1.msra.mxu0 0.0
        %1915 = vmatprep.subr.mxu0 0.0
        %1916 = vmatpush1.msra.mxu0 0.0
        %1917 = vmatprep.subr.mxu0 0.0
        %1918 = vmatpush1.msra.mxu0 0.0
        %1919 = vmatprep.subr.mxu0 0.0
        %1920 = vmatpush1.msra.mxu0 %v1885
        %1921 = vmatprep.subr.mxu0 0.0
        %1922 = vmatpush2.msra.mxu0 0.0
        %1923 = vmatprep.subr.mxu0 0.0
        %1924 = vmatpush2.msra.mxu0 0.0
        %1925 = vmatprep.subr.mxu0 0.0
        %1926 = vmatpush2.msra.mxu0 0.0
        %1927 = vmatprep.subr.mxu0 0.0
        %1928 = vmatpush2.msra.mxu0 0.0
        %1929 = vmatprep.subr.mxu0 0.0
        %1930 = vmatpush2.msra.mxu0 0.0
        %1931 = vmatprep.subr.mxu0 0.0
        %1932 = vmatpush2.msra.mxu0 0.0
        %1933 = vmatprep.subr.mxu0 0.0
        %1934 = vmatpush2.msra.mxu0 0.0
        %1935 = vmatprep.subr.mxu0 0.0
        %1936 = vmatpush2.msra.mxu0 0.0
        %1937 = vmatprep.subr.mxu0 0.0
        %1938 = vmatpush2.msra.mxu0 0.0
        %1939 = vmatprep.subr.mxu0 0.0
        %1940 = vmatpush2.msra.mxu0 0.0
        %1941 = vmatprep.subr.mxu0 0.0
        %1942 = vmatpush2.msra.mxu0 0.0
        %1943 = vmatprep.subr.mxu0 0.0
        %1944 = vmatpush2.msra.mxu0 0.0
        %1945 = vmatprep.subr.mxu0 0.0
        %1946 = vmatpush2.msra.mxu0 0.0
        %1947 = vmatprep.subr.mxu0 0.0
        %1948 = vmatpush2.msra.mxu0 0.0
        %1949 = vmatprep.subr.mxu0 0.0
        %1950 = vmatpush2.msra.mxu0 0.0
        %1951 = vmatprep.subr.mxu0 0.0
        %1952 = vmatpush2.msra.mxu0 0.0
        %1953 = vmatprep.mubr.f32.mxu0 0.0
        %1954 = vmatmul.mubr.f32.gmra.mxu0 %v1887
        %v1955 = vpop.f32.mrf.mxu0
        %v1956 = vadd.f32 0.0, %v1955
        %v1957 = vpop.f32.mrf.mxu0
        %1958 = vdwg.mxu0
        %v1959 = vadd.f32 %v1883, %v1956
        %1960 = vset.pattern.permute.xlu0 12
        %1961 = vperm.xlu0 %1960, %v964
        %v1962 = vpop.permute.xlu0 %1961
        %v1964 = vmul.f32 %v1962, %v1135
        %v1965 = vmul.f32 %v1962, %v712
        %1966 = vset.pattern.permute.xlu0 13
        %1967 = vperm.xlu0 %1966, %v964
        %v1968 = vpop.permute.xlu0 %1967
        %v1970 = vmul.f32 %v1968, %v1210
        %v1971 = vadd.f32 %v1964, %v1970
        %v1972 = vmul.f32 %v1968, %v712
        %1974 = vrot.lane.b32.xlu0 %v1972, 120
        %v1975 = vpop.permute.xlu0 %1974
        %v1977 = vadd.f32 %v1965, %v1975
        %1978 = vset.pattern.permute.xlu0 14
        %1979 = vperm.xlu0 %1978, %v964
        %v1980 = vpop.permute.xlu0 %1979
        %v1982 = vmul.f32 %v1980, %v1285
        %v1983 = vadd.f32 %v1971, %v1982
        %v1984 = vmul.f32 %v1980, %v712
        %1986 = vrot.lane.b32.xlu0 %v1984, 112
        %v1987 = vpop.permute.xlu0 %1986
        %v1989 = vadd.f32 %v1977, %v1987
        %1990 = vset.pattern.permute.xlu0 15
        %1991 = vperm.xlu0 %1990, %v964
        %v1992 = vpop.permute.xlu0 %1991
        %v1994 = vmul.f32 %v1992, %v1360
        %v1995 = vadd.f32 %v1983, %v1994
        %v1996 = vmul.f32 %v1992, %v712
        %1998 = vrot.lane.b32.xlu0 %v1996, 104
        %v1999 = vpop.permute.xlu0 %1998
        %v2001 = vadd.f32 %v1989, %v1999
        %s2002 = scalar_lea.vmem [#allocation16], 12
        %v2003 = vld [vmem:[%s2002] sm:$0xf]
        %v2005 = vsel %vm1058, %v1995, 0
        %v2008 = vsel %vm726, %v2003, 0
        %2010 = vmatprep.subr.mxu0 0.0
        %2011 = vmatpush1.msra.mxu0 0.0
        %2012 = vmatprep.subr.mxu0 0.0
        %2013 = vmatpush1.msra.mxu0 0.0
        %2014 = vmatprep.subr.mxu0 0.0
        %2015 = vmatpush1.msra.mxu0 0.0
        %2016 = vmatprep.subr.mxu0 0.0
        %2017 = vmatpush1.msra.mxu0 0.0
        %2018 = vmatprep.subr.mxu0 0.0
        %2019 = vmatpush1.msra.mxu0 0.0
        %2020 = vmatprep.subr.mxu0 0.0
        %2021 = vmatpush1.msra.mxu0 0.0
        %2022 = vmatprep.subr.mxu0 0.0
        %2023 = vmatpush1.msra.mxu0 0.0
        %2024 = vmatprep.subr.mxu0 0.0
        %2025 = vmatpush1.msra.mxu0 0.0
        %2026 = vmatprep.subr.mxu0 0.0
        %2027 = vmatpush1.msra.mxu0 0.0
        %2028 = vmatprep.subr.mxu0 0.0
        %2029 = vmatpush1.msra.mxu0 0.0
        %2030 = vmatprep.subr.mxu0 0.0
        %2031 = vmatpush1.msra.mxu0 0.0
        %2032 = vmatprep.subr.mxu0 0.0
        %2033 = vmatpush1.msra.mxu0 0.0
        %2034 = vmatprep.subr.mxu0 0.0
        %2035 = vmatpush1.msra.mxu0 0.0
        %2036 = vmatprep.subr.mxu0 0.0
        %2037 = vmatpush1.msra.mxu0 0.0
        %2038 = vmatprep.subr.mxu0 0.0
        %2039 = vmatpush1.msra.mxu0 0.0
        %2040 = vmatprep.subr.mxu0 0.0
        %2041 = vmatpush1.msra.mxu0 %v2008
        %2042 = vmatprep.subr.mxu0 0.0
        %2043 = vmatpush2.msra.mxu0 0.0
        %2044 = vmatprep.subr.mxu0 0.0
        %2045 = vmatpush2.msra.mxu0 0.0
        %2046 = vmatprep.subr.mxu0 0.0
        %2047 = vmatpush2.msra.mxu0 0.0
        %2048 = vmatprep.subr.mxu0 0.0
        %2049 = vmatpush2.msra.mxu0 0.0
        %2050 = vmatprep.subr.mxu0 0.0
        %2051 = vmatpush2.msra.mxu0 0.0
        %2052 = vmatprep.subr.mxu0 0.0
        %2053 = vmatpush2.msra.mxu0 0.0
        %2054 = vmatprep.subr.mxu0 0.0
        %2055 = vmatpush2.msra.mxu0 0.0
        %2056 = vmatprep.subr.mxu0 0.0
        %2057 = vmatpush2.msra.mxu0 0.0
        %2058 = vmatprep.subr.mxu0 0.0
        %2059 = vmatpush2.msra.mxu0 0.0
        %2060 = vmatprep.subr.mxu0 0.0
        %2061 = vmatpush2.msra.mxu0 0.0
        %2062 = vmatprep.subr.mxu0 0.0
        %2063 = vmatpush2.msra.mxu0 0.0
        %2064 = vmatprep.subr.mxu0 0.0
        %2065 = vmatpush2.msra.mxu0 0.0
        %2066 = vmatprep.subr.mxu0 0.0
        %2067 = vmatpush2.msra.mxu0 0.0
        %2068 = vmatprep.subr.mxu0 0.0
        %2069 = vmatpush2.msra.mxu0 0.0
        %2070 = vmatprep.subr.mxu0 0.0
        %2071 = vmatpush2.msra.mxu0 0.0
        %2072 = vmatprep.subr.mxu0 0.0
        %2073 = vmatpush2.msra.mxu0 0.0
        %2074 = vmatprep.mubr.f32.mxu0 0.0
        %2075 = vmatmul.mubr.f32.gmra.mxu0 %v2005
        %v2076 = vpop.f32.mrf.mxu0
        %v2077 = vadd.f32 0.0, %v2076
        %v2078 = vpop.f32.mrf.mxu0
        %2079 = vdwg.mxu0
        %v2080 = vadd.f32 %v1959, %v2077
        %s2081 = scalar_lea.vmem [#allocation17], 24
        %v2082 = vld [vmem:[%s2081] sm:$0xff]
        %v2084 = vsel %vm1491, %v2001, 0
        %2086 = vmatprep.subr.mxu0 0.0
        %2087 = vmatpush1.msra.mxu0 0.0
        %2088 = vmatprep.subr.mxu0 0.0
        %2089 = vmatpush1.msra.mxu0 0.0
        %2090 = vmatprep.subr.mxu0 0.0
        %2091 = vmatpush1.msra.mxu0 0.0
        %2092 = vmatprep.subr.mxu0 0.0
        %2093 = vmatpush1.msra.mxu0 0.0
        %2094 = vmatprep.subr.mxu0 0.0
        %2095 = vmatpush1.msra.mxu0 0.0
        %2096 = vmatprep.subr.mxu0 0.0
        %2097 = vmatpush1.msra.mxu0 0.0
        %2098 = vmatprep.subr.mxu0 0.0
        %2099 = vmatpush1.msra.mxu0 0.0
        %2100 = vmatprep.subr.mxu0 0.0
        %2101 = vmatpush1.msra.mxu0 0.0
        %2102 = vmatprep.subr.mxu0 0.0
        %2103 = vmatpush1.msra.mxu0 0.0
        %2104 = vmatprep.subr.mxu0 0.0
        %2105 = vmatpush1.msra.mxu0 0.0
        %2106 = vmatprep.subr.mxu0 0.0
        %2107 = vmatpush1.msra.mxu0 0.0
        %2108 = vmatprep.subr.mxu0 0.0
        %2109 = vmatpush1.msra.mxu0 0.0
        %2110 = vmatprep.subr.mxu0 0.0
        %2111 = vmatpush1.msra.mxu0 0.0
        %2112 = vmatprep.subr.mxu0 0.0
        %2113 = vmatpush1.msra.mxu0 0.0
        %2114 = vmatprep.subr.mxu0 0.0
        %2115 = vmatpush1.msra.mxu0 0.0
        %2116 = vmatprep.subr.mxu0 0.0
        %2117 = vmatpush1.msra.mxu0 %v2082
        %2118 = vmatprep.subr.mxu0 0.0
        %2119 = vmatpush2.msra.mxu0 0.0
        %2120 = vmatprep.subr.mxu0 0.0
        %2121 = vmatpush2.msra.mxu0 0.0
        %2122 = vmatprep.subr.mxu0 0.0
        %2123 = vmatpush2.msra.mxu0 0.0
        %2124 = vmatprep.subr.mxu0 0.0
        %2125 = vmatpush2.msra.mxu0 0.0
        %2126 = vmatprep.subr.mxu0 0.0
        %2127 = vmatpush2.msra.mxu0 0.0
        %2128 = vmatprep.subr.mxu0 0.0
        %2129 = vmatpush2.msra.mxu0 0.0
        %2130 = vmatprep.subr.mxu0 0.0
        %2131 = vmatpush2.msra.mxu0 0.0
        %2132 = vmatprep.subr.mxu0 0.0
        %2133 = vmatpush2.msra.mxu0 0.0
        %2134 = vmatprep.subr.mxu0 0.0
        %2135 = vmatpush2.msra.mxu0 0.0
        %2136 = vmatprep.subr.mxu0 0.0
        %2137 = vmatpush2.msra.mxu0 0.0
        %2138 = vmatprep.subr.mxu0 0.0
        %2139 = vmatpush2.msra.mxu0 0.0
        %2140 = vmatprep.subr.mxu0 0.0
        %2141 = vmatpush2.msra.mxu0 0.0
        %2142 = vmatprep.subr.mxu0 0.0
        %2143 = vmatpush2.msra.mxu0 0.0
        %2144 = vmatprep.subr.mxu0 0.0
        %2145 = vmatpush2.msra.mxu0 0.0
        %2146 = vmatprep.subr.mxu0 0.0
        %2147 = vmatpush2.msra.mxu0 0.0
        %2148 = vmatprep.subr.mxu0 0.0
        %2149 = vmatpush2.msra.mxu0 0.0
        %2150 = vmatprep.mubr.f32.mxu0 0.0
        %2151 = vmatmul.mubr.f32.gmra.mxu0 %v2084
        %v2152 = vpop.f32.mrf.mxu0
        %v2153 = vadd.f32 0.0, %v2152
        %v2154 = vpop.f32.mrf.mxu0
        %2155 = vdwg.mxu0
        %v2156 = vadd.f32 %v2080, %v2153
        %v2157 = vmax.f32 %v2156, 0.0
        %v2158 = vld [vmem:[%s15] sm:$0x1]
        %v2160 = vlaneseq
        %v2161 = vshrl.u32 %v2160, 7
        %v2162 = vsub.s32 0, %v2161
        %v2163 = vrot.slane %v2158, %v2162
        %v2165 = vmul.f32 %v2157, %v2163
        %v2166 = vld [vmem:[%s16] sm:$0x1]
        %v2168 = vlaneseq
        %v2169 = vshrl.u32 %v2168, 7
        %v2170 = vsub.s32 0, %v2169
        %v2171 = vrot.slane %v2166, %v2170
        %v2173 = vadd.f32 %v2165, %v2171
        %2174 = vst [vmem:[%s710] sm:$0xff] %v2173
        %s2175 = sand.u32 %s416, 1
        %s2176 = scalar_lea.sflag [#allocation4], %s2175
        %s2177 = sand.u32 %s416, 1
        %s2178 = smul.addr %s2177, 8
        %s2179 = scalar_lea.vmem [#allocation19], %s2178
        // Predicated region
        $region129: #{tpu_custom_call.1} parent=87 // pred_check
          %p2180 = pneg %p426
        $region130: #{tpu_custom_call.1} parent=87 // pred_check_branch
          %2182 = sbr.rel (%p2180) target = $region132
        $region131: #{tpu_custom_call.1} parent=87 // pred_region
          %s2184 = ssub.s32 128, 128
          %2185 = vsyncadd %s2176, %s2184
          %s2186 = smul.addr %s41, 128
          %s2187 = scalar_lea.hbm %s17, %s2186
          %s2189 = sshll.u32 %s2179, 4
          %s2190 = int_to_ptr.vmem [resolvable:$true] %s2189
          %2192 = dma.vmem_to_hbm [thread:$0]  %s2190, 128, %s2187, %s2176
        $region132: #{tpu_custom_call.1} parent=87 // pred_fallthru
          _
      $region88: #{tpu_custom_call.1} parent=5 // pred_fallthru
        _
      %p2193 = scmp.le.s32.totalorder 2, %s36
      // Predicated region
      $region133: #{tpu_custom_call.1} parent=5 // pred_check
        %p2194 = pneg %p2193
      $region134: #{tpu_custom_call.1} parent=5 // pred_check_branch
        %2196 = sbr.rel (%p2194) target = $region136
      $region135: #{tpu_custom_call.1} parent=5 // pred_region
        %s2197 = ssub.s32 %s36, 2
        // Predicated region
        $region137: #{tpu_custom_call.1} parent=135 // pred_check
          %p2198 = pneg %p432
        $region138: #{tpu_custom_call.1} parent=135 // pred_check_branch
          %2200 = sbr.rel (%p2198) target = $region140
        $region139: #{tpu_custom_call.1} parent=135 // pred_region
          %s2201 = sand.u32 %s417, 1
          %s2202 = scalar_lea.sflag [#allocation4], %s2201
          %s2203 = sand.u32 %s417, 1
          %s2204 = smul.addr %s2203, 8
          %s2205 = scalar_lea.vmem [#allocation19], %s2204
          %2206 = dma.done %s2202, 128
        $region140: #{tpu_custom_call.1} parent=135 // pred_fallthru
          _
      $region136: #{tpu_custom_call.1} parent=5 // pred_fallthru
        _
    $region6: #{tpu_custom_call.1} parent=1 // loop_footer
      %s40 = sadd.s32 1, %s36
    $region7: #{tpu_custom_call.1} parent=1 // loop_footer_branch
      %35 = sbr.rel target = $region3
    $region8: #{tpu_custom_call.1} parent=1 // loop_exit
      _
    %2207 = vsyncpa [#allocation3], 1
    %s2208 = scalar_lea.sflag [#allocation3], 1
    %2209 = vsyncpa %s2208, 1
    %2210 = vsyncpa [#allocation6], 1
    %s2211 = scalar_lea.sflag [#allocation6], 1
    %2212 = vsyncpa %s2211, 1
    %2213 = vsyncpa [#allocation9], 1
    %2214 = vsyncpa [#allocation12], 1
    %2215 = vsyncpa [#allocation15], 1
    %2216 = vsyncpa [#allocation18], 1
    %2217 = vsyncpa [#allocation4], 1
    %s2218 = scalar_lea.sflag [#allocation4], 1
    %2219 = vsyncpa %s2218, 1

// kernel: tpu_custom_call.1
$region0: #{tpu_custom_call.1}
  #allocation0 [shape = 'u32[]', space=smem, size = 0x4, offset = 0x4, fixed_abs, tag = 'smem constant byte address 0x4 - core index']
  #allocation1 [shape = 'u32[144,128]{1,0:T(1,128)}', space=vmem, size = 0x12000, scoped, tag = 'internal scratch']
  %s0 = inlined_call_operand.hbm [shape: f32[16,12], index: 0, kind: input, shape index: {}]
  %s1 = inlined_call_operand.hbm [shape: f32[16,128], index: 1, kind: input, shape index: {}]
  %s2 = inlined_call_operand.hbm [shape: f32[12,16], index: 2, kind: input, shape index: {}]
  %s3 = inlined_call_operand.vmem [shape: f32[1,16], index: 3, kind: input, shape index: {}]
  %s4 = inlined_call_operand.hbm [shape: f32[4,4], index: 4, kind: input, shape index: {}]
  %s5 = inlined_call_operand.vmem [shape: f32[1,4], index: 5, kind: input, shape index: {}]
  %s6 = inlined_call_operand.hbm [shape: f32[12,16], index: 6, kind: input, shape index: {}]
  %s7 = inlined_call_operand.hbm [shape: f32[1,16], index: 7, kind: input, shape index: {}]
  %s8 = inlined_call_operand.hbm [shape: f32[16,16], index: 8, kind: input, shape index: {}]
  %s9 = inlined_call_operand.hbm [shape: f32[1,16], index: 9, kind: input, shape index: {}]
  %s10 = inlined_call_operand.vmem [shape: f32[16,16], index: 10, kind: input, shape index: {}]
  %s11 = inlined_call_operand.vmem [shape: f32[1,16], index: 11, kind: input, shape index: {}]
  %s12 = inlined_call_operand.hbm [shape: f32[4,4,128], index: 12, kind: input, shape index: {}]
  %s13 = inlined_call_operand.hbm [shape: f32[4,8,128], index: 13, kind: input, shape index: {}]
  %s14 = inlined_call_operand.vmem [shape: f32[1,128], index: 14, kind: input, shape index: {}]
  %s15 = inlined_call_operand.vmem [shape: f32[1,128], index: 15, kind: input, shape index: {}]
  %s16 = inlined_call_operand.vmem [shape: f32[1,128], index: 16, kind: input, shape index: {}]
  %s17 = inlined_call_operand.hbm [shape: f32[16,128], index: 17, kind: output, shape index: {}]
  %s18 = sld [smem:[#allocation0]]
  $region141: #{tpu_custom_call.1} parent=0
    _
  %s20 = ssub.s32 1, %s18
  %s21 = scalar_select 0, %s20, %s18
  $region1: #{tpu_custom_call.1} parent=0
    #allocation2 [shape = 'u8[8192]{0}', space=vmem, size = 0x2000, scoped, tag = 'input window, operand 0']
    #allocation3 [shape = 's32[2]{0}', space=sflag, size = 0x8, scoped, tag = 'scoped memory for tpu_custom_call.1']
    #allocation4 [shape = 's32[2]{0}', space=sflag, size = 0x8, scoped, tag = 'scoped memory for tpu_custom_call.1']
    #allocation5 [shape = 'u8[8192]{0}', space=vmem, size = 0x2000, scoped, tag = 'input window, operand 1']
    #allocation6 [shape = 's32[2]{0}', space=sflag, size = 0x8, scoped, tag = 'scoped memory for tpu_custom_call.1']
    #allocation7 [shape = 'u8[8192]{0}', space=vmem, size = 0x2000, scoped, tag = 'input window, operand 2, single buffered']
    #allocation8 [shape = 'u8[2048]{0}', space=vmem, size = 0x800, scoped, tag = 'input window, operand 4, single buffered']
    #allocation9 [shape = 's32[1]{0}', space=sflag, size = 0x4, scoped, tag = 'scoped memory for tpu_custom_call.1']
    #allocation10 [shape = 'u8[8192]{0}', space=vmem, size = 0x2000, scoped, tag = 'input window, operand 6, single buffered']
    #allocation11 [shape = 'u8[512]{0}', space=vmem, size = 0x400, scoped, tag = 'input window, operand 7, single buffered']
    #allocation12 [shape = 's32[1]{0}', space=sflag, size = 0x4, scoped, tag = 'scoped memory for tpu_custom_call.1']
    #allocation13 [shape = 'u8[8192]{0}', space=vmem, size = 0x2000, scoped, tag = 'input window, operand 8, single buffered']
    #allocation14 [shape = 'u8[512]{0}', space=vmem, size = 0x400, scoped, tag = 'input window, operand 9, single buffered']
    #allocation15 [shape = 's32[1]{0}', space=sflag, size = 0x4, scoped, tag = 'scoped memory for tpu_custom_call.1']
    #allocation16 [shape = 'u8[8192]{0}', space=vmem, size = 0x2000, scoped, tag = 'input window, operand 12, single buffered']
    #allocation17 [shape = 'u8[16384]{0}', space=vmem, size = 0x4000, scoped, tag = 'input window, operand 13, single buffered']
    #allocation18 [shape = 's32[1]{0}', space=sflag, size = 0x4, scoped, tag = 'scoped memory for tpu_custom_call.1']
    #allocation19 [shape = 'u8[8192]{0}', space=vmem, size = 0x2000, scoped, tag = 'output window, operand 0']
    %22 = vsyncpa [#allocation3], 0
    %s23 = scalar_lea.sflag [#allocation3], 1
    %24 = vsyncpa %s23, 0
    %25 = vsyncpa [#allocation6], 0
    %s26 = scalar_lea.sflag [#allocation6], 1
    %27 = vsyncpa %s26, 0
    %28 = vsyncpa [#allocation9], 0
    %29 = vsyncpa [#allocation12], 0
    %30 = vsyncpa [#allocation15], 0
    %31 = vsyncpa [#allocation18], 0
    %32 = vsyncpa [#allocation4], 0
    %s33 = scalar_lea.sflag [#allocation4], 1
    %34 = vsyncpa %s33, 0
    loop: start=0, step=1, limit=4
    $region2: #{tpu_custom_call.1} parent=1 // loop_pre_header
      _
    $region3: #{tpu_custom_call.1} parent=1 // loop_header
      %s36 = sphi 0, %s40
      %p37 = scmp.ge.s32.totalorder %s36, 4
      %s46 = sphi 0, %s48
      %s49 = sphi 0, %s46
      %s50 = sphi 0, %s49
      %s66 = sphi 0, %s50
      %s72 = sphi 0, %s74
      %s75 = sphi 0, %s72
      %s76 = sphi 0, %s75
      %s92 = sphi 0, %s76
      %s96 = sphi 0, %s96
      %s98 = sphi 0, %s96
      %s99 = sphi 0, %s98
      %s113 = sphi 0, %s99
      %s117 = sphi 0, %s117
      %s119 = sphi 0, %s117
      %s120 = sphi 0, %s119
      %s134 = sphi 0, %s120
      %s138 = sphi 0, %s138
      %s140 = sphi 0, %s138
      %s141 = sphi 0, %s140
      %s155 = sphi 0, %s141
      %s159 = sphi 0, %s159
      %s161 = sphi 0, %s159
      %s162 = sphi 0, %s161
      %s176 = sphi 0, %s162
      %s180 = sphi 0, %s180
      %s182 = sphi 0, %s180
      %s183 = sphi 0, %s182
      %s197 = sphi 0, %s183
      %s201 = sphi 0, %s201
      %s203 = sphi 0, %s201
      %s204 = sphi 0, %s203
      %s218 = sphi 0, %s204
      %s222 = sphi 0, %s222
      %s224 = sphi 0, %s222
      %s225 = sphi 0, %s224
      %s239 = sphi 0, %s225
      %s243 = sphi 0, %s243
      %s245 = sphi 0, %s243
      %s246 = sphi 0, %s245
      %s260 = sphi 0, %s246
      %s264 = sphi 0, %s264
      %s266 = sphi 0, %s264
      %s267 = sphi 0, %s266
      %s281 = sphi 0, %s267
      %s285 = sphi 0, %s285
      %s287 = sphi 0, %s285
      %s288 = sphi 0, %s287
      %s302 = sphi 0, %s288
      %s306 = sphi 0, %s306
      %s308 = sphi 0, %s306
      %s309 = sphi 0, %s308
      %s323 = sphi 0, %s309
      %s327 = sphi 0, %s327
      %s329 = sphi 0, %s327
      %s330 = sphi 0, %s329
      %s344 = sphi 0, %s330
      %s348 = sphi 0, %s348
      %s350 = sphi 0, %s348
      %s351 = sphi 0, %s350
      %s365 = sphi 0, %s351
      %s369 = sphi 0, %s369
      %s371 = sphi 0, %s369
      %s372 = sphi 0, %s371
      %s386 = sphi 0, %s372
      %s390 = sphi 0, %s390
      %s392 = sphi 0, %s390
      %s393 = sphi 0, %s392
      %s407 = sphi 0, %s393
      %s413 = sphi 0, %s415
      %s416 = sphi 0, %s413
      %s417 = sphi 0, %s416
      %s433 = sphi 0, %s417
    $region4: #{tpu_custom_call.1} parent=1 // loop_header_branch
      %39 = sbr.rel (%p37) target = $region8
    $region5: #{tpu_custom_call.1} parent=1 // loop_body
      %s41 = ssub.s32 %s36, 1
      %s42 = ssub.s32 %s36, 2
      %s43 = sadd.s32 %s36, 1
      %s44 = ssub.s32 %s36, %s43
      %p45 = scmp.eq.s32.totalorder %s44, 0
      %s47 = sadd.s32 %s46, 1
      %s48 = scalar_select %p45, %s46, %s47
      %p51 = pneg %p45
      %p52 = scmp.eq.s32.totalorder %s36, 1
      %p53 = por %p51, %p52
      %p54 = scmp.ne.s32.totalorder %s46, %s49
      %p55 = scmp.eq.s32.totalorder %s36, 0
      %p56 = por %p54, %p55
      %p57 = scmp.ne.s32.totalorder %s46, %s49
      %p58 = scmp.eq.s32.totalorder %s41, 1
      %p59 = por %p57, %p58
      %p60 = scmp.ne.s32.totalorder %s49, %s50
      %p61 = scmp.eq.s32.totalorder %s41, 0
      %p62 = por %p60, %p61
      %p63 = scmp.ne.s32.totalorder %s49, %s50
      %p64 = scmp.eq.s32.totalorder %s42, 1
      %p65 = por %p63, %p64
      %p67 = scmp.ne.s32.totalorder %s50, %s66
      %p68 = scmp.eq.s32.totalorder %s42, 0
      %p69 = por %p67, %p68
      %s70 = ssub.s32 %s36, %s43
      %p71 = scmp.eq.s32.totalorder %s70, 0
      %s73 = sadd.s32 %s72, 1
      %s74 = scalar_select %p71, %s72, %s73
      %p77 = pneg %p71
      %p78 = scmp.eq.s32.totalorder %s36, 1
      %p79 = por %p77, %p78
      %p80 = scmp.ne.s32.totalorder %s72, %s75
      %p81 = scmp.eq.s32.totalorder %s36, 0
      %p82 = por %p80, %p81
      %p83 = scmp.ne.s32.totalorder %s72, %s75
      %p84 = scmp.eq.s32.totalorder %s41, 1
      %p85 = por %p83, %p84
      %p86 = scmp.ne.s32.totalorder %s75, %s76
      %p87 = scmp.eq.s32.totalorder %s41, 0
      %p88 = por %p86, %p87
      %p89 = scmp.ne.s32.totalorder %s75, %s76
      %p90 = scmp.eq.s32.totalorder %s42, 1
      %p91 = por %p89, %p90
      %p93 = scmp.ne.s32.totalorder %s76, %s92
      %p94 = scmp.eq.s32.totalorder %s42, 0
      %p95 = por %p93, %p94
      %s97 = sadd.s32 %s96, 1
      %p100 = scmp.eq.s32.totalorder %s36, 1
      %p101 = scmp.ne.s32.totalorder %s96, %s98
      %p102 = scmp.eq.s32.totalorder %s36, 0
      %p103 = por %p101, %p102
      %p104 = scmp.ne.s32.totalorder %s96, %s98
      %p105 = scmp.eq.s32.totalorder %s41, 1
      %p106 = por %p104, %p105
      %p107 = scmp.ne.s32.totalorder %s98, %s99
      %p108 = scmp.eq.s32.totalorder %s41, 0
      %p109 = por %p107, %p108
      %p110 = scmp.ne.s32.totalorder %s98, %s99
      %p111 = scmp.eq.s32.totalorder %s42, 1
      %p112 = por %p110, %p111
      %p114 = scmp.ne.s32.totalorder %s99, %s113
      %p115 = scmp.eq.s32.totalorder %s42, 0
      %p116 = por %p114, %p115
      %s118 = sadd.s32 %s117, 1
      %p121 = scmp.eq.s32.totalorder %s36, 1
      %p122 = scmp.ne.s32.totalorder %s117, %s119
      %p123 = scmp.eq.s32.totalorder %s36, 0
      %p124 = por %p122, %p123
      %p125 = scmp.ne.s32.totalorder %s117, %s119
      %p126 = scmp.eq.s32.totalorder %s41, 1
      %p127 = por %p125, %p126
      %p128 = scmp.ne.s32.totalorder %s119, %s120
      %p129 = scmp.eq.s32.totalorder %s41, 0
      %p130 = por %p128, %p129
      %p131 = scmp.ne.s32.totalorder %s119, %s120
      %p132 = scmp.eq.s32.totalorder %s42, 1
      %p133 = por %p131, %p132
      %p135 = scmp.ne.s32.totalorder %s120, %s134
      %p136 = scmp.eq.s32.totalorder %s42, 0
      %p137 = por %p135, %p136
      %s139 = sadd.s32 %s138, 1
      %p142 = scmp.eq.s32.totalorder %s36, 1
      %p143 = scmp.ne.s32.totalorder %s138, %s140
      %p144 = scmp.eq.s32.totalorder %s36, 0
      %p145 = por %p143, %p144
      %p146 = scmp.ne.s32.totalorder %s138, %s140
      %p147 = scmp.eq.s32.totalorder %s41, 1
      %p148 = por %p146, %p147
      %p149 = scmp.ne.s32.totalorder %s140, %s141
      %p150 = scmp.eq.s32.totalorder %s41, 0
      %p151 = por %p149, %p150
      %p152 = scmp.ne.s32.totalorder %s140, %s141
      %p153 = scmp.eq.s32.totalorder %s42, 1
      %p154 = por %p152, %p153
      %p156 = scmp.ne.s32.totalorder %s141, %s155
      %p157 = scmp.eq.s32.totalorder %s42, 0
      %p158 = por %p156, %p157
      %s160 = sadd.s32 %s159, 1
      %p163 = scmp.eq.s32.totalorder %s36, 1
      %p164 = scmp.ne.s32.totalorder %s159, %s161
      %p165 = scmp.eq.s32.totalorder %s36, 0
      %p166 = por %p164, %p165
      %p167 = scmp.ne.s32.totalorder %s159, %s161
      %p168 = scmp.eq.s32.totalorder %s41, 1
      %p169 = por %p167, %p168
      %p170 = scmp.ne.s32.totalorder %s161, %s162
      %p171 = scmp.eq.s32.totalorder %s41, 0
      %p172 = por %p170, %p171
      %p173 = scmp.ne.s32.totalorder %s161, %s162
      %p174 = scmp.eq.s32.totalorder %s42, 1
      %p175 = por %p173, %p174
      %p177 = scmp.ne.s32.totalorder %s162, %s176
      %p178 = scmp.eq.s32.totalorder %s42, 0
      %p179 = por %p177, %p178
      %s181 = sadd.s32 %s180, 1
      %p184 = scmp.eq.s32.totalorder %s36, 1
      %p185 = scmp.ne.s32.totalorder %s180, %s182
      %p186 = scmp.eq.s32.totalorder %s36, 0
      %p187 = por %p185, %p186
      %p188 = scmp.ne.s32.totalorder %s180, %s182
      %p189 = scmp.eq.s32.totalorder %s41, 1
      %p190 = por %p188, %p189
      %p191 = scmp.ne.s32.totalorder %s182, %s183
      %p192 = scmp.eq.s32.totalorder %s41, 0
      %p193 = por %p191, %p192
      %p194 = scmp.ne.s32.totalorder %s182, %s183
      %p195 = scmp.eq.s32.totalorder %s42, 1
      %p196 = por %p194, %p195
      %p198 = scmp.ne.s32.totalorder %s183, %s197
      %p199 = scmp.eq.s32.totalorder %s42, 0
      %p200 = por %p198, %p199
      %s202 = sadd.s32 %s201, 1
      %p205 = scmp.eq.s32.totalorder %s36, 1
      %p206 = scmp.ne.s32.totalorder %s201, %s203
      %p207 = scmp.eq.s32.totalorder %s36, 0
      %p208 = por %p206, %p207
      %p209 = scmp.ne.s32.totalorder %s201, %s203
      %p210 = scmp.eq.s32.totalorder %s41, 1
      %p211 = por %p209, %p210
      %p212 = scmp.ne.s32.totalorder %s203, %s204
      %p213 = scmp.eq.s32.totalorder %s41, 0
      %p214 = por %p212, %p213
      %p215 = scmp.ne.s32.totalorder %s203, %s204
      %p216 = scmp.eq.s32.totalorder %s42, 1
      %p217 = por %p215, %p216
      %p219 = scmp.ne.s32.totalorder %s204, %s218
      %p220 = scmp.eq.s32.totalorder %s42, 0
      %p221 = por %p219, %p220
      %s223 = sadd.s32 %s222, 1
      %p226 = scmp.eq.s32.totalorder %s36, 1
      %p227 = scmp.ne.s32.totalorder %s222, %s224
      %p228 = scmp.eq.s32.totalorder %s36, 0
      %p229 = por %p227, %p228
      %p230 = scmp.ne.s32.totalorder %s222, %s224
      %p231 = scmp.eq.s32.totalorder %s41, 1
      %p232 = por %p230, %p231
      %p233 = scmp.ne.s32.totalorder %s224, %s225
      %p234 = scmp.eq.s32.totalorder %s41, 0
      %p235 = por %p233, %p234
      %p236 = scmp.ne.s32.totalorder %s224, %s225
      %p237 = scmp.eq.s32.totalorder %s42, 1
      %p238 = por %p236, %p237
      %p240 = scmp.ne.s32.totalorder %s225, %s239
      %p241 = scmp.eq.s32.totalorder %s42, 0
      %p242 = por %p240, %p241
      %s244 = sadd.s32 %s243, 1
      %p247 = scmp.eq.s32.totalorder %s36, 1
      %p248 = scmp.ne.s32.totalorder %s243, %s245
      %p249 = scmp.eq.s32.totalorder %s36, 0
      %p250 = por %p248, %p249
      %p251 = scmp.ne.s32.totalorder %s243, %s245
      %p252 = scmp.eq.s32.totalorder %s41, 1
      %p253 = por %p251, %p252
      %p254 = scmp.ne.s32.totalorder %s245, %s246
      %p255 = scmp.eq.s32.totalorder %s41, 0
      %p256 = por %p254, %p255
      %p257 = scmp.ne.s32.totalorder %s245, %s246
      %p258 = scmp.eq.s32.totalorder %s42, 1
      %p259 = por %p257, %p258
      %p261 = scmp.ne.s32.totalorder %s246, %s260
      %p262 = scmp.eq.s32.totalorder %s42, 0
      %p263 = por %p261, %p262
      %s265 = sadd.s32 %s264, 1
      %p268 = scmp.eq.s32.totalorder %s36, 1
      %p269 = scmp.ne.s32.totalorder %s264, %s266
      %p270 = scmp.eq.s32.totalorder %s36, 0
      %p271 = por %p269, %p270
      %p272 = scmp.ne.s32.totalorder %s264, %s266
      %p273 = scmp.eq.s32.totalorder %s41, 1
      %p274 = por %p272, %p273
      %p275 = scmp.ne.s32.totalorder %s266, %s267
      %p276 = scmp.eq.s32.totalorder %s41, 0
      %p277 = por %p275, %p276
      %p278 = scmp.ne.s32.totalorder %s266, %s267
      %p279 = scmp.eq.s32.totalorder %s42, 1
      %p280 = por %p278, %p279
      %p282 = scmp.ne.s32.totalorder %s267, %s281
      %p283 = scmp.eq.s32.totalorder %s42, 0
      %p284 = por %p282, %p283
      %s286 = sadd.s32 %s285, 1
      %p289 = scmp.eq.s32.totalorder %s36, 1
      %p290 = scmp.ne.s32.totalorder %s285, %s287
      %p291 = scmp.eq.s32.totalorder %s36, 0
      %p292 = por %p290, %p291
      %p293 = scmp.ne.s32.totalorder %s285, %s287
      %p294 = scmp.eq.s32.totalorder %s41, 1
      %p295 = por %p293, %p294
      %p296 = scmp.ne.s32.totalorder %s287, %s288
      %p297 = scmp.eq.s32.totalorder %s41, 0
      %p298 = por %p296, %p297
      %p299 = scmp.ne.s32.totalorder %s287, %s288
      %p300 = scmp.eq.s32.totalorder %s42, 1
      %p301 = por %p299, %p300
      %p303 = scmp.ne.s32.totalorder %s288, %s302
      %p304 = scmp.eq.s32.totalorder %s42, 0
      %p305 = por %p303, %p304
      %s307 = sadd.s32 %s306, 1
      %p310 = scmp.eq.s32.totalorder %s36, 1
      %p311 = scmp.ne.s32.totalorder %s306, %s308
      %p312 = scmp.eq.s32.totalorder %s36, 0
      %p313 = por %p311, %p312
      %p314 = scmp.ne.s32.totalorder %s306, %s308
      %p315 = scmp.eq.s32.totalorder %s41, 1
      %p316 = por %p314, %p315
      %p317 = scmp.ne.s32.totalorder %s308, %s309
      %p318 = scmp.eq.s32.totalorder %s41, 0
      %p319 = por %p317, %p318
      %p320 = scmp.ne.s32.totalorder %s308, %s309
      %p321 = scmp.eq.s32.totalorder %s42, 1
      %p322 = por %p320, %p321
      %p324 = scmp.ne.s32.totalorder %s309, %s323
      %p325 = scmp.eq.s32.totalorder %s42, 0
      %p326 = por %p324, %p325
      %s328 = sadd.s32 %s327, 1
      %p331 = scmp.eq.s32.totalorder %s36, 1
      %p332 = scmp.ne.s32.totalorder %s327, %s329
      %p333 = scmp.eq.s32.totalorder %s36, 0
      %p334 = por %p332, %p333
      %p335 = scmp.ne.s32.totalorder %s327, %s329
      %p336 = scmp.eq.s32.totalorder %s41, 1
      %p337 = por %p335, %p336
      %p338 = scmp.ne.s32.totalorder %s329, %s330
      %p339 = scmp.eq.s32.totalorder %s41, 0
      %p340 = por %p338, %p339
      %p341 = scmp.ne.s32.totalorder %s329, %s330
      %p342 = scmp.eq.s32.totalorder %s42, 1
      %p343 = por %p341, %p342
      %p345 = scmp.ne.s32.totalorder %s330, %s344
      %p346 = scmp.eq.s32.totalorder %s42, 0
      %p347 = por %p345, %p346
      %s349 = sadd.s32 %s348, 1
      %p352 = scmp.eq.s32.totalorder %s36, 1
      %p353 = scmp.ne.s32.totalorder %s348, %s350
      %p354 = scmp.eq.s32.totalorder %s36, 0
      %p355 = por %p353, %p354
      %p356 = scmp.ne.s32.totalorder %s348, %s350
      %p357 = scmp.eq.s32.totalorder %s41, 1
      %p358 = por %p356, %p357
      %p359 = scmp.ne.s32.totalorder %s350, %s351
      %p360 = scmp.eq.s32.totalorder %s41, 0
      %p361 = por %p359, %p360
      %p362 = scmp.ne.s32.totalorder %s350, %s351
      %p363 = scmp.eq.s32.totalorder %s42, 1
      %p364 = por %p362, %p363
      %p366 = scmp.ne.s32.totalorder %s351, %s365
      %p367 = scmp.eq.s32.totalorder %s42, 0
      %p368 = por %p366, %p367
      %s370 = sadd.s32 %s369, 1
      %p373 = scmp.eq.s32.totalorder %s36, 1
      %p374 = scmp.ne.s32.totalorder %s369, %s371
      %p375 = scmp.eq.s32.totalorder %s36, 0
      %p376 = por %p374, %p375
      %p377 = scmp.ne.s32.totalorder %s369, %s371
      %p378 = scmp.eq.s32.totalorder %s41, 1
      %p379 = por %p377, %p378
      %p380 = scmp.ne.s32.totalorder %s371, %s372
      %p381 = scmp.eq.s32.totalorder %s41, 0
      %p382 = por %p380, %p381
      %p383 = scmp.ne.s32.totalorder %s371, %s372
      %p384 = scmp.eq.s32.totalorder %s42, 1
      %p385 = por %p383, %p384
      %p387 = scmp.ne.s32.totalorder %s372, %s386
      %p388 = scmp.eq.s32.totalorder %s42, 0
      %p389 = por %p387, %p388
      %s391 = sadd.s32 %s390, 1
      %p394 = scmp.eq.s32.totalorder %s36, 1
      %p395 = scmp.ne.s32.totalorder %s390, %s392
      %p396 = scmp.eq.s32.totalorder %s36, 0
      %p397 = por %p395, %p396
      %p398 = scmp.ne.s32.totalorder %s390, %s392
      %p399 = scmp.eq.s32.totalorder %s41, 1
      %p400 = por %p398, %p399
      %p401 = scmp.ne.s32.totalorder %s392, %s393
      %p402 = scmp.eq.s32.totalorder %s41, 0
      %p403 = por %p401, %p402
      %p404 = scmp.ne.s32.totalorder %s392, %s393
      %p405 = scmp.eq.s32.totalorder %s42, 1
      %p406 = por %p404, %p405
      %p408 = scmp.ne.s32.totalorder %s393, %s407
      %p409 = scmp.eq.s32.totalorder %s42, 0
      %p410 = por %p408, %p409
      %s411 = ssub.s32 %s36, %s43
      %p412 = scmp.eq.s32.totalorder %s411, 0
      %s414 = sadd.s32 %s413, 1
      %s415 = scalar_select %p412, %s413, %s414
      %p418 = pneg %p412
      %p419 = scmp.eq.s32.totalorder %s36, 1
      %p420 = por %p418, %p419
      %p421 = scmp.ne.s32.totalorder %s413, %s416
      %p422 = scmp.eq.s32.totalorder %s36, 0
      %p423 = por %p421, %p422
      %p424 = scmp.ne.s32.totalorder %s413, %s416
      %p425 = scmp.eq.s32.totalorder %s41, 1
      %p426 = por %p424, %p425
      %p427 = scmp.ne.s32.totalorder %s416, %s417
      %p428 = scmp.eq.s32.totalorder %s41, 0
      %p429 = por %p427, %p428
      %p430 = scmp.ne.s32.totalorder %s416, %s417
      %p431 = scmp.eq.s32.totalorder %s42, 1
      %p432 = por %p430, %p431
      %p434 = scmp.ne.s32.totalorder %s417, %s433
      %p435 = scmp.eq.s32.totalorder %s42, 0
      %p436 = por %p434, %p435
      %p437 = scmp.le.s32.totalorder 1, %s36
      %p438 = scmp.lt.s32.totalorder %s36, 3
      %p439 = pnand %p437, %p438
      %p440 = pneg %p439
      // Predicated region
      $region9: #{tpu_custom_call.1} parent=5 // pred_check
        _
      $region10: #{tpu_custom_call.1} parent=5 // pred_check_branch
        %442 = sbr.rel (%p439) target = $region12
      $region11: #{tpu_custom_call.1} parent=5 // pred_region
        %s443 = ssub.s32 %s36, 1
        // Predicated region
        $region13: #{tpu_custom_call.1} parent=11 // pred_check
          %p444 = pneg %p109
        $region14: #{tpu_custom_call.1} parent=11 // pred_check_branch
          %446 = sbr.rel (%p444) target = $region16
        $region15: #{tpu_custom_call.1} parent=11 // pred_region
          %s448 = ssub.s32 256, 256
          %449 = vsyncadd [#allocation6], %s448
          %s450 = sshll.u32 [#allocation7], 4
          %s451 = int_to_ptr.vmem [resolvable:$true] %s450
          %456 = dma.hbm_to_vmem [thread:$0]  %s2, 256, %s451, [#allocation6], 128, 128, 8
        $region16: #{tpu_custom_call.1} parent=11 // pred_fallthru
          _
        // Predicated region
        $region17: #{tpu_custom_call.1} parent=11 // pred_check
          %p457 = pneg %p130
        $region18: #{tpu_custom_call.1} parent=11 // pred_check_branch
          %459 = sbr.rel (%p457) target = $region20
        $region19: #{tpu_custom_call.1} parent=11 // pred_region
          _
        $region20: #{tpu_custom_call.1} parent=11 // pred_fallthru
          _
        // Predicated region
        $region21: #{tpu_custom_call.1} parent=11 // pred_check
          %p460 = pneg %p151
        $region22: #{tpu_custom_call.1} parent=11 // pred_check_branch
          %462 = sbr.rel (%p460) target = $region24
        $region23: #{tpu_custom_call.1} parent=11 // pred_region
          %s464 = ssub.s32 64, 64
          %465 = vsyncadd [#allocation9], %s464
          %s467 = sshll.u32 [#allocation8], 4
          %s468 = int_to_ptr.vmem [resolvable:$true] %s467
          %470 = dma.hbm_to_vmem [thread:$0]  %s4, 64, %s468, [#allocation9]
        $region24: #{tpu_custom_call.1} parent=11 // pred_fallthru
          _
        // Predicated region
        $region25: #{tpu_custom_call.1} parent=11 // pred_check
          %p471 = pneg %p172
        $region26: #{tpu_custom_call.1} parent=11 // pred_check_branch
          %473 = sbr.rel (%p471) target = $region28
        $region27: #{tpu_custom_call.1} parent=11 // pred_region
          _
        $region28: #{tpu_custom_call.1} parent=11 // pred_fallthru
          _
        // Predicated region
        $region29: #{tpu_custom_call.1} parent=11 // pred_check
          %p474 = pneg %p193
        $region30: #{tpu_custom_call.1} parent=11 // pred_check_branch
          %476 = sbr.rel (%p474) target = $region32
        $region31: #{tpu_custom_call.1} parent=11 // pred_region
          %s478 = ssub.s32 256, 256
          %479 = vsyncadd [#allocation9], %s478
          %s480 = sshll.u32 [#allocation10], 4
          %s481 = int_to_ptr.vmem [resolvable:$true] %s480
          %486 = dma.hbm_to_vmem [thread:$0]  %s6, 256, %s481, [#allocation9], 128, 128, 8
        $region32: #{tpu_custom_call.1} parent=11 // pred_fallthru
          _
        // Predicated region
        $region33: #{tpu_custom_call.1} parent=11 // pred_check
          %p487 = pneg %p214
        $region34: #{tpu_custom_call.1} parent=11 // pred_check_branch
          %489 = sbr.rel (%p487) target = $region36
        $region35: #{tpu_custom_call.1} parent=11 // pred_region
          %s491 = ssub.s32 16, 16
          %492 = vsyncadd [#allocation12], %s491
          %s494 = sshll.u32 [#allocation11], 4
          %s495 = int_to_ptr.vmem [resolvable:$true] %s494
          %497 = dma.hbm_to_vmem [thread:$0]  %s7, 16, %s495, [#allocation12]
        $region36: #{tpu_custom_call.1} parent=11 // pred_fallthru
          _
        // Predicated region
        $region37: #{tpu_custom_call.1} parent=11 // pred_check
          %p498 = pneg %p235
        $region38: #{tpu_custom_call.1} parent=11 // pred_check_branch
          %500 = sbr.rel (%p498) target = $region40
        $region39: #{tpu_custom_call.1} parent=11 // pred_region
          %s502 = ssub.s32 256, 256
          %503 = vsyncadd [#allocation12], %s502
          %s504 = sshll.u32 [#allocation13], 4
          %s505 = int_to_ptr.vmem [resolvable:$true] %s504
          %510 = dma.hbm_to_vmem [thread:$0]  %s8, 256, %s505, [#allocation12], 128, 128, 8
        $region40: #{tpu_custom_call.1} parent=11 // pred_fallthru
          _
        // Predicated region
        $region41: #{tpu_custom_call.1} parent=11 // pred_check
          %p511 = pneg %p256
        $region42: #{tpu_custom_call.1} parent=11 // pred_check_branch
          %513 = sbr.rel (%p511) target = $region44
        $region43: #{tpu_custom_call.1} parent=11 // pred_region
          %s515 = ssub.s32 16, 16
          %516 = vsyncadd [#allocation15], %s515
          %s518 = sshll.u32 [#allocation14], 4
          %s519 = int_to_ptr.vmem [resolvable:$true] %s518
          %521 = dma.hbm_to_vmem [thread:$0]  %s9, 16, %s519, [#allocation15]
        $region44: #{tpu_custom_call.1} parent=11 // pred_fallthru
          _
        // Predicated region
        $region45: #{tpu_custom_call.1} parent=11 // pred_check
          %p522 = pneg %p277
        $region46: #{tpu_custom_call.1} parent=11 // pred_check_branch
          %524 = sbr.rel (%p522) target = $region48
        $region47: #{tpu_custom_call.1} parent=11 // pred_region
          _
        $region48: #{tpu_custom_call.1} parent=11 // pred_fallthru
          _
        // Predicated region
        $region49: #{tpu_custom_call.1} parent=11 // pred_check
          %p525 = pneg %p298
        $region50: #{tpu_custom_call.1} parent=11 // pred_check_branch
          %527 = sbr.rel (%p525) target = $region52
        $region51: #{tpu_custom_call.1} parent=11 // pred_region
          _
        $region52: #{tpu_custom_call.1} parent=11 // pred_fallthru
          _
        // Predicated region
        $region53: #{tpu_custom_call.1} parent=11 // pred_check
          %p528 = pneg %p319
        $region54: #{tpu_custom_call.1} parent=11 // pred_check_branch
          %530 = sbr.rel (%p528) target = $region56
        $region55: #{tpu_custom_call.1} parent=11 // pred_region
          %s532 = ssub.s32 256, 256
          %533 = vsyncadd [#allocation15], %s532
          %s534 = sshll.u32 [#allocation16], 4
          %s535 = int_to_ptr.vmem [resolvable:$true] %s534
          %540 = dma.hbm_to_vmem [thread:$0]  %s12, 256, %s535, [#allocation15], 64, 64, 4
        $region56: #{tpu_custom_call.1} parent=11 // pred_fallthru
          _
        // Predicated region
        $region57: #{tpu_custom_call.1} parent=11 // pred_check
          %p541 = pneg %p340
        $region58: #{tpu_custom_call.1} parent=11 // pred_check_branch
          %543 = sbr.rel (%p541) target = $region60
        $region59: #{tpu_custom_call.1} parent=11 // pred_region
          %s545 = ssub.s32 512, 512
          %546 = vsyncadd [#allocation18], %s545
          %s547 = sshll.u32 [#allocation17], 4
          %s548 = int_to_ptr.vmem [resolvable:$true] %s547
          %553 = dma.hbm_to_vmem [thread:$0]  %s13, 512, %s548, [#allocation18], 128, 128, 8
        $region60: #{tpu_custom_call.1} parent=11 // pred_fallthru
          _
        // Predicated region
        $region61: #{tpu_custom_call.1} parent=11 // pred_check
          %p554 = pneg %p361
        $region62: #{tpu_custom_call.1} parent=11 // pred_check_branch
          %556 = sbr.rel (%p554) target = $region64
        $region63: #{tpu_custom_call.1} parent=11 // pred_region
          _
        $region64: #{tpu_custom_call.1} parent=11 // pred_fallthru
          _
        // Predicated region
        $region65: #{tpu_custom_call.1} parent=11 // pred_check
          %p557 = pneg %p382
        $region66: #{tpu_custom_call.1} parent=11 // pred_check_branch
          %559 = sbr.rel (%p557) target = $region68
        $region67: #{tpu_custom_call.1} parent=11 // pred_region
          _
        $region68: #{tpu_custom_call.1} parent=11 // pred_fallthru
          _
        // Predicated region
        $region69: #{tpu_custom_call.1} parent=11 // pred_check
          %p560 = pneg %p403
        $region70: #{tpu_custom_call.1} parent=11 // pred_check_branch
          %562 = sbr.rel (%p560) target = $region72
        $region71: #{tpu_custom_call.1} parent=11 // pred_region
          _
        $region72: #{tpu_custom_call.1} parent=11 // pred_fallthru
          _
      $region12: #{tpu_custom_call.1} parent=5 // pred_fallthru
        _
      %p563 = scmp.lt.s32.totalorder %s36, 2
      // Predicated region
      $region73: #{tpu_custom_call.1} parent=5 // pred_check
        %p564 = pneg %p563
      $region74: #{tpu_custom_call.1} parent=5 // pred_check_branch
        %566 = sbr.rel (%p564) target = $region76
      $region75: #{tpu_custom_call.1} parent=5 // pred_region
        // Predicated region
        $region77: #{tpu_custom_call.1} parent=75 // pred_check
          %p567 = pneg %p56
        $region78: #{tpu_custom_call.1} parent=75 // pred_check_branch
          %569 = sbr.rel (%p567) target = $region80
        $region79: #{tpu_custom_call.1} parent=75 // pred_region
          %s570 = sand.u32 %s46, 1
          %s571 = scalar_lea.sflag [#allocation3], %s570
          %s572 = sand.u32 %s46, 1
          %s573 = smul.addr %s572, 8
          %s574 = scalar_lea.vmem [#allocation2], %s573
          %s576 = ssub.s32 128, 128
          %577 = vsyncadd %s571, %s576
          %s578 = smul.addr %s36, 128
          %s579 = scalar_lea.hbm %s0, %s578
          %s581 = sshll.u32 %s574, 4
          %s582 = int_to_ptr.vmem [resolvable:$true] %s581
          %584 = dma.hbm_to_vmem [thread:$0]  %s579, 128, %s582, %s571
        $region80: #{tpu_custom_call.1} parent=75 // pred_fallthru
          _
        // Predicated region
        $region81: #{tpu_custom_call.1} parent=75 // pred_check
          %p585 = pneg %p82
        $region82: #{tpu_custom_call.1} parent=75 // pred_check_branch
          %587 = sbr.rel (%p585) target = $region84
        $region83: #{tpu_custom_call.1} parent=75 // pred_region
          %s588 = sand.u32 %s36, 1
          %s589 = scalar_lea.sflag [#allocation6], %s588
          %s590 = sand.u32 %s72, 1
          %s591 = smul.addr %s590, 8
          %s592 = scalar_lea.vmem [#allocation5], %s591
          %s594 = ssub.s32 128, 128
          %595 = vsyncadd %s589, %s594
          %s596 = smul.addr %s36, 128
          %s597 = scalar_lea.hbm %s1, %s596
          %s599 = sshll.u32 %s592, 4
          %s600 = int_to_ptr.vmem [resolvable:$true] %s599
          %602 = dma.hbm_to_vmem [thread:$0]  %s597, 128, %s600, %s589
        $region84: #{tpu_custom_call.1} parent=75 // pred_fallthru
          _
      $region76: #{tpu_custom_call.1} parent=5 // pred_fallthru
        _
      %p603 = scmp.le.s32.totalorder 1, %s36
      %p604 = scmp.lt.s32.totalorder %s36, 3
      %p605 = pnand %p603, %p604
      %p606 = pneg %p605
      // Predicated region
      $region85: #{tpu_custom_call.1} parent=5 // pred_check
        _
      $region86: #{tpu_custom_call.1} parent=5 // pred_check_branch
        %608 = sbr.rel (%p605) target = $region88
      $region87: #{tpu_custom_call.1} parent=5 // pred_region
        %s609 = ssub.s32 %s36, 1
        %s610 = sand.u32 %s49, 1
        %s611 = scalar_lea.sflag [#allocation3], %s610
        %s612 = sand.u32 %s49, 1
        %s613 = smul.addr %s612, 8
        %s614 = scalar_lea.vmem [#allocation2], %s613
        // Predicated region
        $region89: #{tpu_custom_call.1} parent=87 // pred_check
          %p615 = pneg %p62
        $region90: #{tpu_custom_call.1} parent=87 // pred_check_branch
          %617 = sbr.rel (%p615) target = $region92
        $region91: #{tpu_custom_call.1} parent=87 // pred_region
          %618 = dma.done %s611, 128
        $region92: #{tpu_custom_call.1} parent=87 // pred_fallthru
          _
        %s619 = sand.u32 %s41, 1
        %s620 = scalar_lea.sflag [#allocation6], %s619
        %s621 = sand.u32 %s75, 1
        %s622 = smul.addr %s621, 8
        %s623 = scalar_lea.vmem [#allocation5], %s622
        // Predicated region
        $region93: #{tpu_custom_call.1} parent=87 // pred_check
          %p624 = pneg %p88
        $region94: #{tpu_custom_call.1} parent=87 // pred_check_branch
          %626 = sbr.rel (%p624) target = $region96
        $region95: #{tpu_custom_call.1} parent=87 // pred_region
          %627 = dma.done %s620, 128
        $region96: #{tpu_custom_call.1} parent=87 // pred_fallthru
          _
        // Predicated region
        $region97: #{tpu_custom_call.1} parent=87 // pred_check
          %p628 = pneg %p109
        $region98: #{tpu_custom_call.1} parent=87 // pred_check_branch
          %630 = sbr.rel (%p628) target = $region100
        $region99: #{tpu_custom_call.1} parent=87 // pred_region
          %631 = dma.done [#allocation6], 256
        $region100: #{tpu_custom_call.1} parent=87 // pred_fallthru
          _
        // Predicated region
        $region101: #{tpu_custom_call.1} parent=87 // pred_check
          %p632 = pneg %p151
        $region102: #{tpu_custom_call.1} parent=87 // pred_check_branch
          %634 = sbr.rel (%p632) target = $region104
        $region103: #{tpu_custom_call.1} parent=87 // pred_region
          %635 = dma.done [#allocation9], 64
        $region104: #{tpu_custom_call.1} parent=87 // pred_fallthru
          _
        // Predicated region
        $region105: #{tpu_custom_call.1} parent=87 // pred_check
          %p636 = pneg %p193
        $region106: #{tpu_custom_call.1} parent=87 // pred_check_branch
          %638 = sbr.rel (%p636) target = $region108
        $region107: #{tpu_custom_call.1} parent=87 // pred_region
          %639 = dma.done [#allocation9], 256
        $region108: #{tpu_custom_call.1} parent=87 // pred_fallthru
          _
        // Predicated region
        $region109: #{tpu_custom_call.1} parent=87 // pred_check
          %p640 = pneg %p214
        $region110: #{tpu_custom_call.1} parent=87 // pred_check_branch
          %642 = sbr.rel (%p640) target = $region112
        $region111: #{tpu_custom_call.1} parent=87 // pred_region
          %643 = dma.done [#allocation12], 16
        $region112: #{tpu_custom_call.1} parent=87 // pred_fallthru
          _
        // Predicated region
        $region113: #{tpu_custom_call.1} parent=87 // pred_check
          %p644 = pneg %p235
        $region114: #{tpu_custom_call.1} parent=87 // pred_check_branch
          %646 = sbr.rel (%p644) target = $region116
        $region115: #{tpu_custom_call.1} parent=87 // pred_region
          %647 = dma.done [#allocation12], 256
        $region116: #{tpu_custom_call.1} parent=87 // pred_fallthru
          _
        // Predicated region
        $region117: #{tpu_custom_call.1} parent=87 // pred_check
          %p648 = pneg %p256
        $region118: #{tpu_custom_call.1} parent=87 // pred_check_branch
          %650 = sbr.rel (%p648) target = $region120
        $region119: #{tpu_custom_call.1} parent=87 // pred_region
          %651 = dma.done [#allocation15], 16
        $region120: #{tpu_custom_call.1} parent=87 // pred_fallthru
          _
        // Predicated region
        $region121: #{tpu_custom_call.1} parent=87 // pred_check
          %p652 = pneg %p319
        $region122: #{tpu_custom_call.1} parent=87 // pred_check_branch
          %654 = sbr.rel (%p652) target = $region124
        $region123: #{tpu_custom_call.1} parent=87 // pred_region
          %655 = dma.done [#allocation15], 256
        $region124: #{tpu_custom_call.1} parent=87 // pred_fallthru
          _
        // Predicated region
        $region125: #{tpu_custom_call.1} parent=87 // pred_check
          %p656 = pneg %p340
        $region126: #{tpu_custom_call.1} parent=87 // pred_check_branch
          %658 = sbr.rel (%p656) target = $region128
        $region127: #{tpu_custom_call.1} parent=87 // pred_region
          %659 = dma.done [#allocation18], 512
        $region128: #{tpu_custom_call.1} parent=87 // pred_fallthru
          _
        %s660 = sand.u32 %s49, 1
        %s661 = scalar_lea.sflag [#allocation3], %s660
        %s662 = sand.u32 %s49, 1
        %s663 = smul.addr %s662, 8
        %s664 = scalar_lea.vmem [#allocation2], %s663
        %p665 = pneg %p62
        %p666 = pneg %p59
        %s667 = sand.u32 %s41, 1
        %s668 = scalar_lea.sflag [#allocation6], %s667
        %s669 = sand.u32 %s75, 1
        %s670 = smul.addr %s669, 8
        %s671 = scalar_lea.vmem [#allocation5], %s670
        %p672 = pneg %p88
        %p673 = pneg %p85
        %p674 = pneg %p109
        %p675 = pneg %p106
        %p676 = pneg %p130
        %p677 = pneg %p127
        %p678 = pneg %p151
        %p679 = pneg %p148
        %p680 = pneg %p172
        %p681 = pneg %p169
        %p682 = pneg %p193
        %p683 = pneg %p190
        %p684 = pneg %p214
        %p685 = pneg %p211
        %p686 = pneg %p235
        %p687 = pneg %p232
        %p688 = pneg %p256
        %p689 = pneg %p253
        %p690 = pneg %p277
        %p691 = pneg %p274
        %p692 = pneg %p298
        %p693 = pneg %p295
        %p694 = pneg %p319
        %p695 = pneg %p316
        %p696 = pneg %p340
        %p697 = pneg %p337
        %p698 = pneg %p361
        %p699 = pneg %p358
        %p700 = pneg %p382
        %p701 = pneg %p379
        %p702 = pneg %p403
        %p703 = pneg %p400
        %p704 = pneg %p429
        %p705 = pneg %p426
        %s706 = sand.u32 %s416, 1
        %s707 = scalar_lea.sflag [#allocation4], %s706
        %s708 = sand.u32 %s416, 1
        %s709 = smul.addr %s708, 8
        %s710 = scalar_lea.vmem [#allocation19], %s709
        %v711 = vld [vmem:[%s614] sm:$0xff]
        %v712 = vld [vmem:[%s623] sm:$0xff]
        %v713 = vld [vmem:[#allocation10] sm:$0xff]
        %v714 = vld [vmem:[#allocation10 + $0x8] sm:$0xf]
        %v715 = vld [vmem:[#allocation11] sm:$0x1]
        %v717 = vlaneseq
        %v718 = vshrl.u32 %v717, 7
        %v719 = vsub.s32 0, %v718
        %v720 = vrot.slane %v715, %v719
        %vm722 = vcmask 97280
        %v724 = vsel %vm722, %v711, 0
        %vm726 = vcmask 1043456
        %v728 = vsel %vm726, %v714, 0
        %730 = vmatprep.subr.mxu0 0.0
        %731 = vmatpush1.msra.mxu0 0.0
        %732 = vmatprep.subr.mxu0 0.0
        %733 = vmatpush1.msra.mxu0 0.0
        %734 = vmatprep.subr.mxu0 0.0
        %735 = vmatpush1.msra.mxu0 0.0
        %736 = vmatprep.subr.mxu0 0.0
        %737 = vmatpush1.msra.mxu0 0.0
        %738 = vmatprep.subr.mxu0 0.0
        %739 = vmatpush1.msra.mxu0 0.0
        %740 = vmatprep.subr.mxu0 0.0
        %741 = vmatpush1.msra.mxu0 0.0
        %742 = vmatprep.subr.mxu0 0.0
        %743 = vmatpush1.msra.mxu0 0.0
        %744 = vmatprep.subr.mxu0 0.0
        %745 = vmatpush1.msra.mxu0 0.0
        %746 = vmatprep.subr.mxu0 0.0
        %747 = vmatpush1.msra.mxu0 0.0
        %748 = vmatprep.subr.mxu0 0.0
        %749 = vmatpush1.msra.mxu0 0.0
        %750 = vmatprep.subr.mxu0 0.0
        %751 = vmatpush1.msra.mxu0 0.0
        %752 = vmatprep.subr.mxu0 0.0
        %753 = vmatpush1.msra.mxu0 0.0
        %754 = vmatprep.subr.mxu0 0.0
        %755 = vmatpush1.msra.mxu0 0.0
        %756 = vmatprep.subr.mxu0 0.0
        %757 = vmatpush1.msra.mxu0 0.0
        %758 = vmatprep.subr.mxu0 0.0
        %759 = vmatpush1.msra.mxu0 %v728
        %760 = vmatprep.subr.mxu0 0.0
        %761 = vmatpush1.msra.mxu0 %v713
        %762 = vmatprep.subr.mxu0 0.0
        %763 = vmatpush2.msra.mxu0 0.0
        %764 = vmatprep.subr.mxu0 0.0
        %765 = vmatpush2.msra.mxu0 0.0
        %766 = vmatprep.subr.mxu0 0.0
        %767 = vmatpush2.msra.mxu0 0.0
        %768 = vmatprep.subr.mxu0 0.0
        %769 = vmatpush2.msra.mxu0 0.0
        %770 = vmatprep.subr.mxu0 0.0
        %771 = vmatpush2.msra.mxu0 0.0
        %772 = vmatprep.subr.mxu0 0.0
        %773 = vmatpush2.msra.mxu0 0.0
        %774 = vmatprep.subr.mxu0 0.0
        %775 = vmatpush2.msra.mxu0 0.0
        %776 = vmatprep.subr.mxu0 0.0
        %777 = vmatpush2.msra.mxu0 0.0
        %778 = vmatprep.subr.mxu0 0.0
        %779 = vmatpush2.msra.mxu0 0.0
        %780 = vmatprep.subr.mxu0 0.0
        %781 = vmatpush2.msra.mxu0 0.0
        %782 = vmatprep.subr.mxu0 0.0
        %783 = vmatpush2.msra.mxu0 0.0
        %784 = vmatprep.subr.mxu0 0.0
        %785 = vmatpush2.msra.mxu0 0.0
        %786 = vmatprep.subr.mxu0 0.0
        %787 = vmatpush2.msra.mxu0 0.0
        %788 = vmatprep.subr.mxu0 0.0
        %789 = vmatpush2.msra.mxu0 0.0
        %790 = vmatprep.subr.mxu0 0.0
        %791 = vmatpush2.msra.mxu0 0.0
        %792 = vmatprep.subr.mxu0 0.0
        %793 = vmatpush2.msra.mxu0 0.0
        %794 = vmatprep.mubr.f32.mxu0 0.0
        %795 = vmatmul.mubr.f32.gmra.mxu0 %v724
        %v796 = vpop.f32.mrf.mxu0
        %v797 = vadd.f32 %v720, %v796
        %v798 = vpop.f32.mrf.mxu0
        %799 = vdwg.mxu0
        %v800 = vmax.f32 %v797, 0.0
        %v801 = vld [vmem:[#allocation13] sm:$0xff]
        %v802 = vld [vmem:[#allocation13 + $0x8] sm:$0xff]
        %v803 = vld [vmem:[#allocation14] sm:$0x1]
        %v805 = vlaneseq
        %v806 = vshrl.u32 %v805, 7
        %v807 = vsub.s32 0, %v806
        %v808 = vrot.slane %v803, %v807
        %vm810 = vcmask 130048
        %v812 = vsel %vm810, %v800, 0
        %814 = vmatprep.subr.mxu0 0.0
        %815 = vmatpush1.msra.mxu0 0.0
        %816 = vmatprep.subr.mxu0 0.0
        %817 = vmatpush1.msra.mxu0 0.0
        %818 = vmatprep.subr.mxu0 0.0
        %819 = vmatpush1.msra.mxu0 0.0
        %820 = vmatprep.subr.mxu0 0.0
        %821 = vmatpush1.msra.mxu0 0.0
        %822 = vmatprep.subr.mxu0 0.0
        %823 = vmatpush1.msra.mxu0 0.0
        %824 = vmatprep.subr.mxu0 0.0
        %825 = vmatpush1.msra.mxu0 0.0
        %826 = vmatprep.subr.mxu0 0.0
        %827 = vmatpush1.msra.mxu0 0.0
        %828 = vmatprep.subr.mxu0 0.0
        %829 = vmatpush1.msra.mxu0 0.0
        %830 = vmatprep.subr.mxu0 0.0
        %831 = vmatpush1.msra.mxu0 0.0
        %832 = vmatprep.subr.mxu0 0.0
        %833 = vmatpush1.msra.mxu0 0.0
        %834 = vmatprep.subr.mxu0 0.0
        %835 = vmatpush1.msra.mxu0 0.0
        %836 = vmatprep.subr.mxu0 0.0
        %837 = vmatpush1.msra.mxu0 0.0
        %838 = vmatprep.subr.mxu0 0.0
        %839 = vmatpush1.msra.mxu0 0.0
        %840 = vmatprep.subr.mxu0 0.0
        %841 = vmatpush1.msra.mxu0 0.0
        %842 = vmatprep.subr.mxu0 0.0
        %843 = vmatpush1.msra.mxu0 %v802
        %844 = vmatprep.subr.mxu0 0.0
        %845 = vmatpush1.msra.mxu0 %v801
        %846 = vmatprep.subr.mxu0 0.0
        %847 = vmatpush2.msra.mxu0 0.0
        %848 = vmatprep.subr.mxu0 0.0
        %849 = vmatpush2.msra.mxu0 0.0
        %850 = vmatprep.subr.mxu0 0.0
        %851 = vmatpush2.msra.mxu0 0.0
        %852 = vmatprep.subr.mxu0 0.0
        %853 = vmatpush2.msra.mxu0 0.0
        %854 = vmatprep.subr.mxu0 0.0
        %855 = vmatpush2.msra.mxu0 0.0
        %856 = vmatprep.subr.mxu0 0.0
        %857 = vmatpush2.msra.mxu0 0.0
        %858 = vmatprep.subr.mxu0 0.0
        %859 = vmatpush2.msra.mxu0 0.0
        %860 = vmatprep.subr.mxu0 0.0
        %861 = vmatpush2.msra.mxu0 0.0
        %862 = vmatprep.subr.mxu0 0.0
        %863 = vmatpush2.msra.mxu0 0.0
        %864 = vmatprep.subr.mxu0 0.0
        %865 = vmatpush2.msra.mxu0 0.0
        %866 = vmatprep.subr.mxu0 0.0
        %867 = vmatpush2.msra.mxu0 0.0
        %868 = vmatprep.subr.mxu0 0.0
        %869 = vmatpush2.msra.mxu0 0.0
        %870 = vmatprep.subr.mxu0 0.0
        %871 = vmatpush2.msra.mxu0 0.0
        %872 = vmatprep.subr.mxu0 0.0
        %873 = vmatpush2.msra.mxu0 0.0
        %874 = vmatprep.subr.mxu0 0.0
        %875 = vmatpush2.msra.mxu0 0.0
        %876 = vmatprep.subr.mxu0 0.0
        %877 = vmatpush2.msra.mxu0 0.0
        %878 = vmatprep.mubr.f32.mxu0 0.0
        %879 = vmatmul.mubr.f32.gmra.mxu0 %v812
        %v880 = vpop.f32.mrf.mxu0
        %v881 = vadd.f32 %v808, %v880
        %v882 = vpop.f32.mrf.mxu0
        %883 = vdwg.mxu0
        %v884 = vmax.f32 %v881, 0.0
        %v885 = vld [vmem:[%s10] sm:$0xff]
        %v886 = vld [vmem:[%s10 + $0x8] sm:$0xff]
        %v887 = vld [vmem:[%s11] sm:$0x1]
        %v889 = vlaneseq
        %v890 = vshrl.u32 %v889, 7
        %v891 = vsub.s32 0, %v890
        %v892 = vrot.slane %v887, %v891
        %v895 = vsel %vm810, %v884, 0
        %897 = vmatprep.subr.mxu0 0.0
        %898 = vmatpush1.msra.mxu0 0.0
        %899 = vmatprep.subr.mxu0 0.0
        %900 = vmatpush1.msra.mxu0 0.0
        %901 = vmatprep.subr.mxu0 0.0
        %902 = vmatpush1.msra.mxu0 0.0
        %903 = vmatprep.subr.mxu0 0.0
        %904 = vmatpush1.msra.mxu0 0.0
        %905 = vmatprep.subr.mxu0 0.0
        %906 = vmatpush1.msra.mxu0 0.0
        %907 = vmatprep.subr.mxu0 0.0
        %908 = vmatpush1.msra.mxu0 0.0
        %909 = vmatprep.subr.mxu0 0.0
        %910 = vmatpush1.msra.mxu0 0.0
        %911 = vmatprep.subr.mxu0 0.0
        %912 = vmatpush1.msra.mxu0 0.0
        %913 = vmatprep.subr.mxu0 0.0
        %914 = vmatpush1.msra.mxu0 0.0
        %915 = vmatprep.subr.mxu0 0.0
        %916 = vmatpush1.msra.mxu0 0.0
        %917 = vmatprep.subr.mxu0 0.0
        %918 = vmatpush1.msra.mxu0 0.0
        %919 = vmatprep.subr.mxu0 0.0
        %920 = vmatpush1.msra.mxu0 0.0
        %921 = vmatprep.subr.mxu0 0.0
        %922 = vmatpush1.msra.mxu0 0.0
        %923 = vmatprep.subr.mxu0 0.0
        %924 = vmatpush1.msra.mxu0 0.0
        %925 = vmatprep.subr.mxu0 0.0
        %926 = vmatpush1.msra.mxu0 %v886
        %927 = vmatprep.subr.mxu0 0.0
        %928 = vmatpush1.msra.mxu0 %v885
        %929 = vmatprep.subr.mxu0 0.0
        %930 = vmatpush2.msra.mxu0 0.0
        %931 = vmatprep.subr.mxu0 0.0
        %932 = vmatpush2.msra.mxu0 0.0
        %933 = vmatprep.subr.mxu0 0.0
        %934 = vmatpush2.msra.mxu0 0.0
        %935 = vmatprep.subr.mxu0 0.0
        %936 = vmatpush2.msra.mxu0 0.0
        %937 = vmatprep.subr.mxu0 0.0
        %938 = vmatpush2.msra.mxu0 0.0
        %939 = vmatprep.subr.mxu0 0.0
        %940 = vmatpush2.msra.mxu0 0.0
        %941 = vmatprep.subr.mxu0 0.0
        %942 = vmatpush2.msra.mxu0 0.0
        %943 = vmatprep.subr.mxu0 0.0
        %944 = vmatpush2.msra.mxu0 0.0
        %945 = vmatprep.subr.mxu0 0.0
        %946 = vmatpush2.msra.mxu0 0.0
        %947 = vmatprep.subr.mxu0 0.0
        %948 = vmatpush2.msra.mxu0 0.0
        %949 = vmatprep.subr.mxu0 0.0
        %950 = vmatpush2.msra.mxu0 0.0
        %951 = vmatprep.subr.mxu0 0.0
        %952 = vmatpush2.msra.mxu0 0.0
        %953 = vmatprep.subr.mxu0 0.0
        %954 = vmatpush2.msra.mxu0 0.0
        %955 = vmatprep.subr.mxu0 0.0
        %956 = vmatpush2.msra.mxu0 0.0
        %957 = vmatprep.subr.mxu0 0.0
        %958 = vmatpush2.msra.mxu0 0.0
        %959 = vmatprep.subr.mxu0 0.0
        %960 = vmatpush2.msra.mxu0 0.0
        %961 = vmatprep.mubr.f32.mxu0 0.0
        %962 = vmatmul.mubr.f32.gmra.mxu0 %v895
        %v963 = vpop.f32.mrf.mxu0
        %v964 = vadd.f32 %v892, %v963
        %v965 = vpop.f32.mrf.mxu0
        %966 = vdwg.mxu0
        %v967 = vld [vmem:[#allocation7] sm:$0xff]
        %v968 = vld [vmem:[#allocation7 + $0x8] sm:$0xf]
        %v969 = vld [vmem:[%s3] sm:$0x1]
        %v971 = vlaneseq
        %v972 = vshrl.u32 %v971, 7
        %v973 = vsub.s32 0, %v972
        %v974 = vrot.slane %v969, %v973
        %v977 = vsel %vm726, %v968, 0
        %979 = vmatprep.subr.mxu0 0.0
        %980 = vmatpush1.msra.mxu0 0.0
        %981 = vmatprep.subr.mxu0 0.0
        %982 = vmatpush1.msra.mxu0 0.0
        %983 = vmatprep.subr.mxu0 0.0
        %984 = vmatpush1.msra.mxu0 0.0
        %985 = vmatprep.subr.mxu0 0.0
        %986 = vmatpush1.msra.mxu0 0.0
        %987 = vmatprep.subr.mxu0 0.0
        %988 = vmatpush1.msra.mxu0 0.0
        %989 = vmatprep.subr.mxu0 0.0
        %990 = vmatpush1.msra.mxu0 0.0
        %991 = vmatprep.subr.mxu0 0.0
        %992 = vmatpush1.msra.mxu0 0.0
        %993 = vmatprep.subr.mxu0 0.0
        %994 = vmatpush1.msra.mxu0 0.0
        %995 = vmatprep.subr.mxu0 0.0
        %996 = vmatpush1.msra.mxu0 0.0
        %997 = vmatprep.subr.mxu0 0.0
        %998 = vmatpush1.msra.mxu0 0.0
        %999 = vmatprep.subr.mxu0 0.0
        %1000 = vmatpush1.msra.mxu0 0.0
        %1001 = vmatprep.subr.mxu0 0.0
        %1002 = vmatpush1.msra.mxu0 0.0
        %1003 = vmatprep.subr.mxu0 0.0
        %1004 = vmatpush1.msra.mxu0 0.0
        %1005 = vmatprep.subr.mxu0 0.0
        %1006 = vmatpush1.msra.mxu0 0.0
        %1007 = vmatprep.subr.mxu0 0.0
        %1008 = vmatpush1.msra.mxu0 %v977
        %1009 = vmatprep.subr.mxu0 0.0
        %1010 = vmatpush1.msra.mxu0 %v967
        %1011 = vmatprep.subr.mxu0 0.0
        %1012 = vmatpush2.msra.mxu0 0.0
        %1013 = vmatprep.subr.mxu0 0.0
        %1014 = vmatpush2.msra.mxu0 0.0
        %1015 = vmatprep.subr.mxu0 0.0
        %1016 = vmatpush2.msra.mxu0 0.0
        %1017 = vmatprep.subr.mxu0 0.0
        %1018 = vmatpush2.msra.mxu0 0.0
        %1019 = vmatprep.subr.mxu0 0.0
        %1020 = vmatpush2.msra.mxu0 0.0
        %1021 = vmatprep.subr.mxu0 0.0
        %1022 = vmatpush2.msra.mxu0 0.0
        %1023 = vmatprep.subr.mxu0 0.0
        %1024 = vmatpush2.msra.mxu0 0.0
        %1025 = vmatprep.subr.mxu0 0.0
        %1026 = vmatpush2.msra.mxu0 0.0
        %1027 = vmatprep.subr.mxu0 0.0
        %1028 = vmatpush2.msra.mxu0 0.0
        %1029 = vmatprep.subr.mxu0 0.0
        %1030 = vmatpush2.msra.mxu0 0.0
        %1031 = vmatprep.subr.mxu0 0.0
        %1032 = vmatpush2.msra.mxu0 0.0
        %1033 = vmatprep.subr.mxu0 0.0
        %1034 = vmatpush2.msra.mxu0 0.0
        %1035 = vmatprep.subr.mxu0 0.0
        %1036 = vmatpush2.msra.mxu0 0.0
        %1037 = vmatprep.subr.mxu0 0.0
        %1038 = vmatpush2.msra.mxu0 0.0
        %1039 = vmatprep.subr.mxu0 0.0
        %1040 = vmatpush2.msra.mxu0 0.0
        %1041 = vmatprep.subr.mxu0 0.0
        %1042 = vmatpush2.msra.mxu0 0.0
        %1043 = vmatprep.mubr.f32.mxu0 0.0
        %1044 = vmatmul.mubr.f32.gmra.mxu0 %v724
        %v1045 = vpop.f32.mrf.mxu0
        %v1046 = vadd.f32 %v974, %v1045
        %v1047 = vpop.f32.mrf.mxu0
        %1048 = vdwg.mxu0
        %v1049 = vmax.f32 %v1046, 0.0
        %v1050 = vld [vmem:[#allocation8] sm:$0xf]
        %v1051 = vld [vmem:[%s5] sm:$0x1]
        %v1053 = vlaneseq
        %v1054 = vshrl.u32 %v1053, 7
        %v1055 = vsub.s32 0, %v1054
        %v1056 = vrot.slane %v1051, %v1055
        %vm1058 = vcmask 31744
        %v1060 = vsel %vm1058, %v1049, 0
        %v1063 = vsel %vm726, %v1050, 0
        %1065 = vmatprep.subr.mxu0 0.0
        %1066 = vmatpush1.msra.mxu0 0.0
        %1067 = vmatprep.subr.mxu0 0.0
        %1068 = vmatpush1.msra.mxu0 0.0
        %1069 = vmatprep.subr.mxu0 0.0
        %1070 = vmatpush1.msra.mxu0 0.0
        %1071 = vmatprep.subr.mxu0 0.0
        %1072 = vmatpush1.msra.mxu0 0.0
        %1073 = vmatprep.subr.mxu0 0.0
        %1074 = vmatpush1.msra.mxu0 0.0
        %1075 = vmatprep.subr.mxu0 0.0
        %1076 = vmatpush1.msra.mxu0 0.0
        %1077 = vmatprep.subr.mxu0 0.0
        %1078 = vmatpush1.msra.mxu0 0.0
        %1079 = vmatprep.subr.mxu0 0.0
        %1080 = vmatpush1.msra.mxu0 0.0
        %1081 = vmatprep.subr.mxu0 0.0
        %1082 = vmatpush1.msra.mxu0 0.0
        %1083 = vmatprep.subr.mxu0 0.0
        %1084 = vmatpush1.msra.mxu0 0.0
        %1085 = vmatprep.subr.mxu0 0.0
        %1086 = vmatpush1.msra.mxu0 0.0
        %1087 = vmatprep.subr.mxu0 0.0
        %1088 = vmatpush1.msra.mxu0 0.0
        %1089 = vmatprep.subr.mxu0 0.0
        %1090 = vmatpush1.msra.mxu0 0.0
        %1091 = vmatprep.subr.mxu0 0.0
        %1092 = vmatpush1.msra.mxu0 0.0
        %1093 = vmatprep.subr.mxu0 0.0
        %1094 = vmatpush1.msra.mxu0 0.0
        %1095 = vmatprep.subr.mxu0 0.0
        %1096 = vmatpush1.msra.mxu0 %v1063
        %1097 = vmatprep.subr.mxu0 0.0
        %1098 = vmatpush2.msra.mxu0 0.0
        %1099 = vmatprep.subr.mxu0 0.0
        %1100 = vmatpush2.msra.mxu0 0.0
        %1101 = vmatprep.subr.mxu0 0.0
        %1102 = vmatpush2.msra.mxu0 0.0
        %1103 = vmatprep.subr.mxu0 0.0
        %1104 = vmatpush2.msra.mxu0 0.0
        %1105 = vmatprep.subr.mxu0 0.0
        %1106 = vmatpush2.msra.mxu0 0.0
        %1107 = vmatprep.subr.mxu0 0.0
        %1108 = vmatpush2.msra.mxu0 0.0
        %1109 = vmatprep.subr.mxu0 0.0
        %1110 = vmatpush2.msra.mxu0 0.0
        %1111 = vmatprep.subr.mxu0 0.0
        %1112 = vmatpush2.msra.mxu0 0.0
        %1113 = vmatprep.subr.mxu0 0.0
        %1114 = vmatpush2.msra.mxu0 0.0
        %1115 = vmatprep.subr.mxu0 0.0
        %1116 = vmatpush2.msra.mxu0 0.0
        %1117 = vmatprep.subr.mxu0 0.0
        %1118 = vmatpush2.msra.mxu0 0.0
        %1119 = vmatprep.subr.mxu0 0.0
        %1120 = vmatpush2.msra.mxu0 0.0
        %1121 = vmatprep.subr.mxu0 0.0
        %1122 = vmatpush2.msra.mxu0 0.0
        %1123 = vmatprep.subr.mxu0 0.0
        %1124 = vmatpush2.msra.mxu0 0.0
        %1125 = vmatprep.subr.mxu0 0.0
        %1126 = vmatpush2.msra.mxu0 0.0
        %1127 = vmatprep.subr.mxu0 0.0
        %1128 = vmatpush2.msra.mxu0 0.0
        %1129 = vmatprep.mubr.f32.mxu0 0.0
        %1130 = vmatmul.mubr.f32.gmra.mxu0 %v1060
        %v1131 = vpop.f32.mrf.mxu0
        %v1132 = vadd.f32 %v1056, %v1131
        %v1133 = vpop.f32.mrf.mxu0
        %1134 = vdwg.mxu0
        %v1135 = vmax.f32 %v1132, 0.0
        %1136 = vrot.lane.b32.xlu0 %v1049, 124
        %v1137 = vpop.permute.xlu0 %1136
        %v1138 = vsel %vm1058, %v1137, 0
        %1140 = vmatprep.subr.mxu0 0.0
        %1141 = vmatpush1.msra.mxu0 0.0
        %1142 = vmatprep.subr.mxu0 0.0
        %1143 = vmatpush1.msra.mxu0 0.0
        %1144 = vmatprep.subr.mxu0 0.0
        %1145 = vmatpush1.msra.mxu0 0.0
        %1146 = vmatprep.subr.mxu0 0.0
        %1147 = vmatpush1.msra.mxu0 0.0
        %1148 = vmatprep.subr.mxu0 0.0
        %1149 = vmatpush1.msra.mxu0 0.0
        %1150 = vmatprep.subr.mxu0 0.0
        %1151 = vmatpush1.msra.mxu0 0.0
        %1152 = vmatprep.subr.mxu0 0.0
        %1153 = vmatpush1.msra.mxu0 0.0
        %1154 = vmatprep.subr.mxu0 0.0
        %1155 = vmatpush1.msra.mxu0 0.0
        %1156 = vmatprep.subr.mxu0 0.0
        %1157 = vmatpush1.msra.mxu0 0.0
        %1158 = vmatprep.subr.mxu0 0.0
        %1159 = vmatpush1.msra.mxu0 0.0
        %1160 = vmatprep.subr.mxu0 0.0
        %1161 = vmatpush1.msra.mxu0 0.0
        %1162 = vmatprep.subr.mxu0 0.0
        %1163 = vmatpush1.msra.mxu0 0.0
        %1164 = vmatprep.subr.mxu0 0.0
        %1165 = vmatpush1.msra.mxu0 0.0
        %1166 = vmatprep.subr.mxu0 0.0
        %1167 = vmatpush1.msra.mxu0 0.0
        %1168 = vmatprep.subr.mxu0 0.0
        %1169 = vmatpush1.msra.mxu0 0.0
        %1170 = vmatprep.subr.mxu0 0.0
        %1171 = vmatpush1.msra.mxu0 %v1063
        %1172 = vmatprep.subr.mxu0 0.0
        %1173 = vmatpush2.msra.mxu0 0.0
        %1174 = vmatprep.subr.mxu0 0.0
        %1175 = vmatpush2.msra.mxu0 0.0
        %1176 = vmatprep.subr.mxu0 0.0
        %1177 = vmatpush2.msra.mxu0 0.0
        %1178 = vmatprep.subr.mxu0 0.0
        %1179 = vmatpush2.msra.mxu0 0.0
        %1180 = vmatprep.subr.mxu0 0.0
        %1181 = vmatpush2.msra.mxu0 0.0
        %1182 = vmatprep.subr.mxu0 0.0
        %1183 = vmatpush2.msra.mxu0 0.0
        %1184 = vmatprep.subr.mxu0 0.0
        %1185 = vmatpush2.msra.mxu0 0.0
        %1186 = vmatprep.subr.mxu0 0.0
        %1187 = vmatpush2.msra.mxu0 0.0
        %1188 = vmatprep.subr.mxu0 0.0
        %1189 = vmatpush2.msra.mxu0 0.0
        %1190 = vmatprep.subr.mxu0 0.0
        %1191 = vmatpush2.msra.mxu0 0.0
        %1192 = vmatprep.subr.mxu0 0.0
        %1193 = vmatpush2.msra.mxu0 0.0
        %1194 = vmatprep.subr.mxu0 0.0
        %1195 = vmatpush2.msra.mxu0 0.0
        %1196 = vmatprep.subr.mxu0 0.0
        %1197 = vmatpush2.msra.mxu0 0.0
        %1198 = vmatprep.subr.mxu0 0.0
        %1199 = vmatpush2.msra.mxu0 0.0
        %1200 = vmatprep.subr.mxu0 0.0
        %1201 = vmatpush2.msra.mxu0 0.0
        %1202 = vmatprep.subr.mxu0 0.0
        %1203 = vmatpush2.msra.mxu0 0.0
        %1204 = vmatprep.mubr.f32.mxu0 0.0
        %1205 = vmatmul.mubr.f32.gmra.mxu0 %v1138
        %v1206 = vpop.f32.mrf.mxu0
        %v1207 = vadd.f32 %v1056, %v1206
        %v1208 = vpop.f32.mrf.mxu0
        %1209 = vdwg.mxu0
        %v1210 = vmax.f32 %v1207, 0.0
        %1211 = vrot.lane.b32.xlu0 %v1049, 120
        %v1212 = vpop.permute.xlu0 %1211
        %v1213 = vsel %vm1058, %v1212, 0
        %1215 = vmatprep.subr.mxu0 0.0
        %1216 = vmatpush1.msra.mxu0 0.0
        %1217 = vmatprep.subr.mxu0 0.0
        %1218 = vmatpush1.msra.mxu0 0.0
        %1219 = vmatprep.subr.mxu0 0.0
        %1220 = vmatpush1.msra.mxu0 0.0
        %1221 = vmatprep.subr.mxu0 0.0
        %1222 = vmatpush1.msra.mxu0 0.0
        %1223 = vmatprep.subr.mxu0 0.0
        %1224 = vmatpush1.msra.mxu0 0.0
        %1225 = vmatprep.subr.mxu0 0.0
        %1226 = vmatpush1.msra.mxu0 0.0
        %1227 = vmatprep.subr.mxu0 0.0
        %1228 = vmatpush1.msra.mxu0 0.0
        %1229 = vmatprep.subr.mxu0 0.0
        %1230 = vmatpush1.msra.mxu0 0.0
        %1231 = vmatprep.subr.mxu0 0.0
        %1232 = vmatpush1.msra.mxu0 0.0
        %1233 = vmatprep.subr.mxu0 0.0
        %1234 = vmatpush1.msra.mxu0 0.0
        %1235 = vmatprep.subr.mxu0 0.0
        %1236 = vmatpush1.msra.mxu0 0.0
        %1237 = vmatprep.subr.mxu0 0.0
        %1238 = vmatpush1.msra.mxu0 0.0
        %1239 = vmatprep.subr.mxu0 0.0
        %1240 = vmatpush1.msra.mxu0 0.0
        %1241 = vmatprep.subr.mxu0 0.0
        %1242 = vmatpush1.msra.mxu0 0.0
        %1243 = vmatprep.subr.mxu0 0.0
        %1244 = vmatpush1.msra.mxu0 0.0
        %1245 = vmatprep.subr.mxu0 0.0
        %1246 = vmatpush1.msra.mxu0 %v1063
        %1247 = vmatprep.subr.mxu0 0.0
        %1248 = vmatpush2.msra.mxu0 0.0
        %1249 = vmatprep.subr.mxu0 0.0
        %1250 = vmatpush2.msra.mxu0 0.0
        %1251 = vmatprep.subr.mxu0 0.0
        %1252 = vmatpush2.msra.mxu0 0.0
        %1253 = vmatprep.subr.mxu0 0.0
        %1254 = vmatpush2.msra.mxu0 0.0
        %1255 = vmatprep.subr.mxu0 0.0
        %1256 = vmatpush2.msra.mxu0 0.0
        %1257 = vmatprep.subr.mxu0 0.0
        %1258 = vmatpush2.msra.mxu0 0.0
        %1259 = vmatprep.subr.mxu0 0.0
        %1260 = vmatpush2.msra.mxu0 0.0
        %1261 = vmatprep.subr.mxu0 0.0
        %1262 = vmatpush2.msra.mxu0 0.0
        %1263 = vmatprep.subr.mxu0 0.0
        %1264 = vmatpush2.msra.mxu0 0.0
        %1265 = vmatprep.subr.mxu0 0.0
        %1266 = vmatpush2.msra.mxu0 0.0
        %1267 = vmatprep.subr.mxu0 0.0
        %1268 = vmatpush2.msra.mxu0 0.0
        %1269 = vmatprep.subr.mxu0 0.0
        %1270 = vmatpush2.msra.mxu0 0.0
        %1271 = vmatprep.subr.mxu0 0.0
        %1272 = vmatpush2.msra.mxu0 0.0
        %1273 = vmatprep.subr.mxu0 0.0
        %1274 = vmatpush2.msra.mxu0 0.0
        %1275 = vmatprep.subr.mxu0 0.0
        %1276 = vmatpush2.msra.mxu0 0.0
        %1277 = vmatprep.subr.mxu0 0.0
        %1278 = vmatpush2.msra.mxu0 0.0
        %1279 = vmatprep.mubr.f32.mxu0 0.0
        %1280 = vmatmul.mubr.f32.gmra.mxu0 %v1213
        %v1281 = vpop.f32.mrf.mxu0
        %v1282 = vadd.f32 %v1056, %v1281
        %v1283 = vpop.f32.mrf.mxu0
        %1284 = vdwg.mxu0
        %v1285 = vmax.f32 %v1282, 0.0
        %1286 = vrot.lane.b32.xlu0 %v1049, 116
        %v1287 = vpop.permute.xlu0 %1286
        %v1288 = vsel %vm1058, %v1287, 0
        %1290 = vmatprep.subr.mxu0 0.0
        %1291 = vmatpush1.msra.mxu0 0.0
        %1292 = vmatprep.subr.mxu0 0.0
        %1293 = vmatpush1.msra.mxu0 0.0
        %1294 = vmatprep.subr.mxu0 0.0
        %1295 = vmatpush1.msra.mxu0 0.0
        %1296 = vmatprep.subr.mxu0 0.0
        %1297 = vmatpush1.msra.mxu0 0.0
        %1298 = vmatprep.subr.mxu0 0.0
        %1299 = vmatpush1.msra.mxu0 0.0
        %1300 = vmatprep.subr.mxu0 0.0
        %1301 = vmatpush1.msra.mxu0 0.0
        %1302 = vmatprep.subr.mxu0 0.0
        %1303 = vmatpush1.msra.mxu0 0.0
        %1304 = vmatprep.subr.mxu0 0.0
        %1305 = vmatpush1.msra.mxu0 0.0
        %1306 = vmatprep.subr.mxu0 0.0
        %1307 = vmatpush1.msra.mxu0 0.0
        %1308 = vmatprep.subr.mxu0 0.0
        %1309 = vmatpush1.msra.mxu0 0.0
        %1310 = vmatprep.subr.mxu0 0.0
        %1311 = vmatpush1.msra.mxu0 0.0
        %1312 = vmatprep.subr.mxu0 0.0
        %1313 = vmatpush1.msra.mxu0 0.0
        %1314 = vmatprep.subr.mxu0 0.0
        %1315 = vmatpush1.msra.mxu0 0.0
        %1316 = vmatprep.subr.mxu0 0.0
        %1317 = vmatpush1.msra.mxu0 0.0
        %1318 = vmatprep.subr.mxu0 0.0
        %1319 = vmatpush1.msra.mxu0 0.0
        %1320 = vmatprep.subr.mxu0 0.0
        %1321 = vmatpush1.msra.mxu0 %v1063
        %1322 = vmatprep.subr.mxu0 0.0
        %1323 = vmatpush2.msra.mxu0 0.0
        %1324 = vmatprep.subr.mxu0 0.0
        %1325 = vmatpush2.msra.mxu0 0.0
        %1326 = vmatprep.subr.mxu0 0.0
        %1327 = vmatpush2.msra.mxu0 0.0
        %1328 = vmatprep.subr.mxu0 0.0
        %1329 = vmatpush2.msra.mxu0 0.0
        %1330 = vmatprep.subr.mxu0 0.0
        %1331 = vmatpush2.msra.mxu0 0.0
        %1332 = vmatprep.subr.mxu0 0.0
        %1333 = vmatpush2.msra.mxu0 0.0
        %1334 = vmatprep.subr.mxu0 0.0
        %1335 = vmatpush2.msra.mxu0 0.0
        %1336 = vmatprep.subr.mxu0 0.0
        %1337 = vmatpush2.msra.mxu0 0.0
        %1338 = vmatprep.subr.mxu0 0.0
        %1339 = vmatpush2.msra.mxu0 0.0
        %1340 = vmatprep.subr.mxu0 0.0
        %1341 = vmatpush2.msra.mxu0 0.0
        %1342 = vmatprep.subr.mxu0 0.0
        %1343 = vmatpush2.msra.mxu0 0.0
        %1344 = vmatprep.subr.mxu0 0.0
        %1345 = vmatpush2.msra.mxu0 0.0
        %1346 = vmatprep.subr.mxu0 0.0
        %1347 = vmatpush2.msra.mxu0 0.0
        %1348 = vmatprep.subr.mxu0 0.0
        %1349 = vmatpush2.msra.mxu0 0.0
        %1350 = vmatprep.subr.mxu0 0.0
        %1351 = vmatpush2.msra.mxu0 0.0
        %1352 = vmatprep.subr.mxu0 0.0
        %1353 = vmatpush2.msra.mxu0 0.0
        %1354 = vmatprep.mubr.f32.mxu0 0.0
        %1355 = vmatmul.mubr.f32.gmra.mxu0 %v1288
        %v1356 = vpop.f32.mrf.mxu0
        %v1357 = vadd.f32 %v1056, %v1356
        %v1358 = vpop.f32.mrf.mxu0
        %1359 = vdwg.mxu0
        %v1360 = vmax.f32 %v1357, 0.0
        %v1361 = vld [vmem:[%s14] sm:$0x1]
        %v1363 = vlaneseq
        %v1364 = vshrl.u32 %v1363, 7
        %v1365 = vsub.s32 0, %v1364
        %v1366 = vrot.slane %v1361, %v1365
        %v1368 = vadd.f32 %v1366, 0.0
        %1370 = vset.pattern.permute.xlu0 0
        %1371 = vperm.xlu0 %1370, %v964
        %v1372 = vpop.permute.xlu0 %1371
        %v1374 = vmul.f32 %v1372, %v1135
        %v1375 = vmul.f32 %v1372, %v712
        %1376 = vset.pattern.permute.xlu0 1
        %1377 = vperm.xlu0 %1376, %v964
        %v1378 = vpop.permute.xlu0 %1377
        %v1380 = vmul.f32 %v1378, %v1210
        %v1381 = vadd.f32 %v1374, %v1380
        %v1382 = vmul.f32 %v1378, %v712
        %1384 = vrot.lane.b32.xlu0 %v1382, 120
        %v1385 = vpop.permute.xlu0 %1384
        %v1387 = vadd.f32 %v1375, %v1385
        %1388 = vset.pattern.permute.xlu0 2
        %1389 = vperm.xlu0 %1388, %v964
        %v1390 = vpop.permute.xlu0 %1389
        %v1392 = vmul.f32 %v1390, %v1285
        %v1393 = vadd.f32 %v1381, %v1392
        %v1394 = vmul.f32 %v1390, %v712
        %1396 = vrot.lane.b32.xlu0 %v1394, 112
        %v1397 = vpop.permute.xlu0 %1396
        %v1399 = vadd.f32 %v1387, %v1397
        %1400 = vset.pattern.permute.xlu0 3
        %1401 = vperm.xlu0 %1400, %v964
        %v1402 = vpop.permute.xlu0 %1401
        %v1404 = vmul.f32 %v1402, %v1360
        %v1405 = vadd.f32 %v1393, %v1404
        %v1406 = vmul.f32 %v1402, %v712
        %1408 = vrot.lane.b32.xlu0 %v1406, 104
        %v1409 = vpop.permute.xlu0 %1408
        %v1411 = vadd.f32 %v1399, %v1409
        %v1412 = vld [vmem:[#allocation16] sm:$0xf]
        %v1414 = vsel %vm1058, %v1405, 0
        %v1417 = vsel %vm726, %v1412, 0
        %1419 = vmatprep.subr.mxu0 0.0
        %1420 = vmatpush1.msra.mxu0 0.0
        %1421 = vmatprep.subr.mxu0 0.0
        %1422 = vmatpush1.msra.mxu0 0.0
        %1423 = vmatprep.subr.mxu0 0.0
        %1424 = vmatpush1.msra.mxu0 0.0
        %1425 = vmatprep.subr.mxu0 0.0
        %1426 = vmatpush1.msra.mxu0 0.0
        %1427 = vmatprep.subr.mxu0 0.0
        %1428 = vmatpush1.msra.mxu0 0.0
        %1429 = vmatprep.subr.mxu0 0.0
        %1430 = vmatpush1.msra.mxu0 0.0
        %1431 = vmatprep.subr.mxu0 0.0
        %1432 = vmatpush1.msra.mxu0 0.0
        %1433 = vmatprep.subr.mxu0 0.0
        %1434 = vmatpush1.msra.mxu0 0.0
        %1435 = vmatprep.subr.mxu0 0.0
        %1436 = vmatpush1.msra.mxu0 0.0
        %1437 = vmatprep.subr.mxu0 0.0
        %1438 = vmatpush1.msra.mxu0 0.0
        %1439 = vmatprep.subr.mxu0 0.0
        %1440 = vmatpush1.msra.mxu0 0.0
        %1441 = vmatprep.subr.mxu0 0.0
        %1442 = vmatpush1.msra.mxu0 0.0
        %1443 = vmatprep.subr.mxu0 0.0
        %1444 = vmatpush1.msra.mxu0 0.0
        %1445 = vmatprep.subr.mxu0 0.0
        %1446 = vmatpush1.msra.mxu0 0.0
        %1447 = vmatprep.subr.mxu0 0.0
        %1448 = vmatpush1.msra.mxu0 0.0
        %1449 = vmatprep.subr.mxu0 0.0
        %1450 = vmatpush1.msra.mxu0 %v1417
        %1451 = vmatprep.subr.mxu0 0.0
        %1452 = vmatpush2.msra.mxu0 0.0
        %1453 = vmatprep.subr.mxu0 0.0
        %1454 = vmatpush2.msra.mxu0 0.0
        %1455 = vmatprep.subr.mxu0 0.0
        %1456 = vmatpush2.msra.mxu0 0.0
        %1457 = vmatprep.subr.mxu0 0.0
        %1458 = vmatpush2.msra.mxu0 0.0
        %1459 = vmatprep.subr.mxu0 0.0
        %1460 = vmatpush2.msra.mxu0 0.0
        %1461 = vmatprep.subr.mxu0 0.0
        %1462 = vmatpush2.msra.mxu0 0.0
        %1463 = vmatprep.subr.mxu0 0.0
        %1464 = vmatpush2.msra.mxu0 0.0
        %1465 = vmatprep.subr.mxu0 0.0
        %1466 = vmatpush2.msra.mxu0 0.0
        %1467 = vmatprep.subr.mxu0 0.0
        %1468 = vmatpush2.msra.mxu0 0.0
        %1469 = vmatprep.subr.mxu0 0.0
        %1470 = vmatpush2.msra.mxu0 0.0
        %1471 = vmatprep.subr.mxu0 0.0
        %1472 = vmatpush2.msra.mxu0 0.0
        %1473 = vmatprep.subr.mxu0 0.0
        %1474 = vmatpush2.msra.mxu0 0.0
        %1475 = vmatprep.subr.mxu0 0.0
        %1476 = vmatpush2.msra.mxu0 0.0
        %1477 = vmatprep.subr.mxu0 0.0
        %1478 = vmatpush2.msra.mxu0 0.0
        %1479 = vmatprep.subr.mxu0 0.0
        %1480 = vmatpush2.msra.mxu0 0.0
        %1481 = vmatprep.subr.mxu0 0.0
        %1482 = vmatpush2.msra.mxu0 0.0
        %1483 = vmatprep.mubr.f32.mxu0 0.0
        %1484 = vmatmul.mubr.f32.gmra.mxu0 %v1414
        %v1485 = vpop.f32.mrf.mxu0
        %v1486 = vadd.f32 0.0, %v1485
        %v1487 = vpop.f32.mrf.mxu0
        %1488 = vdwg.mxu0
        %v1489 = vadd.f32 %v1368, %v1486
        %v1490 = vld [vmem:[#allocation17] sm:$0xff]
        %vm1491 = vcmask 64512
        %v1493 = vsel %vm1491, %v1411, 0
        %1495 = vmatprep.subr.mxu0 0.0
        %1496 = vmatpush1.msra.mxu0 0.0
        %1497 = vmatprep.subr.mxu0 0.0
        %1498 = vmatpush1.msra.mxu0 0.0
        %1499 = vmatprep.subr.mxu0 0.0
        %1500 = vmatpush1.msra.mxu0 0.0
        %1501 = vmatprep.subr.mxu0 0.0
        %1502 = vmatpush1.msra.mxu0 0.0
        %1503 = vmatprep.subr.mxu0 0.0
        %1504 = vmatpush1.msra.mxu0 0.0
        %1505 = vmatprep.subr.mxu0 0.0
        %1506 = vmatpush1.msra.mxu0 0.0
        %1507 = vmatprep.subr.mxu0 0.0
        %1508 = vmatpush1.msra.mxu0 0.0
        %1509 = vmatprep.subr.mxu0 0.0
        %1510 = vmatpush1.msra.mxu0 0.0
        %1511 = vmatprep.subr.mxu0 0.0
        %1512 = vmatpush1.msra.mxu0 0.0
        %1513 = vmatprep.subr.mxu0 0.0
        %1514 = vmatpush1.msra.mxu0 0.0
        %1515 = vmatprep.subr.mxu0 0.0
        %1516 = vmatpush1.msra.mxu0 0.0
        %1517 = vmatprep.subr.mxu0 0.0
        %1518 = vmatpush1.msra.mxu0 0.0
        %1519 = vmatprep.subr.mxu0 0.0
        %1520 = vmatpush1.msra.mxu0 0.0
        %1521 = vmatprep.subr.mxu0 0.0
        %1522 = vmatpush1.msra.mxu0 0.0
        %1523 = vmatprep.subr.mxu0 0.0
        %1524 = vmatpush1.msra.mxu0 0.0
        %1525 = vmatprep.subr.mxu0 0.0
        %1526 = vmatpush1.msra.mxu0 %v1490
        %1527 = vmatprep.subr.mxu0 0.0
        %1528 = vmatpush2.msra.mxu0 0.0
        %1529 = vmatprep.subr.mxu0 0.0
        %1530 = vmatpush2.msra.mxu0 0.0
        %1531 = vmatprep.subr.mxu0 0.0
        %1532 = vmatpush2.msra.mxu0 0.0
        %1533 = vmatprep.subr.mxu0 0.0
        %1534 = vmatpush2.msra.mxu0 0.0
        %1535 = vmatprep.subr.mxu0 0.0
        %1536 = vmatpush2.msra.mxu0 0.0
        %1537 = vmatprep.subr.mxu0 0.0
        %1538 = vmatpush2.msra.mxu0 0.0
        %1539 = vmatprep.subr.mxu0 0.0
        %1540 = vmatpush2.msra.mxu0 0.0
        %1541 = vmatprep.subr.mxu0 0.0
        %1542 = vmatpush2.msra.mxu0 0.0
        %1543 = vmatprep.subr.mxu0 0.0
        %1544 = vmatpush2.msra.mxu0 0.0
        %1545 = vmatprep.subr.mxu0 0.0
        %1546 = vmatpush2.msra.mxu0 0.0
        %1547 = vmatprep.subr.mxu0 0.0
        %1548 = vmatpush2.msra.mxu0 0.0
        %1549 = vmatprep.subr.mxu0 0.0
        %1550 = vmatpush2.msra.mxu0 0.0
        %1551 = vmatprep.subr.mxu0 0.0
        %1552 = vmatpush2.msra.mxu0 0.0
        %1553 = vmatprep.subr.mxu0 0.0
        %1554 = vmatpush2.msra.mxu0 0.0
        %1555 = vmatprep.subr.mxu0 0.0
        %1556 = vmatpush2.msra.mxu0 0.0
        %1557 = vmatprep.subr.mxu0 0.0
        %1558 = vmatpush2.msra.mxu0 0.0
        %1559 = vmatprep.mubr.f32.mxu0 0.0
        %1560 = vmatmul.mubr.f32.gmra.mxu0 %v1493
        %v1561 = vpop.f32.mrf.mxu0
        %v1562 = vadd.f32 0.0, %v1561
        %v1563 = vpop.f32.mrf.mxu0
        %1564 = vdwg.mxu0
        %v1565 = vadd.f32 %v1489, %v1562
        %1566 = vset.pattern.permute.xlu0 4
        %1567 = vperm.xlu0 %1566, %v964
        %v1568 = vpop.permute.xlu0 %1567
        %v1570 = vmul.f32 %v1568, %v1135
        %v1571 = vmul.f32 %v1568, %v712
        %1572 = vset.pattern.permute.xlu0 5
        %1573 = vperm.xlu0 %1572, %v964
        %v1574 = vpop.permute.xlu0 %1573
        %v1576 = vmul.f32 %v1574, %v1210
        %v1577 = vadd.f32 %v1570, %v1576
        %v1578 = vmul.f32 %v1574, %v712
        %1580 = vrot.lane.b32.xlu0 %v1578, 120
        %v1581 = vpop.permute.xlu0 %1580
        %v1583 = vadd.f32 %v1571, %v1581
        %1584 = vset.pattern.permute.xlu0 6
        %1585 = vperm.xlu0 %1584, %v964
        %v1586 = vpop.permute.xlu0 %1585
        %v1588 = vmul.f32 %v1586, %v1285
        %v1589 = vadd.f32 %v1577, %v1588
        %v1590 = vmul.f32 %v1586, %v712
        %1592 = vrot.lane.b32.xlu0 %v1590, 112
        %v1593 = vpop.permute.xlu0 %1592
        %v1595 = vadd.f32 %v1583, %v1593
        %1596 = vset.pattern.permute.xlu0 7
        %1597 = vperm.xlu0 %1596, %v964
        %v1598 = vpop.permute.xlu0 %1597
        %v1600 = vmul.f32 %v1598, %v1360
        %v1601 = vadd.f32 %v1589, %v1600
        %v1602 = vmul.f32 %v1598, %v712
        %1604 = vrot.lane.b32.xlu0 %v1602, 104
        %v1605 = vpop.permute.xlu0 %1604
        %v1607 = vadd.f32 %v1595, %v1605
        %s1608 = scalar_lea.vmem [#allocation16], 4
        %v1609 = vld [vmem:[%s1608] sm:$0xf]
        %v1611 = vsel %vm1058, %v1601, 0
        %v1614 = vsel %vm726, %v1609, 0
        %1616 = vmatprep.subr.mxu0 0.0
        %1617 = vmatpush1.msra.mxu0 0.0
        %1618 = vmatprep.subr.mxu0 0.0
        %1619 = vmatpush1.msra.mxu0 0.0
        %1620 = vmatprep.subr.mxu0 0.0
        %1621 = vmatpush1.msra.mxu0 0.0
        %1622 = vmatprep.subr.mxu0 0.0
        %1623 = vmatpush1.msra.mxu0 0.0
        %1624 = vmatprep.subr.mxu0 0.0
        %1625 = vmatpush1.msra.mxu0 0.0
        %1626 = vmatprep.subr.mxu0 0.0
        %1627 = vmatpush1.msra.mxu0 0.0
        %1628 = vmatprep.subr.mxu0 0.0
        %1629 = vmatpush1.msra.mxu0 0.0
        %1630 = vmatprep.subr.mxu0 0.0
        %1631 = vmatpush1.msra.mxu0 0.0
        %1632 = vmatprep.subr.mxu0 0.0
        %1633 = vmatpush1.msra.mxu0 0.0
        %1634 = vmatprep.subr.mxu0 0.0
        %1635 = vmatpush1.msra.mxu0 0.0
        %1636 = vmatprep.subr.mxu0 0.0
        %1637 = vmatpush1.msra.mxu0 0.0
        %1638 = vmatprep.subr.mxu0 0.0
        %1639 = vmatpush1.msra.mxu0 0.0
        %1640 = vmatprep.subr.mxu0 0.0
        %1641 = vmatpush1.msra.mxu0 0.0
        %1642 = vmatprep.subr.mxu0 0.0
        %1643 = vmatpush1.msra.mxu0 0.0
        %1644 = vmatprep.subr.mxu0 0.0
        %1645 = vmatpush1.msra.mxu0 0.0
        %1646 = vmatprep.subr.mxu0 0.0
        %1647 = vmatpush1.msra.mxu0 %v1614
        %1648 = vmatprep.subr.mxu0 0.0
        %1649 = vmatpush2.msra.mxu0 0.0
        %1650 = vmatprep.subr.mxu0 0.0
        %1651 = vmatpush2.msra.mxu0 0.0
        %1652 = vmatprep.subr.mxu0 0.0
        %1653 = vmatpush2.msra.mxu0 0.0
        %1654 = vmatprep.subr.mxu0 0.0
        %1655 = vmatpush2.msra.mxu0 0.0
        %1656 = vmatprep.subr.mxu0 0.0
        %1657 = vmatpush2.msra.mxu0 0.0
        %1658 = vmatprep.subr.mxu0 0.0
        %1659 = vmatpush2.msra.mxu0 0.0
        %1660 = vmatprep.subr.mxu0 0.0
        %1661 = vmatpush2.msra.mxu0 0.0
        %1662 = vmatprep.subr.mxu0 0.0
        %1663 = vmatpush2.msra.mxu0 0.0
        %1664 = vmatprep.subr.mxu0 0.0
        %1665 = vmatpush2.msra.mxu0 0.0
        %1666 = vmatprep.subr.mxu0 0.0
        %1667 = vmatpush2.msra.mxu0 0.0
        %1668 = vmatprep.subr.mxu0 0.0
        %1669 = vmatpush2.msra.mxu0 0.0
        %1670 = vmatprep.subr.mxu0 0.0
        %1671 = vmatpush2.msra.mxu0 0.0
        %1672 = vmatprep.subr.mxu0 0.0
        %1673 = vmatpush2.msra.mxu0 0.0
        %1674 = vmatprep.subr.mxu0 0.0
        %1675 = vmatpush2.msra.mxu0 0.0
        %1676 = vmatprep.subr.mxu0 0.0
        %1677 = vmatpush2.msra.mxu0 0.0
        %1678 = vmatprep.subr.mxu0 0.0
        %1679 = vmatpush2.msra.mxu0 0.0
        %1680 = vmatprep.mubr.f32.mxu0 0.0
        %1681 = vmatmul.mubr.f32.gmra.mxu0 %v1611
        %v1682 = vpop.f32.mrf.mxu0
        %v1683 = vadd.f32 0.0, %v1682
        %v1684 = vpop.f32.mrf.mxu0
        %1685 = vdwg.mxu0
        %v1686 = vadd.f32 %v1565, %v1683
        %s1687 = scalar_lea.vmem [#allocation17], 8
        %v1688 = vld [vmem:[%s1687] sm:$0xff]
        %v1690 = vsel %vm1491, %v1607, 0
        %1692 = vmatprep.subr.mxu0 0.0
        %1693 = vmatpush1.msra.mxu0 0.0
        %1694 = vmatprep.subr.mxu0 0.0
        %1695 = vmatpush1.msra.mxu0 0.0
        %1696 = vmatprep.subr.mxu0 0.0
        %1697 = vmatpush1.msra.mxu0 0.0
        %1698 = vmatprep.subr.mxu0 0.0
        %1699 = vmatpush1.msra.mxu0 0.0
        %1700 = vmatprep.subr.mxu0 0.0
        %1701 = vmatpush1.msra.mxu0 0.0
        %1702 = vmatprep.subr.mxu0 0.0
        %1703 = vmatpush1.msra.mxu0 0.0
        %1704 = vmatprep.subr.mxu0 0.0
        %1705 = vmatpush1.msra.mxu0 0.0
        %1706 = vmatprep.subr.mxu0 0.0
        %1707 = vmatpush1.msra.mxu0 0.0
        %1708 = vmatprep.subr.mxu0 0.0
        %1709 = vmatpush1.msra.mxu0 0.0
        %1710 = vmatprep.subr.mxu0 0.0
        %1711 = vmatpush1.msra.mxu0 0.0
        %1712 = vmatprep.subr.mxu0 0.0
        %1713 = vmatpush1.msra.mxu0 0.0
        %1714 = vmatprep.subr.mxu0 0.0
        %1715 = vmatpush1.msra.mxu0 0.0
        %1716 = vmatprep.subr.mxu0 0.0
        %1717 = vmatpush1.msra.mxu0 0.0
        %1718 = vmatprep.subr.mxu0 0.0
        %1719 = vmatpush1.msra.mxu0 0.0
        %1720 = vmatprep.subr.mxu0 0.0
        %1721 = vmatpush1.msra.mxu0 0.0
        %1722 = vmatprep.subr.mxu0 0.0
        %1723 = vmatpush1.msra.mxu0 %v1688
        %1724 = vmatprep.subr.mxu0 0.0
        %1725 = vmatpush2.msra.mxu0 0.0
        %1726 = vmatprep.subr.mxu0 0.0
        %1727 = vmatpush2.msra.mxu0 0.0
        %1728 = vmatprep.subr.mxu0 0.0
        %1729 = vmatpush2.msra.mxu0 0.0
        %1730 = vmatprep.subr.mxu0 0.0
        %1731 = vmatpush2.msra.mxu0 0.0
        %1732 = vmatprep.subr.mxu0 0.0
        %1733 = vmatpush2.msra.mxu0 0.0
        %1734 = vmatprep.subr.mxu0 0.0
        %1735 = vmatpush2.msra.mxu0 0.0
        %1736 = vmatprep.subr.mxu0 0.0
        %1737 = vmatpush2.msra.mxu0 0.0
        %1738 = vmatprep.subr.mxu0 0.0
        %1739 = vmatpush2.msra.mxu0 0.0
        %1740 = vmatprep.subr.mxu0 0.0
        %1741 = vmatpush2.msra.mxu0 0.0
        %1742 = vmatprep.subr.mxu0 0.0
        %1743 = vmatpush2.msra.mxu0 0.0
        %1744 = vmatprep.subr.mxu0 0.0
        %1745 = vmatpush2.msra.mxu0 0.0
        %1746 = vmatprep.subr.mxu0 0.0
        %1747 = vmatpush2.msra.mxu0 0.0
        %1748 = vmatprep.subr.mxu0 0.0
        %1749 = vmatpush2.msra.mxu0 0.0
        %1750 = vmatprep.subr.mxu0 0.0
        %1751 = vmatpush2.msra.mxu0 0.0
        %1752 = vmatprep.subr.mxu0 0.0
        %1753 = vmatpush2.msra.mxu0 0.0
        %1754 = vmatprep.subr.mxu0 0.0
        %1755 = vmatpush2.msra.mxu0 0.0
        %1756 = vmatprep.mubr.f32.mxu0 0.0
        %1757 = vmatmul.mubr.f32.gmra.mxu0 %v1690
        %v1758 = vpop.f32.mrf.mxu0
        %v1759 = vadd.f32 0.0, %v1758
        %v1760 = vpop.f32.mrf.mxu0
        %1761 = vdwg.mxu0
        %v1762 = vadd.f32 %v1686, %v1759
        %1763 = vset.pattern.permute.xlu0 8
        %1764 = vperm.xlu0 %1763, %v964
        %v1765 = vpop.permute.xlu0 %1764
        %v1767 = vmul.f32 %v1765, %v1135
        %v1768 = vmul.f32 %v1765, %v712
        %1769 = vset.pattern.permute.xlu0 9
        %1770 = vperm.xlu0 %1769, %v964
        %v1771 = vpop.permute.xlu0 %1770
        %v1773 = vmul.f32 %v1771, %v1210
        %v1774 = vadd.f32 %v1767, %v1773
        %v1775 = vmul.f32 %v1771, %v712
        %1777 = vrot.lane.b32.xlu0 %v1775, 120
        %v1778 = vpop.permute.xlu0 %1777
        %v1780 = vadd.f32 %v1768, %v1778
        %1781 = vset.pattern.permute.xlu0 10
        %1782 = vperm.xlu0 %1781, %v964
        %v1783 = vpop.permute.xlu0 %1782
        %v1785 = vmul.f32 %v1783, %v1285
        %v1786 = vadd.f32 %v1774, %v1785
        %v1787 = vmul.f32 %v1783, %v712
        %1789 = vrot.lane.b32.xlu0 %v1787, 112
        %v1790 = vpop.permute.xlu0 %1789
        %v1792 = vadd.f32 %v1780, %v1790
        %1793 = vset.pattern.permute.xlu0 11
        %1794 = vperm.xlu0 %1793, %v964
        %v1795 = vpop.permute.xlu0 %1794
        %v1797 = vmul.f32 %v1795, %v1360
        %v1798 = vadd.f32 %v1786, %v1797
        %v1799 = vmul.f32 %v1795, %v712
        %1801 = vrot.lane.b32.xlu0 %v1799, 104
        %v1802 = vpop.permute.xlu0 %1801
        %v1804 = vadd.f32 %v1792, %v1802
        %s1805 = scalar_lea.vmem [#allocation16], 8
        %v1806 = vld [vmem:[%s1805] sm:$0xf]
        %v1808 = vsel %vm1058, %v1798, 0
        %v1811 = vsel %vm726, %v1806, 0
        %1813 = vmatprep.subr.mxu0 0.0
        %1814 = vmatpush1.msra.mxu0 0.0
        %1815 = vmatprep.subr.mxu0 0.0
        %1816 = vmatpush1.msra.mxu0 0.0
        %1817 = vmatprep.subr.mxu0 0.0
        %1818 = vmatpush1.msra.mxu0 0.0
        %1819 = vmatprep.subr.mxu0 0.0
        %1820 = vmatpush1.msra.mxu0 0.0
        %1821 = vmatprep.subr.mxu0 0.0
        %1822 = vmatpush1.msra.mxu0 0.0
        %1823 = vmatprep.subr.mxu0 0.0
        %1824 = vmatpush1.msra.mxu0 0.0
        %1825 = vmatprep.subr.mxu0 0.0
        %1826 = vmatpush1.msra.mxu0 0.0
        %1827 = vmatprep.subr.mxu0 0.0
        %1828 = vmatpush1.msra.mxu0 0.0
        %1829 = vmatprep.subr.mxu0 0.0
        %1830 = vmatpush1.msra.mxu0 0.0
        %1831 = vmatprep.subr.mxu0 0.0
        %1832 = vmatpush1.msra.mxu0 0.0
        %1833 = vmatprep.subr.mxu0 0.0
        %1834 = vmatpush1.msra.mxu0 0.0
        %1835 = vmatprep.subr.mxu0 0.0
        %1836 = vmatpush1.msra.mxu0 0.0
        %1837 = vmatprep.subr.mxu0 0.0
        %1838 = vmatpush1.msra.mxu0 0.0
        %1839 = vmatprep.subr.mxu0 0.0
        %1840 = vmatpush1.msra.mxu0 0.0
        %1841 = vmatprep.subr.mxu0 0.0
        %1842 = vmatpush1.msra.mxu0 0.0
        %1843 = vmatprep.subr.mxu0 0.0
        %1844 = vmatpush1.msra.mxu0 %v1811
        %1845 = vmatprep.subr.mxu0 0.0
        %1846 = vmatpush2.msra.mxu0 0.0
        %1847 = vmatprep.subr.mxu0 0.0
        %1848 = vmatpush2.msra.mxu0 0.0
        %1849 = vmatprep.subr.mxu0 0.0
        %1850 = vmatpush2.msra.mxu0 0.0
        %1851 = vmatprep.subr.mxu0 0.0
        %1852 = vmatpush2.msra.mxu0 0.0
        %1853 = vmatprep.subr.mxu0 0.0
        %1854 = vmatpush2.msra.mxu0 0.0
        %1855 = vmatprep.subr.mxu0 0.0
        %1856 = vmatpush2.msra.mxu0 0.0
        %1857 = vmatprep.subr.mxu0 0.0
        %1858 = vmatpush2.msra.mxu0 0.0
        %1859 = vmatprep.subr.mxu0 0.0
        %1860 = vmatpush2.msra.mxu0 0.0
        %1861 = vmatprep.subr.mxu0 0.0
        %1862 = vmatpush2.msra.mxu0 0.0
        %1863 = vmatprep.subr.mxu0 0.0
        %1864 = vmatpush2.msra.mxu0 0.0
        %1865 = vmatprep.subr.mxu0 0.0
        %1866 = vmatpush2.msra.mxu0 0.0
        %1867 = vmatprep.subr.mxu0 0.0
        %1868 = vmatpush2.msra.mxu0 0.0
        %1869 = vmatprep.subr.mxu0 0.0
        %1870 = vmatpush2.msra.mxu0 0.0
        %1871 = vmatprep.subr.mxu0 0.0
        %1872 = vmatpush2.msra.mxu0 0.0
        %1873 = vmatprep.subr.mxu0 0.0
        %1874 = vmatpush2.msra.mxu0 0.0
        %1875 = vmatprep.subr.mxu0 0.0
        %1876 = vmatpush2.msra.mxu0 0.0
        %1877 = vmatprep.mubr.f32.mxu0 0.0
        %1878 = vmatmul.mubr.f32.gmra.mxu0 %v1808
        %v1879 = vpop.f32.mrf.mxu0
        %v1880 = vadd.f32 0.0, %v1879
        %v1881 = vpop.f32.mrf.mxu0
        %1882 = vdwg.mxu0
        %v1883 = vadd.f32 %v1762, %v1880
        %s1884 = scalar_lea.vmem [#allocation17], 16
        %v1885 = vld [vmem:[%s1884] sm:$0xff]
        %v1887 = vsel %vm1491, %v1804, 0
        %1889 = vmatprep.subr.mxu0 0.0
        %1890 = vmatpush1.msra.mxu0 0.0
        %1891 = vmatprep.subr.mxu0 0.0
        %1892 = vmatpush1.msra.mxu0 0.0
        %1893 = vmatprep.subr.mxu0 0.0
        %1894 = vmatpush1.msra.mxu0 0.0
        %1895 = vmatprep.subr.mxu0 0.0
        %1896 = vmatpush1.msra.mxu0 0.0
        %1897 = vmatprep.subr.mxu0 0.0
        %1898 = vmatpush1.msra.mxu0 0.0
        %1899 = vmatprep.subr.mxu0 0.0
        %1900 = vmatpush1.msra.mxu0 0.0
        %1901 = vmatprep.subr.mxu0 0.0
        %1902 = vmatpush1.msra.mxu0 0.0
        %1903 = vmatprep.subr.mxu0 0.0
        %1904 = vmatpush1.msra.mxu0 0.0
        %1905 = vmatprep.subr.mxu0 0.0
        %1906 = vmatpush1.msra.mxu0 0.0
        %1907 = vmatprep.subr.mxu0 0.0
        %1908 = vmatpush1.msra.mxu0 0.0
        %1909 = vmatprep.subr.mxu0 0.0
        %1910 = vmatpush1.msra.mxu0 0.0
        %1911 = vmatprep.subr.mxu0 0.0
        %1912 = vmatpush1.msra.mxu0 0.0
        %1913 = vmatprep.subr.mxu0 0.0
        %1914 = vmatpush1.msra.mxu0 0.0
        %1915 = vmatprep.subr.mxu0 0.0
        %1916 = vmatpush1.msra.mxu0 0.0
        %1917 = vmatprep.subr.mxu0 0.0
        %1918 = vmatpush1.msra.mxu0 0.0
        %1919 = vmatprep.subr.mxu0 0.0
        %1920 = vmatpush1.msra.mxu0 %v1885
        %1921 = vmatprep.subr.mxu0 0.0
        %1922 = vmatpush2.msra.mxu0 0.0
        %1923 = vmatprep.subr.mxu0 0.0
        %1924 = vmatpush2.msra.mxu0 0.0
        %1925 = vmatprep.subr.mxu0 0.0
        %1926 = vmatpush2.msra.mxu0 0.0
        %1927 = vmatprep.subr.mxu0 0.0
        %1928 = vmatpush2.msra.mxu0 0.0
        %1929 = vmatprep.subr.mxu0 0.0
        %1930 = vmatpush2.msra.mxu0 0.0
        %1931 = vmatprep.subr.mxu0 0.0
        %1932 = vmatpush2.msra.mxu0 0.0
        %1933 = vmatprep.subr.mxu0 0.0
        %1934 = vmatpush2.msra.mxu0 0.0
        %1935 = vmatprep.subr.mxu0 0.0
        %1936 = vmatpush2.msra.mxu0 0.0
        %1937 = vmatprep.subr.mxu0 0.0
        %1938 = vmatpush2.msra.mxu0 0.0
        %1939 = vmatprep.subr.mxu0 0.0
        %1940 = vmatpush2.msra.mxu0 0.0
        %1941 = vmatprep.subr.mxu0 0.0
        %1942 = vmatpush2.msra.mxu0 0.0
        %1943 = vmatprep.subr.mxu0 0.0
        %1944 = vmatpush2.msra.mxu0 0.0
        %1945 = vmatprep.subr.mxu0 0.0
        %1946 = vmatpush2.msra.mxu0 0.0
        %1947 = vmatprep.subr.mxu0 0.0
        %1948 = vmatpush2.msra.mxu0 0.0
        %1949 = vmatprep.subr.mxu0 0.0
        %1950 = vmatpush2.msra.mxu0 0.0
        %1951 = vmatprep.subr.mxu0 0.0
        %1952 = vmatpush2.msra.mxu0 0.0
        %1953 = vmatprep.mubr.f32.mxu0 0.0
        %1954 = vmatmul.mubr.f32.gmra.mxu0 %v1887
        %v1955 = vpop.f32.mrf.mxu0
        %v1956 = vadd.f32 0.0, %v1955
        %v1957 = vpop.f32.mrf.mxu0
        %1958 = vdwg.mxu0
        %v1959 = vadd.f32 %v1883, %v1956
        %1960 = vset.pattern.permute.xlu0 12
        %1961 = vperm.xlu0 %1960, %v964
        %v1962 = vpop.permute.xlu0 %1961
        %v1964 = vmul.f32 %v1962, %v1135
        %v1965 = vmul.f32 %v1962, %v712
        %1966 = vset.pattern.permute.xlu0 13
        %1967 = vperm.xlu0 %1966, %v964
        %v1968 = vpop.permute.xlu0 %1967
        %v1970 = vmul.f32 %v1968, %v1210
        %v1971 = vadd.f32 %v1964, %v1970
        %v1972 = vmul.f32 %v1968, %v712
        %1974 = vrot.lane.b32.xlu0 %v1972, 120
        %v1975 = vpop.permute.xlu0 %1974
        %v1977 = vadd.f32 %v1965, %v1975
        %1978 = vset.pattern.permute.xlu0 14
        %1979 = vperm.xlu0 %1978, %v964
        %v1980 = vpop.permute.xlu0 %1979
        %v1982 = vmul.f32 %v1980, %v1285
        %v1983 = vadd.f32 %v1971, %v1982
        %v1984 = vmul.f32 %v1980, %v712
        %1986 = vrot.lane.b32.xlu0 %v1984, 112
        %v1987 = vpop.permute.xlu0 %1986
        %v1989 = vadd.f32 %v1977, %v1987
        %1990 = vset.pattern.permute.xlu0 15
        %1991 = vperm.xlu0 %1990, %v964
        %v1992 = vpop.permute.xlu0 %1991
        %v1994 = vmul.f32 %v1992, %v1360
        %v1995 = vadd.f32 %v1983, %v1994
        %v1996 = vmul.f32 %v1992, %v712
        %1998 = vrot.lane.b32.xlu0 %v1996, 104
        %v1999 = vpop.permute.xlu0 %1998
        %v2001 = vadd.f32 %v1989, %v1999
        %s2002 = scalar_lea.vmem [#allocation16], 12
        %v2003 = vld [vmem:[%s2002] sm:$0xf]
        %v2005 = vsel %vm1058, %v1995, 0
        %v2008 = vsel %vm726, %v2003, 0
        %2010 = vmatprep.subr.mxu0 0.0
        %2011 = vmatpush1.msra.mxu0 0.0
        %2012 = vmatprep.subr.mxu0 0.0
        %2013 = vmatpush1.msra.mxu0 0.0
        %2014 = vmatprep.subr.mxu0 0.0
        %2015 = vmatpush1.msra.mxu0 0.0
        %2016 = vmatprep.subr.mxu0 0.0
        %2017 = vmatpush1.msra.mxu0 0.0
        %2018 = vmatprep.subr.mxu0 0.0
        %2019 = vmatpush1.msra.mxu0 0.0
        %2020 = vmatprep.subr.mxu0 0.0
        %2021 = vmatpush1.msra.mxu0 0.0
        %2022 = vmatprep.subr.mxu0 0.0
        %2023 = vmatpush1.msra.mxu0 0.0
        %2024 = vmatprep.subr.mxu0 0.0
        %2025 = vmatpush1.msra.mxu0 0.0
        %2026 = vmatprep.subr.mxu0 0.0
        %2027 = vmatpush1.msra.mxu0 0.0
        %2028 = vmatprep.subr.mxu0 0.0
        %2029 = vmatpush1.msra.mxu0 0.0
        %2030 = vmatprep.subr.mxu0 0.0
        %2031 = vmatpush1.msra.mxu0 0.0
        %2032 = vmatprep.subr.mxu0 0.0
        %2033 = vmatpush1.msra.mxu0 0.0
        %2034 = vmatprep.subr.mxu0 0.0
        %2035 = vmatpush1.msra.mxu0 0.0
        %2036 = vmatprep.subr.mxu0 0.0
        %2037 = vmatpush1.msra.mxu0 0.0
        %2038 = vmatprep.subr.mxu0 0.0
        %2039 = vmatpush1.msra.mxu0 0.0
        %2040 = vmatprep.subr.mxu0 0.0
        %2041 = vmatpush1.msra.mxu0 %v2008
        %2042 = vmatprep.subr.mxu0 0.0
        %2043 = vmatpush2.msra.mxu0 0.0
        %2044 = vmatprep.subr.mxu0 0.0
        %2045 = vmatpush2.msra.mxu0 0.0
        %2046 = vmatprep.subr.mxu0 0.0
        %2047 = vmatpush2.msra.mxu0 0.0
        %2048 = vmatprep.subr.mxu0 0.0
        %2049 = vmatpush2.msra.mxu0 0.0
        %2050 = vmatprep.subr.mxu0 0.0
        %2051 = vmatpush2.msra.mxu0 0.0
        %2052 = vmatprep.subr.mxu0 0.0
        %2053 = vmatpush2.msra.mxu0 0.0
        %2054 = vmatprep.subr.mxu0 0.0
        %2055 = vmatpush2.msra.mxu0 0.0
        %2056 = vmatprep.subr.mxu0 0.0
        %2057 = vmatpush2.msra.mxu0 0.0
        %2058 = vmatprep.subr.mxu0 0.0
        %2059 = vmatpush2.msra.mxu0 0.0
        %2060 = vmatprep.subr.mxu0 0.0
        %2061 = vmatpush2.msra.mxu0 0.0
        %2062 = vmatprep.subr.mxu0 0.0
        %2063 = vmatpush2.msra.mxu0 0.0
        %2064 = vmatprep.subr.mxu0 0.0
        %2065 = vmatpush2.msra.mxu0 0.0
        %2066 = vmatprep.subr.mxu0 0.0
        %2067 = vmatpush2.msra.mxu0 0.0
        %2068 = vmatprep.subr.mxu0 0.0
        %2069 = vmatpush2.msra.mxu0 0.0
        %2070 = vmatprep.subr.mxu0 0.0
        %2071 = vmatpush2.msra.mxu0 0.0
        %2072 = vmatprep.subr.mxu0 0.0
        %2073 = vmatpush2.msra.mxu0 0.0
        %2074 = vmatprep.mubr.f32.mxu0 0.0
        %2075 = vmatmul.mubr.f32.gmra.mxu0 %v2005
        %v2076 = vpop.f32.mrf.mxu0
        %v2077 = vadd.f32 0.0, %v2076
        %v2078 = vpop.f32.mrf.mxu0
        %2079 = vdwg.mxu0
        %v2080 = vadd.f32 %v1959, %v2077
        %s2081 = scalar_lea.vmem [#allocation17], 24
        %v2082 = vld [vmem:[%s2081] sm:$0xff]
        %v2084 = vsel %vm1491, %v2001, 0
        %2086 = vmatprep.subr.mxu0 0.0
        %2087 = vmatpush1.msra.mxu0 0.0
        %2088 = vmatprep.subr.mxu0 0.0
        %2089 = vmatpush1.msra.mxu0 0.0
        %2090 = vmatprep.subr.mxu0 0.0
        %2091 = vmatpush1.msra.mxu0 0.0
        %2092 = vmatprep.subr.mxu0 0.0
        %2093 = vmatpush1.msra.mxu0 0.0
        %2094 = vmatprep.subr.mxu0 0.0
        %2095 = vmatpush1.msra.mxu0 0.0
        %2096 = vmatprep.subr.mxu0 0.0
        %2097 = vmatpush1.msra.mxu0 0.0
        %2098 = vmatprep.subr.mxu0 0.0
        %2099 = vmatpush1.msra.mxu0 0.0
        %2100 = vmatprep.subr.mxu0 0.0
        %2101 = vmatpush1.msra.mxu0 0.0
        %2102 = vmatprep.subr.mxu0 0.0
        %2103 = vmatpush1.msra.mxu0 0.0
        %2104 = vmatprep.subr.mxu0 0.0
        %2105 = vmatpush1.msra.mxu0 0.0
        %2106 = vmatprep.subr.mxu0 0.0
        %2107 = vmatpush1.msra.mxu0 0.0
        %2108 = vmatprep.subr.mxu0 0.0
        %2109 = vmatpush1.msra.mxu0 0.0
        %2110 = vmatprep.subr.mxu0 0.0
        %2111 = vmatpush1.msra.mxu0 0.0
        %2112 = vmatprep.subr.mxu0 0.0
        %2113 = vmatpush1.msra.mxu0 0.0
        %2114 = vmatprep.subr.mxu0 0.0
        %2115 = vmatpush1.msra.mxu0 0.0
        %2116 = vmatprep.subr.mxu0 0.0
        %2117 = vmatpush1.msra.mxu0 %v2082
        %2118 = vmatprep.subr.mxu0 0.0
        %2119 = vmatpush2.msra.mxu0 0.0
        %2120 = vmatprep.subr.mxu0 0.0
        %2121 = vmatpush2.msra.mxu0 0.0
        %2122 = vmatprep.subr.mxu0 0.0
        %2123 = vmatpush2.msra.mxu0 0.0
        %2124 = vmatprep.subr.mxu0 0.0
        %2125 = vmatpush2.msra.mxu0 0.0
        %2126 = vmatprep.subr.mxu0 0.0
        %2127 = vmatpush2.msra.mxu0 0.0
        %2128 = vmatprep.subr.mxu0 0.0
        %2129 = vmatpush2.msra.mxu0 0.0
        %2130 = vmatprep.subr.mxu0 0.0
        %2131 = vmatpush2.msra.mxu0 0.0
        %2132 = vmatprep.subr.mxu0 0.0
        %2133 = vmatpush2.msra.mxu0 0.0
        %2134 = vmatprep.subr.mxu0 0.0
        %2135 = vmatpush2.msra.mxu0 0.0
        %2136 = vmatprep.subr.mxu0 0.0
        %2137 = vmatpush2.msra.mxu0 0.0
        %2138 = vmatprep.subr.mxu0 0.0
        %2139 = vmatpush2.msra.mxu0 0.0
        %2140 = vmatprep.subr.mxu0 0.0
        %2141 = vmatpush2.msra.mxu0 0.0
        %2142 = vmatprep.subr.mxu0 0.0
        %2143 = vmatpush2.msra.mxu0 0.0
        %2144 = vmatprep.subr.mxu0 0.0
        %2145 = vmatpush2.msra.mxu0 0.0
        %2146 = vmatprep.subr.mxu0 0.0
        %2147 = vmatpush2.msra.mxu0 0.0
        %2148 = vmatprep.subr.mxu0 0.0
        %2149 = vmatpush2.msra.mxu0 0.0
        %2150 = vmatprep.mubr.f32.mxu0 0.0
        %2151 = vmatmul.mubr.f32.gmra.mxu0 %v2084
        %v2152 = vpop.f32.mrf.mxu0
        %v2153 = vadd.f32 0.0, %v2152
        %v2154 = vpop.f32.mrf.mxu0
        %2155 = vdwg.mxu0
        %v2156 = vadd.f32 %v2080, %v2153
        %v2157 = vmax.f32 %v2156, 0.0
        %v2158 = vld [vmem:[%s15] sm:$0x1]
        %v2160 = vlaneseq
        %v2161 = vshrl.u32 %v2160, 7
        %v2162 = vsub.s32 0, %v2161
        %v2163 = vrot.slane %v2158, %v2162
        %v2165 = vmul.f32 %v2157, %v2163
        %v2166 = vld [vmem:[%s16] sm:$0x1]
        %v2168 = vlaneseq
        %v2169 = vshrl.u32 %v2168, 7
        %v2170 = vsub.s32 0, %v2169
        %v2171 = vrot.slane %v2166, %v2170
        %v2173 = vadd.f32 %v2165, %v2171
        %2174 = vst [vmem:[%s710] sm:$0xff] %v2173
        %s2175 = sand.u32 %s416, 1
        %s2176 = scalar_lea.sflag [#allocation4], %s2175
        %s2177 = sand.u32 %s416, 1
        %s2178 = smul.addr %s2177, 8
        %s2179 = scalar_lea.vmem [#allocation19], %s2178
        // Predicated region
        $region129: #{tpu_custom_call.1} parent=87 // pred_check
          %p2180 = pneg %p426
        $region130: #{tpu_custom_call.1} parent=87 // pred_check_branch
          %2182 = sbr.rel (%p2180) target = $region132
        $region131: #{tpu_custom_call.1} parent=87 // pred_region
          %s2184 = ssub.s32 128, 128
          %2185 = vsyncadd %s2176, %s2184
          %s2186 = smul.addr %s41, 128
          %s2187 = scalar_lea.hbm %s17, %s2186
          %s2189 = sshll.u32 %s2179, 4
          %s2190 = int_to_ptr.vmem [resolvable:$true] %s2189
          %2192 = dma.vmem_to_hbm [thread:$0]  %s2190, 128, %s2187, %s2176
        $region132: #{tpu_custom_call.1} parent=87 // pred_fallthru
          _
      $region88: #{tpu_custom_call.1} parent=5 // pred_fallthru
        _
      %p2193 = scmp.le.s32.totalorder 2, %s36
      // Predicated region
      $region133: #{tpu_custom_call.1} parent=5 // pred_check
        %p2194 = pneg %p2193
      $region134: #{tpu_custom_call.1} parent=5 // pred_check_branch
        %2196 = sbr.rel (%p2194) target = $region136
      $region135: #{tpu_custom_call.1} parent=5 // pred_region
        %s2197 = ssub.s32 %s36, 2
        // Predicated region
        $region137: #{tpu_custom_call.1} parent=135 // pred_check
          %p2198 = pneg %p432
        $region138: #{tpu_custom_call.1} parent=135 // pred_check_branch
          %2200 = sbr.rel (%p2198) target = $region140
        $region139: #{tpu_custom_call.1} parent=135 // pred_region
          %s2201 = sand.u32 %s417, 1
          %s2202 = scalar_lea.sflag [#allocation4], %s2201
          %s2203 = sand.u32 %s417, 1
          %s2204 = smul.addr %s2203, 8
          %s2205 = scalar_lea.vmem [#allocation19], %s2204
          %2206 = dma.done %s2202, 128
        $region140: #{tpu_custom_call.1} parent=135 // pred_fallthru
          _
      $region136: #{tpu_custom_call.1} parent=5 // pred_fallthru
        _
    $region6: #{tpu_custom_call.1} parent=1 // loop_footer
      %s40 = sadd.s32 1, %s36
    $region7: #{tpu_custom_call.1} parent=1 // loop_footer_branch
      %35 = sbr.rel target = $region3
    $region8: #{tpu_custom_call.1} parent=1 // loop_exit
      _
    %2207 = vsyncpa [#allocation3], 1
    %s2208 = scalar_lea.sflag [#allocation3], 1
    %2209 = vsyncpa %s2208, 1
    %2210 = vsyncpa [#allocation6], 1
    %s2211 = scalar_lea.sflag [#allocation6], 1
    %2212 = vsyncpa %s2211, 1
    %2213 = vsyncpa [#allocation9], 1
    %2214 = vsyncpa [#allocation12], 1
    %2215 = vsyncpa [#allocation15], 1
    %2216 = vsyncpa [#allocation18], 1
    %2217 = vsyncpa [#allocation4], 1
    %s2218 = scalar_lea.sflag [#allocation4], 1
    %2219 = vsyncpa %s2218, 1

</llo_original>
